<compile_context>
chip_gen: v5e
topology: v5e:2x2
jax: 0.10.0
libtpu: 0.0.40
codegen_flags: <defaults>
</compile_context>

<pallas_src>
import functools
import math

import jax
import jax.numpy as jnp
from jax.experimental import pallas as pl
from jax.experimental.pallas import tpu as pltpu

_LANE = 128
_SUB = 8


def _ceil_to(x, m):
    return ((x + m - 1) // m) * m


def reverse_within_length(x, lengths):
    """Reverse each (B, T, ...) sequence inside its valid length (packed-seq style)."""
    T = x.shape[1]
    t_idx = jnp.arange(T, dtype=jnp.int32)[None, :]                # (1, T)
    ln = lengths.astype(jnp.int32)[:, None]                        # (B, 1)
    rev_idx = jnp.where(t_idx < ln, ln - 1 - t_idx, t_idx)         # (B, T)
    return jnp.take_along_axis(x, rev_idx[:, :, None], axis=1)


# ----------------------------------------------------------------------------
# One-time parameter packing (interleaved gate layout, block-diagonal W_hh)
# ----------------------------------------------------------------------------
def _pack_gate_cols(w, h_pad, col_off):
    """(rows, 4H) -> (rows, 8*h_pad); original gate-g block lands at
    columns [g*2*h_pad + col_off : g*2*h_pad + col_off + H]."""
    rows, four_h = w.shape
    H = four_h // 4
    out = jnp.zeros((rows, 8 * h_pad), w.dtype)
    for g in range(4):
        out = out.at[:, g * 2 * h_pad + col_off: g * 2 * h_pad + col_off + H].set(
            w[:, g * H:(g + 1) * H])
    return out


def prepare_aoa_params(params, hidden_dim):
    """Build the packed weights once (NOT per forward call)."""
    H = hidden_dim
    Hp = _ceil_to(max(H, 64), 64)            # 2*Hp % 128 == 0 -> lane-aligned gates

    def pack_model(p):
        # Input projection for both directions in one (2E, 8Hp) matrix; the
        # forward direction consumes x, the backward direction x_rev.
        w_ih = jnp.concatenate(
            [_pack_gate_cols(p["w_ih_f"], Hp, 0),
             _pack_gate_cols(p["w_ih_b"], Hp, Hp)], axis=0).astype(jnp.float32)
        b = (_pack_gate_cols(p["b_f"][None, :], Hp, 0)[0]
             + _pack_gate_cols(p["b_b"][None, :], Hp, Hp)[0]).astype(jnp.float32)
        # Recurrent block for this model: rows [0:H]=fwd h, [Hp:Hp+H]=bwd h.
        whh = jnp.zeros((2 * Hp, 8 * Hp), jnp.float32)
        whh = whh.at[0:H, :].set(_pack_gate_cols(p["w_hh_f"], Hp, 0))
        whh = whh.at[Hp:Hp + H, :].set(_pack_gate_cols(p["w_hh_b"], Hp, Hp))
        return w_ih, b, whh

    wih_ctx, b_ctx, whh_ctx = pack_model(params["ctx_lstm"])
    wih_asp, b_asp, whh_asp = pack_model(params["asp_lstm"])
    whh_both = jnp.concatenate([whh_ctx, whh_asp], axis=0)   # (4Hp, 8Hp) block-diag in K

    return {
        "embed": params["embed"].astype(jnp.float32),
        "dense_w": params["dense_w"].astype(jnp.float32),
        "dense_b": params["dense_b"].astype(jnp.float32),
        "lstm": {"w_ih_ctx": wih_ctx, "b_ctx": b_ctx,
                 "w_ih_asp": wih_asp, "b_asp": b_asp,
                 "whh": whh_both},
    }


# ----------------------------------------------------------------------------
# Fused (ctx + asp, fwd + bwd) LSTM recurrence kernel — length-masked, chunked
# ----------------------------------------------------------------------------
def _fused_bilstm_kernel(maxlen_ref, len_ref, gx_ref, whh_ref, out_ref,
                         h_ref, c_ref, *, h_pad, n_ctx_rows, t_chunk):
    G = 2 * h_pad                                   # per-gate pair width (lane aligned)
    chunk = pl.program_id(0)

    @pl.when(chunk == 0)
    def _():
        h_ref[...] = jnp.zeros_like(h_ref)
        c_ref[...] = jnp.zeros_like(c_ref)

    start_t = chunk * t_chunk
    active = start_t < maxlen_ref[0]                # skip fully-padded tail chunks

    @pl.when(active)
    def _():
        lens = len_ref[...]                         # (Bp, 1) i32, hoisted out of loop
        whh = whh_ref[...]                          # (4Hp, 8Hp)
        Bp = lens.shape[0]
        row = jax.lax.broadcasted_iota(jnp.int32, (Bp, 1), 0)
        is_ctx = (row < n_ctx_rows).astype(jnp.float32)
        is_asp = 1.0 - is_ctx

        def step(i, carry):
            t = start_t + i
            h4 = h_ref[...]                         # (Bp, 4Hp)  [ctx half | asp half]
            c = c_ref[...]                          # (Bp, 2Hp)
            # Recurrent GEMM only; the input projection was hoisted to glue.
            gates = gx_ref[i] + jnp.dot(h4, whh, preferred_element_type=jnp.float32)
            # Interleaved layout: [i_f,i_b | f_f,f_b | g_f,g_b | o_f,o_b],
            # every slice boundary is a multiple of 128 lanes (G = 2*Hp).
            i_g = jax.nn.sigmoid(gates[:, 0 * G:1 * G])
            f_g = jax.nn.sigmoid(gates[:, 1 * G:2 * G])
            g_g = jnp.tanh(gates[:, 2 * G:3 * G])
            o_g = jax.nn.sigmoid(gates[:, 3 * G:4 * G])
            c_new = f_g * c + i_g * g_g
            h_new = o_g * jnp.tanh(c_new)           # (Bp, 2Hp)
            valid = t < lens                        # (Bp, 1) — freeze past length
            # Place each row's new h into its own K-half (block-diagonal W_hh).
            h4_new = jnp.concatenate([h_new * is_ctx, h_new * is_asp], axis=-1)
            h_ref[...] = jnp.where(valid, h4_new, h4)
            c_ref[...] = jnp.where(valid, c_new, c)
            out_ref[i] = jnp.where(valid, h_new, 0.0)   # lane-dense (2Hp = 128) store
            return carry

        jax.lax.fori_loop(0, t_chunk, step, 0, unroll=True)

    @pl.when(jnp.logical_not(active))
    def _():
        out_ref[...] = jnp.zeros_like(out_ref)


def fused_bilstm_pair(ctx, asp, ctx_len, asp_len, lstm_p, hidden_dim, t_chunk=16):
    """Run BOTH BiLSTMs (ctx and asp) in one pallas_call.

    ctx: (B, Tc, E), asp: (B, Ta, E)  ->  (B, Tc, 2H), (B, Ta, 2H)
    """
    B, Tc, _ = ctx.shape
    Ta = asp.shape[1]
    H = hidden_dim
    Hp = _ceil_to(max(H, 64), 64)
    G = 2 * Hp

    T = max(Tc, Ta)
    tc_eff = min(_ceil_to(t_chunk, _SUB), _ceil_to(T, _SUB))
    T_pad = _ceil_to(T, tc_eff)

    # ---- Hoisted input projections: one GEMM per model (XLA glue), already in
    # ---- the interleaved/packed gate layout produced at prep time. ----
    ctx_rev = reverse_within_length(ctx, ctx_len)
    asp_rev = reverse_within_length(asp, asp_len)
    gx_ctx = jnp.einsum("bte,eg->btg", jnp.concatenate([ctx, ctx_rev], axis=-1),
                        lstm_p["w_ih_ctx"]) + lstm_p["b_ctx"]       # (B, Tc, 8Hp)
    gx_asp = jnp.einsum("bte,eg->btg", jnp.concatenate([asp, asp_rev], axis=-1),
                        lstm_p["w_ih_asp"]) + lstm_p["b_asp"]       # (B, Ta, 8Hp)

    # Stack the two models along the batch axis; pad time / batch.
    gx_ctx = jnp.pad(gx_ctx, ((0, 0), (0, T_pad - Tc), (0, 0)))
    gx_asp = jnp.pad(gx_asp, ((0, 0), (0, T_pad - Ta), (0, 0)))
    gx = jnp.concatenate([gx_ctx, gx_asp], axis=0)                  # (2B, T_pad, 8Hp)
    B_both = 2 * B
    Bp = _ceil_to(B_both, _SUB)
    gx = jnp.pad(gx, ((0, Bp - B_both), (0, 0), (0, 0)))
    gx = jnp.transpose(gx, (1, 0, 2))                               # (T_pad, Bp, 8Hp)

    lens = jnp.concatenate([ctx_len, asp_len]).astype(jnp.int32)
    lens = jnp.pad(lens, (0, Bp - B_both))
    maxlen = jnp.max(lens).reshape(1).astype(jnp.int32)             # SMEM scalar prefetch
    lens2d = lens.reshape(Bp, 1)

    out = pl.pallas_call(
        functools.partial(_fused_bilstm_kernel, h_pad=Hp, n_ctx_rows=B,
                          t_chunk=tc_eff),
        out_shape=jax.ShapeDtypeStruct((T_pad, Bp, G), jnp.float32),
        grid_spec=pltpu.PrefetchScalarGridSpec(
            num_scalar_prefetch=1,
            grid=(T_pad // tc_eff,),
            in_specs=[
                pl.BlockSpec((Bp, 1), lambda c, ml: (0, 0)),                 # lengths
                pl.BlockSpec((tc_eff, Bp, 8 * Hp), lambda c, ml: (c, 0, 0)), # gates_x
                pl.BlockSpec((4 * Hp, 8 * Hp), lambda c, ml: (0, 0)),        # fused W_hh
            ],
            out_specs=pl.BlockSpec((tc_eff, Bp, G), lambda c, ml: (c, 0, 0)),
            scratch_shapes=[pltpu.VMEM((Bp, 4 * Hp), jnp.float32),   # h (both K-halves)
                            pltpu.VMEM((Bp, G), jnp.float32)],       # c
        ),
        compiler_params=pltpu.CompilerParams(
            dimension_semantics=("arbitrary",)),     # true recurrence over T
    )(maxlen, lens2d, gx, lstm_p["whh"])

    out = jnp.transpose(out[:, :B_both], (1, 0, 2))                  # (2B, T_pad, 2Hp)

    def unpack(o, t_real, ln):
        fwd = o[:, :t_real, :H]
        bwd = reverse_within_length(o[:, :t_real, Hp:Hp + H], ln)
        return jnp.concatenate([fwd, bwd], axis=-1)                  # (B, T, 2H)

    return unpack(out[:B], Tc, ctx_len), unpack(out[B:B_both], Ta, asp_len)


# ----------------------------------------------------------------------------
# AOA attention kernel — (B, Ta, Tc) interaction layout, lane-dense output
# ----------------------------------------------------------------------------
def _aoa_attn_kernel(ctx_ref, asp_ref, out_ref):
    ctx = ctx_ref[...]          # (Bb, Tc, Dp)   Dp = 128-multiple, zero-padded cols
    asp = asp_ref[...]          # (Bb, Ta, Dp)   D-last: contiguous DMA, no transpose

    # Interaction in (Bb, Ta, Tc): long context axis on lanes; contract over D.
    inter = jnp.einsum("bsd,btd->bst", asp, ctx, preferred_element_type=jnp.float32)

    # One stabilized exp shared by both softmaxes (per-batch max is constant
    # along either reduction axis, so both softmaxes stay exact).
    m = jnp.max(jnp.max(inter, axis=2, keepdims=True), axis=1, keepdims=True)
    e = jnp.exp(inter - m)

    alpha_den = jnp.sum(e, axis=2, keepdims=True)        # softmax over Tc   (Bb,Ta,1)
    beta_den = jnp.sum(e, axis=1, keepdims=True)         # softmax over Ta   (Bb,1,Tc)
    beta = e * pl.reciprocal(beta_den, approx=True)
    beta_avg = jnp.mean(beta, axis=2, keepdims=True)     # mean over Tc      (Bb,Ta,1)
    w_s = beta_avg * pl.reciprocal(alpha_den, approx=True)

    # weighted[b,d] = sum_t gamma[b,t]*ctx[b,t,d] with gamma = sum_s e*w_s.
    # Fold the gamma contraction into the MXU matmul + a tiny sublane reduce.
    wsum = jnp.einsum("bst,btd->bsd", e * w_s, ctx,
                      preferred_element_type=jnp.float32)            # (Bb,Ta,Dp)
    out_ref[...] = jnp.sum(wsum, axis=1)                             # (Bb,Dp) lane-dense


def aoa_attention(ctx_out, asp_out, b_blk=16):
    B, Tc, D = ctx_out.shape
    Ta = asp_out.shape[1]
    Dp = _ceil_to(D, _LANE)
    blk = min(_ceil_to(b_blk, _SUB), _ceil_to(B, _SUB))
    Bp = _ceil_to(B, blk)

    # Zero-padded D columns contribute 0 to the D-contraction -> math unchanged.
    ctx_p = jnp.pad(ctx_out, ((0, Bp - B), (0, 0), (0, Dp - D)))
    asp_p = jnp.pad(asp_out, ((0, Bp - B), (0, 0), (0, Dp - D)))

    weighted = pl.pallas_call(
        _aoa_attn_kernel,
        out_shape=jax.ShapeDtypeStruct((Bp, Dp), jnp.float32),
        grid_spec=pltpu.PrefetchScalarGridSpec(
            num_scalar_prefetch=0,
            grid=(Bp // blk,),
            in_specs=[pl.BlockSpec((blk, Tc, Dp), lambda b: (b, 0, 0)),
                      pl.BlockSpec((blk, Ta, Dp), lambda b: (b, 0, 0))],
            out_specs=pl.BlockSpec((blk, Dp), lambda b: (b, 0)),
        ),
        compiler_params=pltpu.CompilerParams(
            dimension_semantics=("parallel",)),       # batch blocks independent
    )(ctx_p, asp_p)
    return weighted[:B, :D]                           # (B, 2H)


# ----------------------------------------------------------------------------
# Full AOA forward
# ----------------------------------------------------------------------------
def aoa_forward(prepped, text_raw_indices, aspect_indices, hidden_dim):
    emb = prepped["embed"]
    ctx_len = jnp.sum(text_raw_indices != 0, axis=1).astype(jnp.int32)
    asp_len = jnp.sum(aspect_indices != 0, axis=1).astype(jnp.int32)

    ctx = emb[text_raw_indices]                       # (B, Tc, E) embedding gather (glue)
    asp = emb[aspect_indices]                         # (B, Ta, E)

    ctx_out, asp_out = fused_bilstm_pair(ctx, asp, ctx_len, asp_len,
                                         prepped["lstm"], hidden_dim)

    weighted = aoa_attention(ctx_out, asp_out)        # (B, 2H)
    # Final tiny dense: one (B, 2H) x (2H, P) GEMM in XLA glue.
    return weighted @ prepped["dense_w"] + prepped["dense_b"]


# ----------------------------------------------------------------------------
# Pure-JAX reference (same math, no Pallas) for a numerical sanity check
# ----------------------------------------------------------------------------
def _lstm_ref(x, lengths, w_ih, w_hh, b):
    B, T, _ = x.shape
    Hd = w_hh.shape[0]

    def step(carry, xt_t):
        h, c = carry
        xt, t = xt_t
        gates = xt @ w_ih + h @ w_hh + b
        i_g = jax.nn.sigmoid(gates[:, :Hd])
        f_g = jax.nn.sigmoid(gates[:, Hd:2 * Hd])
        g_g = jnp.tanh(gates[:, 2 * Hd:3 * Hd])
        o_g = jax.nn.sigmoid(gates[:, 3 * Hd:])
        c_new = f_g * c + i_g * g_g
        h_new = o_g * jnp.tanh(c_new)
        valid = (t < lengths)[:, None]
        h = jnp.where(valid, h_new, h)
        c = jnp.where(valid, c_new, c)
        return (h, c), jnp.where(valid, h_new, 0.0)

    (_, _), outs = jax.lax.scan(
        step, (jnp.zeros((B, Hd)), jnp.zeros((B, Hd))),
        (jnp.transpose(x, (1, 0, 2)), jnp.arange(T, dtype=jnp.int32)))
    return jnp.transpose(outs, (1, 0, 2))


def aoa_forward_ref(params, text, aspect, hidden_dim):
    emb = params["embed"]
    ctx_len = jnp.sum(text != 0, axis=1).astype(jnp.int32)
    asp_len = jnp.sum(aspect != 0, axis=1).astype(jnp.int32)
    ctx = emb[text]
    asp = emb[aspect]

    def bil(x, ln, p):
        fwd = _lstm_ref(x, ln, p["w_ih_f"], p["w_hh_f"], p["b_f"])
        xr = reverse_within_length(x, ln)
        bwd = reverse_within_length(
            _lstm_ref(xr, ln, p["w_ih_b"], p["w_hh_b"], p["b_b"]), ln)
        return jnp.concatenate([fwd, bwd], axis=-1)

    ctx_out = bil(ctx, ctx_len, params["ctx_lstm"])
    asp_out = bil(asp, asp_len, params["asp_lstm"])

    inter = jnp.einsum("btd,bsd->bts", ctx_out, asp_out)
    alpha = jax.nn.softmax(inter, axis=1)
    beta = jax.nn.softmax(inter, axis=2)
    beta_avg = jnp.mean(beta, axis=1, keepdims=True)            # (B,1,Ta)
    gamma = jnp.einsum("bts,bs->bt", alpha, beta_avg[:, 0, :])  # (B,Tc)
    weighted = jnp.einsum("btd,bt->bd", ctx_out, gamma)         # (B,D)
    return weighted @ params["dense_w"] + params["dense_b"]


# ----------------------------------------------------------------------------
# Parameter init (deterministic, synthetic)
# ----------------------------------------------------------------------------
def init_lstm_params(key, embed_dim, hidden_dim):
    k = 1.0 / math.sqrt(hidden_dim)
    ks = jax.random.split(key, 6)
    u = lambda kk, shape: jax.random.uniform(kk, shape, jnp.float32, -k, k)
    return {
        "w_ih_f": u(ks[0], (embed_dim, 4 * hidden_dim)),
        "w_hh_f": u(ks[1], (hidden_dim, 4 * hidden_dim)),
        "b_f": u(ks[2], (4 * hidden_dim,)),
        "w_ih_b": u(ks[3], (embed_dim, 4 * hidden_dim)),
        "w_hh_b": u(ks[4], (hidden_dim, 4 * hidden_dim)),
        "b_b": u(ks[5], (4 * hidden_dim,)),
    }


if __name__ == "__main__":
    VOCAB, EMBED_DIM, HIDDEN_DIM, POLARITIES = 50, 32, 32, 3
    B, TC, TA = 2, 8, 4

    key = jax.random.PRNGKey(0)
    k_emb, k_ctx, k_asp, k_dw, k_db, k_ti, k_ai = jax.random.split(key, 7)

    kd = 1.0 / math.sqrt(2 * HIDDEN_DIM)
    params = {
        "embed": jax.random.normal(k_emb, (VOCAB, EMBED_DIM), jnp.float32) * 0.5,
        "ctx_lstm": init_lstm_params(k_ctx, EMBED_DIM, HIDDEN_DIM),
        "asp_lstm": init_lstm_params(k_asp, EMBED_DIM, HIDDEN_DIM),
        "dense_w": jax.random.uniform(k_dw, (2 * HIDDEN_DIM, POLARITIES),
                                      jnp.float32, -kd, kd),
        "dense_b": jax.random.uniform(k_db, (POLARITIES,), jnp.float32, -kd, kd),
    }

    # Token indices (0 == pad).  Keep batch element 0 at full length so the
    # batch max length equals the padded length (matches pad_packed_sequence).
    text_raw_indices = jax.random.randint(k_ti, (B, TC), 1, VOCAB, dtype=jnp.int32)
    aspect_indices = jax.random.randint(k_ai, (B, TA), 1, VOCAB, dtype=jnp.int32)
    text_raw_indices = text_raw_indices.at[1, 6:].set(0)   # batch 1: ctx_len = 6
    aspect_indices = aspect_indices.at[1, 3:].set(0)       # batch 1: asp_len = 3

    # One-time weight packing (outside the jitted forward).
    prepped = prepare_aoa_params(params, HIDDEN_DIM)

    fwd = jax.jit(functools.partial(aoa_forward, hidden_dim=HIDDEN_DIM))
    out = fwd(prepped, text_raw_indices, aspect_indices)
    out = jax.block_until_ready(out)

    ref = aoa_forward_ref(params, text_raw_indices, aspect_indices, HIDDEN_DIM)
    assert out.shape == (B, POLARITIES)
    assert bool(jnp.all(jnp.isfinite(out)))
    assert bool(jnp.allclose(out, ref, rtol=1e-2, atol=1e-2))

    print("KERNEL_OK")
</pallas_src>

<mosaic_0001>
module attributes {stable_mosaic.version = 11 : i64} {
  func.func @_fused_bilstm_kernel(%arg0: i32, %arg1: memref<1xi32, #tpu.memory_space<smem>>, %arg2: memref<8x1xi32, #tpu.memory_space<vmem>>, %arg3: memref<8x8x512xf32, #tpu.memory_space<vmem>>, %arg4: memref<256x512xf32, #tpu.memory_space<vmem>>, %arg5: memref<8x8x128xf32, #tpu.memory_space<vmem>>, %arg6: memref<8x256xf32, #tpu.memory_space<vmem>>, %arg7: memref<8x128xf32, #tpu.memory_space<vmem>>) attributes {dimension_semantics = [#tpu.dimension_semantics<arbitrary>], iteration_bounds = array<i64: 1>, scalar_prefetch = 1 : i64, scratch_operands = 2 : i64, tpu.core_type = #tpu.core_type<tc>, window_params = [{pipeline_mode = #tpu.pipeline_mode<synchronous>, transform_indices = @transform_0, window_bounds = array<i64: 8, 1>}, {transform_indices = @transform_1, window_bounds = array<i64: 8, 8, 512>}, {pipeline_mode = #tpu.pipeline_mode<synchronous>, transform_indices = @transform_2, window_bounds = array<i64: 256, 512>}, {transform_indices = @transform_3, window_bounds = array<i64: 8, 8, 128>}]} {
    %c0_i32 = arith.constant 0 : i32
    %0 = arith.cmpi eq, %arg0, %c0_i32 : i32
    %1 = arith.extui %0 : i1 to i32
    %c0_i32_0 = arith.constant 0 : i32
    %2 = arith.cmpi ne, %1, %c0_i32_0 : i32
    scf.if %2 {
      %cst = arith.constant 0.000000e+00 : f32
      %11 = vector.broadcast %cst : f32 to vector<8x256xf32>
      %c0_3 = arith.constant 0 : index
      %c0_4 = arith.constant 0 : index
      %12 = vector.load %arg6[%c0_3, %c0_4] : memref<8x256xf32, #tpu.memory_space<vmem>>, vector<8x256xf32>
      tpu.vector_store %arg6[%c0_3, %c0_4], %11 {strides = array<i32>} : memref<8x256xf32, #tpu.memory_space<vmem>>, vector<8x256xf32>,
      %cst_5 = arith.constant 0.000000e+00 : f32
      %13 = vector.broadcast %cst_5 : f32 to vector<8x128xf32>
      %c0_6 = arith.constant 0 : index
      %c0_7 = arith.constant 0 : index
      %14 = vector.load %arg7[%c0_6, %c0_7] : memref<8x128xf32, #tpu.memory_space<vmem>>, vector<8x128xf32>
      tpu.vector_store %arg7[%c0_6, %c0_7], %13 {strides = array<i32>} : memref<8x128xf32, #tpu.memory_space<vmem>>, vector<8x128xf32>,
    } else {
    }
    %c8_i32 = arith.constant 8 : i32
    %3 = arith.muli %arg0, %c8_i32 : i32
    %c0 = arith.constant 0 : index
    %4 = memref.load %arg1[%c0] : memref<1xi32, #tpu.memory_space<smem>>
    %5 = arith.cmpi slt, %3, %4 : i32
    %6 = arith.extui %5 : i1 to i32
    %c0_i32_1 = arith.constant 0 : i32
    %7 = arith.cmpi ne, %6, %c0_i32_1 : i32
    scf.if %7 {
      %c0_3 = arith.constant 0 : index
      %c0_4 = arith.constant 0 : index
      %11 = vector.load %arg2[%c0_3, %c0_4] : memref<8x1xi32, #tpu.memory_space<vmem>>, vector<8x1xi32>
      %c0_5 = arith.constant 0 : index
      %c0_6 = arith.constant 0 : index
      %12 = vector.load %arg4[%c0_5, %c0_6] : memref<256x512xf32, #tpu.memory_space<vmem>>, vector<256x512xf32>
      %13 = tpu.iota {dimensions = array<i32: 0>} : vector<8x1xi32>
      %c2_i32 = arith.constant 2 : i32
      %14 = vector.broadcast %c2_i32 : i32 to vector<8x1xi32>
      %15 = arith.cmpi slt, %13, %14 : vector<8x1xi32>
      %16 = arith.extui %15 : vector<8x1xi1> to vector<8x1xi32>
      %17 = arith.sitofp %16 : vector<8x1xi32> to vector<8x1xf32>
      %cst = arith.constant 1.000000e+00 : f32
      %18 = vector.broadcast %cst : f32 to vector<8x1xf32>
      %19 = arith.subf %18, %17 : vector<8x1xf32>
      %c0_i32_7 = arith.constant 0 : i32
      %20 = arith.addi %3, %c0_i32_7 : i32
      %c0_8 = arith.constant 0 : index
      %c0_9 = arith.constant 0 : index
      %21 = vector.load %arg6[%c0_8, %c0_9] : memref<8x256xf32, #tpu.memory_space<vmem>>, vector<8x256xf32>
      %c0_10 = arith.constant 0 : index
      %c0_11 = arith.constant 0 : index
      %22 = vector.load %arg7[%c0_10, %c0_11] : memref<8x128xf32, #tpu.memory_space<vmem>>, vector<8x128xf32>
      %23 = arith.index_cast %c0_i32_7 : i32 to index
      %c0_12 = arith.constant 0 : index
      %c0_13 = arith.constant 0 : index
      %24 = vector.load %arg3[%23, %c0_12, %c0_13] : memref<8x8x512xf32, #tpu.memory_space<vmem>>, vector<1x8x512xf32>
      %25 = vector.shape_cast %24 : vector<1x8x512xf32> to vector<8x512xf32>
      %cst_14 = arith.constant dense<0.000000e+00> : vector<8x512xf32>
      %26 = tpu.matmul %21, %12, %cst_14 {dimension_numbers = #tpu.dot_dimension_numbers<[1], [0], [0], [1], [0, 0, 1, 1], [], []>} : vector<8x256xf32>, vector<256x512xf32>, vector<8x512xf32> -> vector<8x512xf32>
      %27 = arith.addf %25, %26 : vector<8x512xf32>
      %28 = vector.extract_strided_slice %27 {offsets = [0, 0], sizes = [8, 128], strides = [1, 1]} : vector<8x512xf32> to vector<8x128xf32>
      %29 = arith.negf %28 : vector<8x128xf32>
      %30 = math.exp %29 : vector<8x128xf32>
      %cst_15 = arith.constant 1.000000e+00 : f32
      %31 = vector.broadcast %cst_15 : f32 to vector<8x128xf32>
      %32 = arith.addf %31, %30 : vector<8x128xf32>
      %33 = arith.divf %31, %32 : vector<8x128xf32>
      %34 = vector.extract_strided_slice %27 {offsets = [0, 128], sizes = [8, 128], strides = [1, 1]} : vector<8x512xf32> to vector<8x128xf32>
      %35 = arith.negf %34 : vector<8x128xf32>
      %36 = math.exp %35 : vector<8x128xf32>
      %cst_16 = arith.constant 1.000000e+00 : f32
      %37 = vector.broadcast %cst_16 : f32 to vector<8x128xf32>
      %38 = arith.addf %37, %36 : vector<8x128xf32>
      %39 = arith.divf %37, %38 : vector<8x128xf32>
      %40 = vector.extract_strided_slice %27 {offsets = [0, 256], sizes = [8, 128], strides = [1, 1]} : vector<8x512xf32> to vector<8x128xf32>
      %41 = math.tanh %40 : vector<8x128xf32>
      %42 = vector.extract_strided_slice %27 {offsets = [0, 384], sizes = [8, 128], strides = [1, 1]} : vector<8x512xf32> to vector<8x128xf32>
      %43 = arith.negf %42 : vector<8x128xf32>
      %44 = math.exp %43 : vector<8x128xf32>
      %cst_17 = arith.constant 1.000000e+00 : f32
      %45 = vector.broadcast %cst_17 : f32 to vector<8x128xf32>
      %46 = arith.addf %45, %44 : vector<8x128xf32>
      %47 = arith.divf %45, %46 : vector<8x128xf32>
      %48 = arith.mulf %39, %22 : vector<8x128xf32>
      %49 = arith.mulf %33, %41 : vector<8x128xf32>
      %50 = arith.addf %48, %49 : vector<8x128xf32>
      %51 = math.tanh %50 : vector<8x128xf32>
      %52 = arith.mulf %47, %51 : vector<8x128xf32>
      %53 = vector.broadcast %20 : i32 to vector<8x1xi32>
      %54 = arith.cmpi slt, %53, %11 : vector<8x1xi32>
      %55 = vector.broadcast %17 : vector<8x1xf32> to vector<8x128xf32>
      %56 = arith.mulf %52, %55 : vector<8x128xf32>
      %57 = vector.broadcast %19 : vector<8x1xf32> to vector<8x128xf32>
      %58 = arith.mulf %52, %57 : vector<8x128xf32>
      %59 = tpu.concatenate %56, %58 in 1 : vector<8x128xf32>, vector<8x128xf32> -> vector<8x256xf32>
      %60 = vector.shape_cast %54 : vector<8x1xi1> to vector<8x1xi1>
      %61 = vector.broadcast %60 : vector<8x1xi1> to vector<8x256xi1>
      %62 = arith.select %61, %59, %21 : vector<8x256xi1>, vector<8x256xf32>
      %c0_18 = arith.constant 0 : index
      %c0_19 = arith.constant 0 : index
      %63 = vector.load %arg6[%c0_18, %c0_19] : memref<8x256xf32, #tpu.memory_space<vmem>>, vector<8x256xf32>
      tpu.vector_store %arg6[%c0_18, %c0_19], %62 {strides = array<i32>} : memref<8x256xf32, #tpu.memory_space<vmem>>, vector<8x256xf32>,
      %64 = vector.shape_cast %54 : vector<8x1xi1> to vector<8x1xi1>
      %65 = vector.broadcast %64 : vector<8x1xi1> to vector<8x128xi1>
      %66 = arith.select %65, %50, %22 : vector<8x128xi1>, vector<8x128xf32>
      %c0_20 = arith.constant 0 : index
      %c0_21 = arith.constant 0 : index
      %67 = vector.load %arg7[%c0_20, %c0_21] : memref<8x128xf32, #tpu.memory_space<vmem>>, vector<8x128xf32>
      tpu.vector_store %arg7[%c0_20, %c0_21], %66 {strides = array<i32>} : memref<8x128xf32, #tpu.memory_space<vmem>>, vector<8x128xf32>,
      %cst_22 = arith.constant 0.000000e+00 : f32
      %68 = vector.shape_cast %54 : vector<8x1xi1> to vector<8x1xi1>
      %69 = vector.broadcast %68 : vector<8x1xi1> to vector<8x128xi1>
      %70 = vector.broadcast %cst_22 : f32 to vector<8x128xf32>
      %71 = arith.select %69, %52, %70 : vector<8x128xi1>, vector<8x128xf32>
      %72 = arith.index_cast %c0_i32_7 : i32 to index
      %c0_23 = arith.constant 0 : index
      %c0_24 = arith.constant 0 : index
      %73 = vector.load %arg5[%72, %c0_23, %c0_24] : memref<8x8x128xf32, #tpu.memory_space<vmem>>, vector<1x8x128xf32>
      %74 = vector.shape_cast %73 : vector<1x8x128xf32> to vector<8x128xf32>
      %75 = vector.shape_cast %71 : vector<8x128xf32> to vector<1x8x128xf32>
      tpu.vector_store %arg5[%72, %c0_23, %c0_24], %75 {strides = array<i32>} : memref<8x8x128xf32, #tpu.memory_space<vmem>>, vector<1x8x128xf32>,
      %c1_i32 = arith.constant 1 : i32
      %76 = arith.addi %3, %c1_i32 : i32
      %c0_25 = arith.constant 0 : index
      %c0_26 = arith.constant 0 : index
      %77 = vector.load %arg6[%c0_25, %c0_26] : memref<8x256xf32, #tpu.memory_space<vmem>>, vector<8x256xf32>
      %c0_27 = arith.constant 0 : index
      %c0_28 = arith.constant 0 : index
      %78 = vector.load %arg7[%c0_27, %c0_28] : memref<8x128xf32, #tpu.memory_space<vmem>>, vector<8x128xf32>
      %79 = arith.index_cast %c1_i32 : i32 to index
      %c0_29 = arith.constant 0 : index
      %c0_30 = arith.constant 0 : index
      %80 = vector.load %arg3[%79, %c0_29, %c0_30] : memref<8x8x512xf32, #tpu.memory_space<vmem>>, vector<1x8x512xf32>
      %81 = vector.shape_cast %80 : vector<1x8x512xf32> to vector<8x512xf32>
      %cst_31 = arith.constant dense<0.000000e+00> : vector<8x512xf32>
      %82 = tpu.matmul %77, %12, %cst_31 {dimension_numbers = #tpu.dot_dimension_numbers<[1], [0], [0], [1], [0, 0, 1, 1], [], []>} : vector<8x256xf32>, vector<256x512xf32>, vector<8x512xf32> -> vector<8x512xf32>
      %83 = arith.addf %81, %82 : vector<8x512xf32>
      %84 = vector.extract_strided_slice %83 {offsets = [0, 0], sizes = [8, 128], strides = [1, 1]} : vector<8x512xf32> to vector<8x128xf32>
      %85 = arith.negf %84 : vector<8x128xf32>
      %86 = math.exp %85 : vector<8x128xf32>
      %cst_32 = arith.constant 1.000000e+00 : f32
      %87 = vector.broadcast %cst_32 : f32 to vector<8x128xf32>
      %88 = arith.addf %87, %86 : vector<8x128xf32>
      %89 = arith.divf %87, %88 : vector<8x128xf32>
      %90 = vector.extract_strided_slice %83 {offsets = [0, 128], sizes = [8, 128], strides = [1, 1]} : vector<8x512xf32> to vector<8x128xf32>
      %91 = arith.negf %90 : vector<8x128xf32>
      %92 = math.exp %91 : vector<8x128xf32>
      %cst_33 = arith.constant 1.000000e+00 : f32
      %93 = vector.broadcast %cst_33 : f32 to vector<8x128xf32>
      %94 = arith.addf %93, %92 : vector<8x128xf32>
      %95 = arith.divf %93, %94 : vector<8x128xf32>
      %96 = vector.extract_strided_slice %83 {offsets = [0, 256], sizes = [8, 128], strides = [1, 1]} : vector<8x512xf32> to vector<8x128xf32>
      %97 = math.tanh %96 : vector<8x128xf32>
      %98 = vector.extract_strided_slice %83 {offsets = [0, 384], sizes = [8, 128], strides = [1, 1]} : vector<8x512xf32> to vector<8x128xf32>
      %99 = arith.negf %98 : vector<8x128xf32>
      %100 = math.exp %99 : vector<8x128xf32>
      %cst_34 = arith.constant 1.000000e+00 : f32
      %101 = vector.broadcast %cst_34 : f32 to vector<8x128xf32>
      %102 = arith.addf %101, %100 : vector<8x128xf32>
      %103 = arith.divf %101, %102 : vector<8x128xf32>
      %104 = arith.mulf %95, %78 : vector<8x128xf32>
      %105 = arith.mulf %89, %97 : vector<8x128xf32>
      %106 = arith.addf %104, %105 : vector<8x128xf32>
      %107 = math.tanh %106 : vector<8x128xf32>
      %108 = arith.mulf %103, %107 : vector<8x128xf32>
      %109 = vector.broadcast %76 : i32 to vector<8x1xi32>
      %110 = arith.cmpi slt, %109, %11 : vector<8x1xi32>
      %111 = vector.broadcast %17 : vector<8x1xf32> to vector<8x128xf32>
      %112 = arith.mulf %108, %111 : vector<8x128xf32>
      %113 = vector.broadcast %19 : vector<8x1xf32> to vector<8x128xf32>
      %114 = arith.mulf %108, %113 : vector<8x128xf32>
      %115 = tpu.concatenate %112, %114 in 1 : vector<8x128xf32>, vector<8x128xf32> -> vector<8x256xf32>
      %116 = vector.shape_cast %110 : vector<8x1xi1> to vector<8x1xi1>
      %117 = vector.broadcast %116 : vector<8x1xi1> to vector<8x256xi1>
      %118 = arith.select %117, %115, %77 : vector<8x256xi1>, vector<8x256xf32>
      %c0_35 = arith.constant 0 : index
      %c0_36 = arith.constant 0 : index
      %119 = vector.load %arg6[%c0_35, %c0_36] : memref<8x256xf32, #tpu.memory_space<vmem>>, vector<8x256xf32>
      tpu.vector_store %arg6[%c0_35, %c0_36], %118 {strides = array<i32>} : memref<8x256xf32, #tpu.memory_space<vmem>>, vector<8x256xf32>,
      %120 = vector.shape_cast %110 : vector<8x1xi1> to vector<8x1xi1>
      %121 = vector.broadcast %120 : vector<8x1xi1> to vector<8x128xi1>
      %122 = arith.select %121, %106, %78 : vector<8x128xi1>, vector<8x128xf32>
      %c0_37 = arith.constant 0 : index
      %c0_38 = arith.constant 0 : index
      %123 = vector.load %arg7[%c0_37, %c0_38] : memref<8x128xf32, #tpu.memory_space<vmem>>, vector<8x128xf32>
      tpu.vector_store %arg7[%c0_37, %c0_38], %122 {strides = array<i32>} : memref<8x128xf32, #tpu.memory_space<vmem>>, vector<8x128xf32>,
      %cst_39 = arith.constant 0.000000e+00 : f32
      %124 = vector.shape_cast %110 : vector<8x1xi1> to vector<8x1xi1>
      %125 = vector.broadcast %124 : vector<8x1xi1> to vector<8x128xi1>
      %126 = vector.broadcast %cst_39 : f32 to vector<8x128xf32>
      %127 = arith.select %125, %108, %126 : vector<8x128xi1>, vector<8x128xf32>
      %128 = arith.index_cast %c1_i32 : i32 to index
      %c0_40 = arith.constant 0 : index
      %c0_41 = arith.constant 0 : index
      %129 = vector.load %arg5[%128, %c0_40, %c0_41] : memref<8x8x128xf32, #tpu.memory_space<vmem>>, vector<1x8x128xf32>
      %130 = vector.shape_cast %129 : vector<1x8x128xf32> to vector<8x128xf32>
      %131 = vector.shape_cast %127 : vector<8x128xf32> to vector<1x8x128xf32>
      tpu.vector_store %arg5[%128, %c0_40, %c0_41], %131 {strides = array<i32>} : memref<8x8x128xf32, #tpu.memory_space<vmem>>, vector<1x8x128xf32>,
      %c2_i32_42 = arith.constant 2 : i32
      %132 = arith.addi %3, %c2_i32_42 : i32
      %c0_43 = arith.constant 0 : index
      %c0_44 = arith.constant 0 : index
      %133 = vector.load %arg6[%c0_43, %c0_44] : memref<8x256xf32, #tpu.memory_space<vmem>>, vector<8x256xf32>
      %c0_45 = arith.constant 0 : index
      %c0_46 = arith.constant 0 : index
      %134 = vector.load %arg7[%c0_45, %c0_46] : memref<8x128xf32, #tpu.memory_space<vmem>>, vector<8x128xf32>
      %135 = arith.index_cast %c2_i32_42 : i32 to index
      %c0_47 = arith.constant 0 : index
      %c0_48 = arith.constant 0 : index
      %136 = vector.load %arg3[%135, %c0_47, %c0_48] : memref<8x8x512xf32, #tpu.memory_space<vmem>>, vector<1x8x512xf32>
      %137 = vector.shape_cast %136 : vector<1x8x512xf32> to vector<8x512xf32>
      %cst_49 = arith.constant dense<0.000000e+00> : vector<8x512xf32>
      %138 = tpu.matmul %133, %12, %cst_49 {dimension_numbers = #tpu.dot_dimension_numbers<[1], [0], [0], [1], [0, 0, 1, 1], [], []>} : vector<8x256xf32>, vector<256x512xf32>, vector<8x512xf32> -> vector<8x512xf32>
      %139 = arith.addf %137, %138 : vector<8x512xf32>
      %140 = vector.extract_strided_slice %139 {offsets = [0, 0], sizes = [8, 128], strides = [1, 1]} : vector<8x512xf32> to vector<8x128xf32>
      %141 = arith.negf %140 : vector<8x128xf32>
      %142 = math.exp %141 : vector<8x128xf32>
      %cst_50 = arith.constant 1.000000e+00 : f32
      %143 = vector.broadcast %cst_50 : f32 to vector<8x128xf32>
      %144 = arith.addf %143, %142 : vector<8x128xf32>
      %145 = arith.divf %143, %144 : vector<8x128xf32>
      %146 = vector.extract_strided_slice %139 {offsets = [0, 128], sizes = [8, 128], strides = [1, 1]} : vector<8x512xf32> to vector<8x128xf32>
      %147 = arith.negf %146 : vector<8x128xf32>
      %148 = math.exp %147 : vector<8x128xf32>
      %cst_51 = arith.constant 1.000000e+00 : f32
      %149 = vector.broadcast %cst_51 : f32 to vector<8x128xf32>
      %150 = arith.addf %149, %148 : vector<8x128xf32>
      %151 = arith.divf %149, %150 : vector<8x128xf32>
      %152 = vector.extract_strided_slice %139 {offsets = [0, 256], sizes = [8, 128], strides = [1, 1]} : vector<8x512xf32> to vector<8x128xf32>
      %153 = math.tanh %152 : vector<8x128xf32>
      %154 = vector.extract_strided_slice %139 {offsets = [0, 384], sizes = [8, 128], strides = [1, 1]} : vector<8x512xf32> to vector<8x128xf32>
      %155 = arith.negf %154 : vector<8x128xf32>
      %156 = math.exp %155 : vector<8x128xf32>
      %cst_52 = arith.constant 1.000000e+00 : f32
      %157 = vector.broadcast %cst_52 : f32 to vector<8x128xf32>
      %158 = arith.addf %157, %156 : vector<8x128xf32>
      %159 = arith.divf %157, %158 : vector<8x128xf32>
      %160 = arith.mulf %151, %134 : vector<8x128xf32>
      %161 = arith.mulf %145, %153 : vector<8x128xf32>
      %162 = arith.addf %160, %161 : vector<8x128xf32>
      %163 = math.tanh %162 : vector<8x128xf32>
      %164 = arith.mulf %159, %163 : vector<8x128xf32>
      %165 = vector.broadcast %132 : i32 to vector<8x1xi32>
      %166 = arith.cmpi slt, %165, %11 : vector<8x1xi32>
      %167 = vector.broadcast %17 : vector<8x1xf32> to vector<8x128xf32>
      %168 = arith.mulf %164, %167 : vector<8x128xf32>
      %169 = vector.broadcast %19 : vector<8x1xf32> to vector<8x128xf32>
      %170 = arith.mulf %164, %169 : vector<8x128xf32>
      %171 = tpu.concatenate %168, %170 in 1 : vector<8x128xf32>, vector<8x128xf32> -> vector<8x256xf32>
      %172 = vector.shape_cast %166 : vector<8x1xi1> to vector<8x1xi1>
      %173 = vector.broadcast %172 : vector<8x1xi1> to vector<8x256xi1>
      %174 = arith.select %173, %171, %133 : vector<8x256xi1>, vector<8x256xf32>
      %c0_53 = arith.constant 0 : index
      %c0_54 = arith.constant 0 : index
      %175 = vector.load %arg6[%c0_53, %c0_54] : memref<8x256xf32, #tpu.memory_space<vmem>>, vector<8x256xf32>
      tpu.vector_store %arg6[%c0_53, %c0_54], %174 {strides = array<i32>} : memref<8x256xf32, #tpu.memory_space<vmem>>, vector<8x256xf32>,
      %176 = vector.shape_cast %166 : vector<8x1xi1> to vector<8x1xi1>
      %177 = vector.broadcast %176 : vector<8x1xi1> to vector<8x128xi1>
      %178 = arith.select %177, %162, %134 : vector<8x128xi1>, vector<8x128xf32>
      %c0_55 = arith.constant 0 : index
      %c0_56 = arith.constant 0 : index
      %179 = vector.load %arg7[%c0_55, %c0_56] : memref<8x128xf32, #tpu.memory_space<vmem>>, vector<8x128xf32>
      tpu.vector_store %arg7[%c0_55, %c0_56], %178 {strides = array<i32>} : memref<8x128xf32, #tpu.memory_space<vmem>>, vector<8x128xf32>,
      %cst_57 = arith.constant 0.000000e+00 : f32
      %180 = vector.shape_cast %166 : vector<8x1xi1> to vector<8x1xi1>
      %181 = vector.broadcast %180 : vector<8x1xi1> to vector<8x128xi1>
      %182 = vector.broadcast %cst_57 : f32 to vector<8x128xf32>
      %183 = arith.select %181, %164, %182 : vector<8x128xi1>, vector<8x128xf32>
      %184 = arith.index_cast %c2_i32_42 : i32 to index
      %c0_58 = arith.constant 0 : index
      %c0_59 = arith.constant 0 : index
      %185 = vector.load %arg5[%184, %c0_58, %c0_59] : memref<8x8x128xf32, #tpu.memory_space<vmem>>, vector<1x8x128xf32>
      %186 = vector.shape_cast %185 : vector<1x8x128xf32> to vector<8x128xf32>
      %187 = vector.shape_cast %183 : vector<8x128xf32> to vector<1x8x128xf32>
      tpu.vector_store %arg5[%184, %c0_58, %c0_59], %187 {strides = array<i32>} : memref<8x8x128xf32, #tpu.memory_space<vmem>>, vector<1x8x128xf32>,
      %c3_i32 = arith.constant 3 : i32
      %188 = arith.addi %3, %c3_i32 : i32
      %c0_60 = arith.constant 0 : index
      %c0_61 = arith.constant 0 : index
      %189 = vector.load %arg6[%c0_60, %c0_61] : memref<8x256xf32, #tpu.memory_space<vmem>>, vector<8x256xf32>
      %c0_62 = arith.constant 0 : index
      %c0_63 = arith.constant 0 : index
      %190 = vector.load %arg7[%c0_62, %c0_63] : memref<8x128xf32, #tpu.memory_space<vmem>>, vector<8x128xf32>
      %191 = arith.index_cast %c3_i32 : i32 to index
      %c0_64 = arith.constant 0 : index
      %c0_65 = arith.constant 0 : index
      %192 = vector.load %arg3[%191, %c0_64, %c0_65] : memref<8x8x512xf32, #tpu.memory_space<vmem>>, vector<1x8x512xf32>
      %193 = vector.shape_cast %192 : vector<1x8x512xf32> to vector<8x512xf32>
      %cst_66 = arith.constant dense<0.000000e+00> : vector<8x512xf32>
      %194 = tpu.matmul %189, %12, %cst_66 {dimension_numbers = #tpu.dot_dimension_numbers<[1], [0], [0], [1], [0, 0, 1, 1], [], []>} : vector<8x256xf32>, vector<256x512xf32>, vector<8x512xf32> -> vector<8x512xf32>
      %195 = arith.addf %193, %194 : vector<8x512xf32>
      %196 = vector.extract_strided_slice %195 {offsets = [0, 0], sizes = [8, 128], strides = [1, 1]} : vector<8x512xf32> to vector<8x128xf32>
      %197 = arith.negf %196 : vector<8x128xf32>
      %198 = math.exp %197 : vector<8x128xf32>
      %cst_67 = arith.constant 1.000000e+00 : f32
      %199 = vector.broadcast %cst_67 : f32 to vector<8x128xf32>
      %200 = arith.addf %199, %198 : vector<8x128xf32>
      %201 = arith.divf %199, %200 : vector<8x128xf32>
      %202 = vector.extract_strided_slice %195 {offsets = [0, 128], sizes = [8, 128], strides = [1, 1]} : vector<8x512xf32> to vector<8x128xf32>
      %203 = arith.negf %202 : vector<8x128xf32>
      %204 = math.exp %203 : vector<8x128xf32>
      %cst_68 = arith.constant 1.000000e+00 : f32
      %205 = vector.broadcast %cst_68 : f32 to vector<8x128xf32>
      %206 = arith.addf %205, %204 : vector<8x128xf32>
      %207 = arith.divf %205, %206 : vector<8x128xf32>
      %208 = vector.extract_strided_slice %195 {offsets = [0, 256], sizes = [8, 128], strides = [1, 1]} : vector<8x512xf32> to vector<8x128xf32>
      %209 = math.tanh %208 : vector<8x128xf32>
      %210 = vector.extract_strided_slice %195 {offsets = [0, 384], sizes = [8, 128], strides = [1, 1]} : vector<8x512xf32> to vector<8x128xf32>
      %211 = arith.negf %210 : vector<8x128xf32>
      %212 = math.exp %211 : vector<8x128xf32>
      %cst_69 = arith.constant 1.000000e+00 : f32
      %213 = vector.broadcast %cst_69 : f32 to vector<8x128xf32>
      %214 = arith.addf %213, %212 : vector<8x128xf32>
      %215 = arith.divf %213, %214 : vector<8x128xf32>
      %216 = arith.mulf %207, %190 : vector<8x128xf32>
      %217 = arith.mulf %201, %209 : vector<8x128xf32>
      %218 = arith.addf %216, %217 : vector<8x128xf32>
      %219 = math.tanh %218 : vector<8x128xf32>
      %220 = arith.mulf %215, %219 : vector<8x128xf32>
      %221 = vector.broadcast %188 : i32 to vector<8x1xi32>
      %222 = arith.cmpi slt, %221, %11 : vector<8x1xi32>
      %223 = vector.broadcast %17 : vector<8x1xf32> to vector<8x128xf32>
      %224 = arith.mulf %220, %223 : vector<8x128xf32>
      %225 = vector.broadcast %19 : vector<8x1xf32> to vector<8x128xf32>
      %226 = arith.mulf %220, %225 : vector<8x128xf32>
      %227 = tpu.concatenate %224, %226 in 1 : vector<8x128xf32>, vector<8x128xf32> -> vector<8x256xf32>
      %228 = vector.shape_cast %222 : vector<8x1xi1> to vector<8x1xi1>
      %229 = vector.broadcast %228 : vector<8x1xi1> to vector<8x256xi1>
      %230 = arith.select %229, %227, %189 : vector<8x256xi1>, vector<8x256xf32>
      %c0_70 = arith.constant 0 : index
      %c0_71 = arith.constant 0 : index
      %231 = vector.load %arg6[%c0_70, %c0_71] : memref<8x256xf32, #tpu.memory_space<vmem>>, vector<8x256xf32>
      tpu.vector_store %arg6[%c0_70, %c0_71], %230 {strides = array<i32>} : memref<8x256xf32, #tpu.memory_space<vmem>>, vector<8x256xf32>,
      %232 = vector.shape_cast %222 : vector<8x1xi1> to vector<8x1xi1>
      %233 = vector.broadcast %232 : vector<8x1xi1> to vector<8x128xi1>
      %234 = arith.select %233, %218, %190 : vector<8x128xi1>, vector<8x128xf32>
      %c0_72 = arith.constant 0 : index
      %c0_73 = arith.constant 0 : index
      %235 = vector.load %arg7[%c0_72, %c0_73] : memref<8x128xf32, #tpu.memory_space<vmem>>, vector<8x128xf32>
      tpu.vector_store %arg7[%c0_72, %c0_73], %234 {strides = array<i32>} : memref<8x128xf32, #tpu.memory_space<vmem>>, vector<8x128xf32>,
      %cst_74 = arith.constant 0.000000e+00 : f32
      %236 = vector.shape_cast %222 : vector<8x1xi1> to vector<8x1xi1>
      %237 = vector.broadcast %236 : vector<8x1xi1> to vector<8x128xi1>
      %238 = vector.broadcast %cst_74 : f32 to vector<8x128xf32>
      %239 = arith.select %237, %220, %238 : vector<8x128xi1>, vector<8x128xf32>
      %240 = arith.index_cast %c3_i32 : i32 to index
      %c0_75 = arith.constant 0 : index
      %c0_76 = arith.constant 0 : index
      %241 = vector.load %arg5[%240, %c0_75, %c0_76] : memref<8x8x128xf32, #tpu.memory_space<vmem>>, vector<1x8x128xf32>
      %242 = vector.shape_cast %241 : vector<1x8x128xf32> to vector<8x128xf32>
      %243 = vector.shape_cast %239 : vector<8x128xf32> to vector<1x8x128xf32>
      tpu.vector_store %arg5[%240, %c0_75, %c0_76], %243 {strides = array<i32>} : memref<8x8x128xf32, #tpu.memory_space<vmem>>, vector<1x8x128xf32>,
      %c4_i32 = arith.constant 4 : i32
      %244 = arith.addi %3, %c4_i32 : i32
      %c0_77 = arith.constant 0 : index
      %c0_78 = arith.constant 0 : index
      %245 = vector.load %arg6[%c0_77, %c0_78] : memref<8x256xf32, #tpu.memory_space<vmem>>, vector<8x256xf32>
      %c0_79 = arith.constant 0 : index
      %c0_80 = arith.constant 0 : index
      %246 = vector.load %arg7[%c0_79, %c0_80] : memref<8x128xf32, #tpu.memory_space<vmem>>, vector<8x128xf32>
      %247 = arith.index_cast %c4_i32 : i32 to index
      %c0_81 = arith.constant 0 : index
      %c0_82 = arith.constant 0 : index
      %248 = vector.load %arg3[%247, %c0_81, %c0_82] : memref<8x8x512xf32, #tpu.memory_space<vmem>>, vector<1x8x512xf32>
      %249 = vector.shape_cast %248 : vector<1x8x512xf32> to vector<8x512xf32>
      %cst_83 = arith.constant dense<0.000000e+00> : vector<8x512xf32>
      %250 = tpu.matmul %245, %12, %cst_83 {dimension_numbers = #tpu.dot_dimension_numbers<[1], [0], [0], [1], [0, 0, 1, 1], [], []>} : vector<8x256xf32>, vector<256x512xf32>, vector<8x512xf32> -> vector<8x512xf32>
      %251 = arith.addf %249, %250 : vector<8x512xf32>
      %252 = vector.extract_strided_slice %251 {offsets = [0, 0], sizes = [8, 128], strides = [1, 1]} : vector<8x512xf32> to vector<8x128xf32>
      %253 = arith.negf %252 : vector<8x128xf32>
      %254 = math.exp %253 : vector<8x128xf32>
      %cst_84 = arith.constant 1.000000e+00 : f32
      %255 = vector.broadcast %cst_84 : f32 to vector<8x128xf32>
      %256 = arith.addf %255, %254 : vector<8x128xf32>
      %257 = arith.divf %255, %256 : vector<8x128xf32>
      %258 = vector.extract_strided_slice %251 {offsets = [0, 128], sizes = [8, 128], strides = [1, 1]} : vector<8x512xf32> to vector<8x128xf32>
      %259 = arith.negf %258 : vector<8x128xf32>
      %260 = math.exp %259 : vector<8x128xf32>
      %cst_85 = arith.constant 1.000000e+00 : f32
      %261 = vector.broadcast %cst_85 : f32 to vector<8x128xf32>
      %262 = arith.addf %261, %260 : vector<8x128xf32>
      %263 = arith.divf %261, %262 : vector<8x128xf32>
      %264 = vector.extract_strided_slice %251 {offsets = [0, 256], sizes = [8, 128], strides = [1, 1]} : vector<8x512xf32> to vector<8x128xf32>
      %265 = math.tanh %264 : vector<8x128xf32>
      %266 = vector.extract_strided_slice %251 {offsets = [0, 384], sizes = [8, 128], strides = [1, 1]} : vector<8x512xf32> to vector<8x128xf32>
      %267 = arith.negf %266 : vector<8x128xf32>
      %268 = math.exp %267 : vector<8x128xf32>
      %cst_86 = arith.constant 1.000000e+00 : f32
      %269 = vector.broadcast %cst_86 : f32 to vector<8x128xf32>
      %270 = arith.addf %269, %268 : vector<8x128xf32>
      %271 = arith.divf %269, %270 : vector<8x128xf32>
      %272 = arith.mulf %263, %246 : vector<8x128xf32>
      %273 = arith.mulf %257, %265 : vector<8x128xf32>
      %274 = arith.addf %272, %273 : vector<8x128xf32>
      %275 = math.tanh %274 : vector<8x128xf32>
      %276 = arith.mulf %271, %275 : vector<8x128xf32>
      %277 = vector.broadcast %244 : i32 to vector<8x1xi32>
      %278 = arith.cmpi slt, %277, %11 : vector<8x1xi32>
      %279 = vector.broadcast %17 : vector<8x1xf32> to vector<8x128xf32>
      %280 = arith.mulf %276, %279 : vector<8x128xf32>
      %281 = vector.broadcast %19 : vector<8x1xf32> to vector<8x128xf32>
      %282 = arith.mulf %276, %281 : vector<8x128xf32>
      %283 = tpu.concatenate %280, %282 in 1 : vector<8x128xf32>, vector<8x128xf32> -> vector<8x256xf32>
      %284 = vector.shape_cast %278 : vector<8x1xi1> to vector<8x1xi1>
      %285 = vector.broadcast %284 : vector<8x1xi1> to vector<8x256xi1>
      %286 = arith.select %285, %283, %245 : vector<8x256xi1>, vector<8x256xf32>
      %c0_87 = arith.constant 0 : index
      %c0_88 = arith.constant 0 : index
      %287 = vector.load %arg6[%c0_87, %c0_88] : memref<8x256xf32, #tpu.memory_space<vmem>>, vector<8x256xf32>
      tpu.vector_store %arg6[%c0_87, %c0_88], %286 {strides = array<i32>} : memref<8x256xf32, #tpu.memory_space<vmem>>, vector<8x256xf32>,
      %288 = vector.shape_cast %278 : vector<8x1xi1> to vector<8x1xi1>
      %289 = vector.broadcast %288 : vector<8x1xi1> to vector<8x128xi1>
      %290 = arith.select %289, %274, %246 : vector<8x128xi1>, vector<8x128xf32>
      %c0_89 = arith.constant 0 : index
      %c0_90 = arith.constant 0 : index
      %291 = vector.load %arg7[%c0_89, %c0_90] : memref<8x128xf32, #tpu.memory_space<vmem>>, vector<8x128xf32>
      tpu.vector_store %arg7[%c0_89, %c0_90], %290 {strides = array<i32>} : memref<8x128xf32, #tpu.memory_space<vmem>>, vector<8x128xf32>,
      %cst_91 = arith.constant 0.000000e+00 : f32
      %292 = vector.shape_cast %278 : vector<8x1xi1> to vector<8x1xi1>
      %293 = vector.broadcast %292 : vector<8x1xi1> to vector<8x128xi1>
      %294 = vector.broadcast %cst_91 : f32 to vector<8x128xf32>
      %295 = arith.select %293, %276, %294 : vector<8x128xi1>, vector<8x128xf32>
      %296 = arith.index_cast %c4_i32 : i32 to index
      %c0_92 = arith.constant 0 : index
      %c0_93 = arith.constant 0 : index
      %297 = vector.load %arg5[%296, %c0_92, %c0_93] : memref<8x8x128xf32, #tpu.memory_space<vmem>>, vector<1x8x128xf32>
      %298 = vector.shape_cast %297 : vector<1x8x128xf32> to vector<8x128xf32>
      %299 = vector.shape_cast %295 : vector<8x128xf32> to vector<1x8x128xf32>
      tpu.vector_store %arg5[%296, %c0_92, %c0_93], %299 {strides = array<i32>} : memref<8x8x128xf32, #tpu.memory_space<vmem>>, vector<1x8x128xf32>,
      %c5_i32 = arith.constant 5 : i32
      %300 = arith.addi %3, %c5_i32 : i32
      %c0_94 = arith.constant 0 : index
      %c0_95 = arith.constant 0 : index
      %301 = vector.load %arg6[%c0_94, %c0_95] : memref<8x256xf32, #tpu.memory_space<vmem>>, vector<8x256xf32>
      %c0_96 = arith.constant 0 : index
      %c0_97 = arith.constant 0 : index
      %302 = vector.load %arg7[%c0_96, %c0_97] : memref<8x128xf32, #tpu.memory_space<vmem>>, vector<8x128xf32>
      %303 = arith.index_cast %c5_i32 : i32 to index
      %c0_98 = arith.constant 0 : index
      %c0_99 = arith.constant 0 : index
      %304 = vector.load %arg3[%303, %c0_98, %c0_99] : memref<8x8x512xf32, #tpu.memory_space<vmem>>, vector<1x8x512xf32>
      %305 = vector.shape_cast %304 : vector<1x8x512xf32> to vector<8x512xf32>
      %cst_100 = arith.constant dense<0.000000e+00> : vector<8x512xf32>
      %306 = tpu.matmul %301, %12, %cst_100 {dimension_numbers = #tpu.dot_dimension_numbers<[1], [0], [0], [1], [0, 0, 1, 1], [], []>} : vector<8x256xf32>, vector<256x512xf32>, vector<8x512xf32> -> vector<8x512xf32>
      %307 = arith.addf %305, %306 : vector<8x512xf32>
      %308 = vector.extract_strided_slice %307 {offsets = [0, 0], sizes = [8, 128], strides = [1, 1]} : vector<8x512xf32> to vector<8x128xf32>
      %309 = arith.negf %308 : vector<8x128xf32>
      %310 = math.exp %309 : vector<8x128xf32>
      %cst_101 = arith.constant 1.000000e+00 : f32
      %311 = vector.broadcast %cst_101 : f32 to vector<8x128xf32>
      %312 = arith.addf %311, %310 : vector<8x128xf32>
      %313 = arith.divf %311, %312 : vector<8x128xf32>
      %314 = vector.extract_strided_slice %307 {offsets = [0, 128], sizes = [8, 128], strides = [1, 1]} : vector<8x512xf32> to vector<8x128xf32>
      %315 = arith.negf %314 : vector<8x128xf32>
      %316 = math.exp %315 : vector<8x128xf32>
      %cst_102 = arith.constant 1.000000e+00 : f32
      %317 = vector.broadcast %cst_102 : f32 to vector<8x128xf32>
      %318 = arith.addf %317, %316 : vector<8x128xf32>
      %319 = arith.divf %317, %318 : vector<8x128xf32>
      %320 = vector.extract_strided_slice %307 {offsets = [0, 256], sizes = [8, 128], strides = [1, 1]} : vector<8x512xf32> to vector<8x128xf32>
      %321 = math.tanh %320 : vector<8x128xf32>
      %322 = vector.extract_strided_slice %307 {offsets = [0, 384], sizes = [8, 128], strides = [1, 1]} : vector<8x512xf32> to vector<8x128xf32>
      %323 = arith.negf %322 : vector<8x128xf32>
      %324 = math.exp %323 : vector<8x128xf32>
      %cst_103 = arith.constant 1.000000e+00 : f32
      %325 = vector.broadcast %cst_103 : f32 to vector<8x128xf32>
      %326 = arith.addf %325, %324 : vector<8x128xf32>
      %327 = arith.divf %325, %326 : vector<8x128xf32>
      %328 = arith.mulf %319, %302 : vector<8x128xf32>
      %329 = arith.mulf %313, %321 : vector<8x128xf32>
      %330 = arith.addf %328, %329 : vector<8x128xf32>
      %331 = math.tanh %330 : vector<8x128xf32>
      %332 = arith.mulf %327, %331 : vector<8x128xf32>
      %333 = vector.broadcast %300 : i32 to vector<8x1xi32>
      %334 = arith.cmpi slt, %333, %11 : vector<8x1xi32>
      %335 = vector.broadcast %17 : vector<8x1xf32> to vector<8x128xf32>
      %336 = arith.mulf %332, %335 : vector<8x128xf32>
      %337 = vector.broadcast %19 : vector<8x1xf32> to vector<8x128xf32>
      %338 = arith.mulf %332, %337 : vector<8x128xf32>
      %339 = tpu.concatenate %336, %338 in 1 : vector<8x128xf32>, vector<8x128xf32> -> vector<8x256xf32>
      %340 = vector.shape_cast %334 : vector<8x1xi1> to vector<8x1xi1>
      %341 = vector.broadcast %340 : vector<8x1xi1> to vector<8x256xi1>
      %342 = arith.select %341, %339, %301 : vector<8x256xi1>, vector<8x256xf32>
      %c0_104 = arith.constant 0 : index
      %c0_105 = arith.constant 0 : index
      %343 = vector.load %arg6[%c0_104, %c0_105] : memref<8x256xf32, #tpu.memory_space<vmem>>, vector<8x256xf32>
      tpu.vector_store %arg6[%c0_104, %c0_105], %342 {strides = array<i32>} : memref<8x256xf32, #tpu.memory_space<vmem>>, vector<8x256xf32>,
      %344 = vector.shape_cast %334 : vector<8x1xi1> to vector<8x1xi1>
      %345 = vector.broadcast %344 : vector<8x1xi1> to vector<8x128xi1>
      %346 = arith.select %345, %330, %302 : vector<8x128xi1>, vector<8x128xf32>
      %c0_106 = arith.constant 0 : index
      %c0_107 = arith.constant 0 : index
      %347 = vector.load %arg7[%c0_106, %c0_107] : memref<8x128xf32, #tpu.memory_space<vmem>>, vector<8x128xf32>
      tpu.vector_store %arg7[%c0_106, %c0_107], %346 {strides = array<i32>} : memref<8x128xf32, #tpu.memory_space<vmem>>, vector<8x128xf32>,
      %cst_108 = arith.constant 0.000000e+00 : f32
      %348 = vector.shape_cast %334 : vector<8x1xi1> to vector<8x1xi1>
      %349 = vector.broadcast %348 : vector<8x1xi1> to vector<8x128xi1>
      %350 = vector.broadcast %cst_108 : f32 to vector<8x128xf32>
      %351 = arith.select %349, %332, %350 : vector<8x128xi1>, vector<8x128xf32>
      %352 = arith.index_cast %c5_i32 : i32 to index
      %c0_109 = arith.constant 0 : index
      %c0_110 = arith.constant 0 : index
      %353 = vector.load %arg5[%352, %c0_109, %c0_110] : memref<8x8x128xf32, #tpu.memory_space<vmem>>, vector<1x8x128xf32>
      %354 = vector.shape_cast %353 : vector<1x8x128xf32> to vector<8x128xf32>
      %355 = vector.shape_cast %351 : vector<8x128xf32> to vector<1x8x128xf32>
      tpu.vector_store %arg5[%352, %c0_109, %c0_110], %355 {strides = array<i32>} : memref<8x8x128xf32, #tpu.memory_space<vmem>>, vector<1x8x128xf32>,
      %c6_i32 = arith.constant 6 : i32
      %356 = arith.addi %3, %c6_i32 : i32
      %c0_111 = arith.constant 0 : index
      %c0_112 = arith.constant 0 : index
      %357 = vector.load %arg6[%c0_111, %c0_112] : memref<8x256xf32, #tpu.memory_space<vmem>>, vector<8x256xf32>
      %c0_113 = arith.constant 0 : index
      %c0_114 = arith.constant 0 : index
      %358 = vector.load %arg7[%c0_113, %c0_114] : memref<8x128xf32, #tpu.memory_space<vmem>>, vector<8x128xf32>
      %359 = arith.index_cast %c6_i32 : i32 to index
      %c0_115 = arith.constant 0 : index
      %c0_116 = arith.constant 0 : index
      %360 = vector.load %arg3[%359, %c0_115, %c0_116] : memref<8x8x512xf32, #tpu.memory_space<vmem>>, vector<1x8x512xf32>
      %361 = vector.shape_cast %360 : vector<1x8x512xf32> to vector<8x512xf32>
      %cst_117 = arith.constant dense<0.000000e+00> : vector<8x512xf32>
      %362 = tpu.matmul %357, %12, %cst_117 {dimension_numbers = #tpu.dot_dimension_numbers<[1], [0], [0], [1], [0, 0, 1, 1], [], []>} : vector<8x256xf32>, vector<256x512xf32>, vector<8x512xf32> -> vector<8x512xf32>
      %363 = arith.addf %361, %362 : vector<8x512xf32>
      %364 = vector.extract_strided_slice %363 {offsets = [0, 0], sizes = [8, 128], strides = [1, 1]} : vector<8x512xf32> to vector<8x128xf32>
      %365 = arith.negf %364 : vector<8x128xf32>
      %366 = math.exp %365 : vector<8x128xf32>
      %cst_118 = arith.constant 1.000000e+00 : f32
      %367 = vector.broadcast %cst_118 : f32 to vector<8x128xf32>
      %368 = arith.addf %367, %366 : vector<8x128xf32>
      %369 = arith.divf %367, %368 : vector<8x128xf32>
      %370 = vector.extract_strided_slice %363 {offsets = [0, 128], sizes = [8, 128], strides = [1, 1]} : vector<8x512xf32> to vector<8x128xf32>
      %371 = arith.negf %370 : vector<8x128xf32>
      %372 = math.exp %371 : vector<8x128xf32>
      %cst_119 = arith.constant 1.000000e+00 : f32
      %373 = vector.broadcast %cst_119 : f32 to vector<8x128xf32>
      %374 = arith.addf %373, %372 : vector<8x128xf32>
      %375 = arith.divf %373, %374 : vector<8x128xf32>
      %376 = vector.extract_strided_slice %363 {offsets = [0, 256], sizes = [8, 128], strides = [1, 1]} : vector<8x512xf32> to vector<8x128xf32>
      %377 = math.tanh %376 : vector<8x128xf32>
      %378 = vector.extract_strided_slice %363 {offsets = [0, 384], sizes = [8, 128], strides = [1, 1]} : vector<8x512xf32> to vector<8x128xf32>
      %379 = arith.negf %378 : vector<8x128xf32>
      %380 = math.exp %379 : vector<8x128xf32>
      %cst_120 = arith.constant 1.000000e+00 : f32
      %381 = vector.broadcast %cst_120 : f32 to vector<8x128xf32>
      %382 = arith.addf %381, %380 : vector<8x128xf32>
      %383 = arith.divf %381, %382 : vector<8x128xf32>
      %384 = arith.mulf %375, %358 : vector<8x128xf32>
      %385 = arith.mulf %369, %377 : vector<8x128xf32>
      %386 = arith.addf %384, %385 : vector<8x128xf32>
      %387 = math.tanh %386 : vector<8x128xf32>
      %388 = arith.mulf %383, %387 : vector<8x128xf32>
      %389 = vector.broadcast %356 : i32 to vector<8x1xi32>
      %390 = arith.cmpi slt, %389, %11 : vector<8x1xi32>
      %391 = vector.broadcast %17 : vector<8x1xf32> to vector<8x128xf32>
      %392 = arith.mulf %388, %391 : vector<8x128xf32>
      %393 = vector.broadcast %19 : vector<8x1xf32> to vector<8x128xf32>
      %394 = arith.mulf %388, %393 : vector<8x128xf32>
      %395 = tpu.concatenate %392, %394 in 1 : vector<8x128xf32>, vector<8x128xf32> -> vector<8x256xf32>
      %396 = vector.shape_cast %390 : vector<8x1xi1> to vector<8x1xi1>
      %397 = vector.broadcast %396 : vector<8x1xi1> to vector<8x256xi1>
      %398 = arith.select %397, %395, %357 : vector<8x256xi1>, vector<8x256xf32>
      %c0_121 = arith.constant 0 : index
      %c0_122 = arith.constant 0 : index
      %399 = vector.load %arg6[%c0_121, %c0_122] : memref<8x256xf32, #tpu.memory_space<vmem>>, vector<8x256xf32>
      tpu.vector_store %arg6[%c0_121, %c0_122], %398 {strides = array<i32>} : memref<8x256xf32, #tpu.memory_space<vmem>>, vector<8x256xf32>,
      %400 = vector.shape_cast %390 : vector<8x1xi1> to vector<8x1xi1>
      %401 = vector.broadcast %400 : vector<8x1xi1> to vector<8x128xi1>
      %402 = arith.select %401, %386, %358 : vector<8x128xi1>, vector<8x128xf32>
      %c0_123 = arith.constant 0 : index
      %c0_124 = arith.constant 0 : index
      %403 = vector.load %arg7[%c0_123, %c0_124] : memref<8x128xf32, #tpu.memory_space<vmem>>, vector<8x128xf32>
      tpu.vector_store %arg7[%c0_123, %c0_124], %402 {strides = array<i32>} : memref<8x128xf32, #tpu.memory_space<vmem>>, vector<8x128xf32>,
      %cst_125 = arith.constant 0.000000e+00 : f32
      %404 = vector.shape_cast %390 : vector<8x1xi1> to vector<8x1xi1>
      %405 = vector.broadcast %404 : vector<8x1xi1> to vector<8x128xi1>
      %406 = vector.broadcast %cst_125 : f32 to vector<8x128xf32>
      %407 = arith.select %405, %388, %406 : vector<8x128xi1>, vector<8x128xf32>
      %408 = arith.index_cast %c6_i32 : i32 to index
      %c0_126 = arith.constant 0 : index
      %c0_127 = arith.constant 0 : index
      %409 = vector.load %arg5[%408, %c0_126, %c0_127] : memref<8x8x128xf32, #tpu.memory_space<vmem>>, vector<1x8x128xf32>
      %410 = vector.shape_cast %409 : vector<1x8x128xf32> to vector<8x128xf32>
      %411 = vector.shape_cast %407 : vector<8x128xf32> to vector<1x8x128xf32>
      tpu.vector_store %arg5[%408, %c0_126, %c0_127], %411 {strides = array<i32>} : memref<8x8x128xf32, #tpu.memory_space<vmem>>, vector<1x8x128xf32>,
      %c7_i32 = arith.constant 7 : i32
      %412 = arith.addi %3, %c7_i32 : i32
      %c0_128 = arith.constant 0 : index
      %c0_129 = arith.constant 0 : index
      %413 = vector.load %arg6[%c0_128, %c0_129] : memref<8x256xf32, #tpu.memory_space<vmem>>, vector<8x256xf32>
      %c0_130 = arith.constant 0 : index
      %c0_131 = arith.constant 0 : index
      %414 = vector.load %arg7[%c0_130, %c0_131] : memref<8x128xf32, #tpu.memory_space<vmem>>, vector<8x128xf32>
      %415 = arith.index_cast %c7_i32 : i32 to index
      %c0_132 = arith.constant 0 : index
      %c0_133 = arith.constant 0 : index
      %416 = vector.load %arg3[%415, %c0_132, %c0_133] : memref<8x8x512xf32, #tpu.memory_space<vmem>>, vector<1x8x512xf32>
      %417 = vector.shape_cast %416 : vector<1x8x512xf32> to vector<8x512xf32>
      %cst_134 = arith.constant dense<0.000000e+00> : vector<8x512xf32>
      %418 = tpu.matmul %413, %12, %cst_134 {dimension_numbers = #tpu.dot_dimension_numbers<[1], [0], [0], [1], [0, 0, 1, 1], [], []>} : vector<8x256xf32>, vector<256x512xf32>, vector<8x512xf32> -> vector<8x512xf32>
      %419 = arith.addf %417, %418 : vector<8x512xf32>
      %420 = vector.extract_strided_slice %419 {offsets = [0, 0], sizes = [8, 128], strides = [1, 1]} : vector<8x512xf32> to vector<8x128xf32>
      %421 = arith.negf %420 : vector<8x128xf32>
      %422 = math.exp %421 : vector<8x128xf32>
      %cst_135 = arith.constant 1.000000e+00 : f32
      %423 = vector.broadcast %cst_135 : f32 to vector<8x128xf32>
      %424 = arith.addf %423, %422 : vector<8x128xf32>
      %425 = arith.divf %423, %424 : vector<8x128xf32>
      %426 = vector.extract_strided_slice %419 {offsets = [0, 128], sizes = [8, 128], strides = [1, 1]} : vector<8x512xf32> to vector<8x128xf32>
      %427 = arith.negf %426 : vector<8x128xf32>
      %428 = math.exp %427 : vector<8x128xf32>
      %cst_136 = arith.constant 1.000000e+00 : f32
      %429 = vector.broadcast %cst_136 : f32 to vector<8x128xf32>
      %430 = arith.addf %429, %428 : vector<8x128xf32>
      %431 = arith.divf %429, %430 : vector<8x128xf32>
      %432 = vector.extract_strided_slice %419 {offsets = [0, 256], sizes = [8, 128], strides = [1, 1]} : vector<8x512xf32> to vector<8x128xf32>
      %433 = math.tanh %432 : vector<8x128xf32>
      %434 = vector.extract_strided_slice %419 {offsets = [0, 384], sizes = [8, 128], strides = [1, 1]} : vector<8x512xf32> to vector<8x128xf32>
      %435 = arith.negf %434 : vector<8x128xf32>
      %436 = math.exp %435 : vector<8x128xf32>
      %cst_137 = arith.constant 1.000000e+00 : f32
      %437 = vector.broadcast %cst_137 : f32 to vector<8x128xf32>
      %438 = arith.addf %437, %436 : vector<8x128xf32>
      %439 = arith.divf %437, %438 : vector<8x128xf32>
      %440 = arith.mulf %431, %414 : vector<8x128xf32>
      %441 = arith.mulf %425, %433 : vector<8x128xf32>
      %442 = arith.addf %440, %441 : vector<8x128xf32>
      %443 = math.tanh %442 : vector<8x128xf32>
      %444 = arith.mulf %439, %443 : vector<8x128xf32>
      %445 = vector.broadcast %412 : i32 to vector<8x1xi32>
      %446 = arith.cmpi slt, %445, %11 : vector<8x1xi32>
      %447 = vector.broadcast %17 : vector<8x1xf32> to vector<8x128xf32>
      %448 = arith.mulf %444, %447 : vector<8x128xf32>
      %449 = vector.broadcast %19 : vector<8x1xf32> to vector<8x128xf32>
      %450 = arith.mulf %444, %449 : vector<8x128xf32>
      %451 = tpu.concatenate %448, %450 in 1 : vector<8x128xf32>, vector<8x128xf32> -> vector<8x256xf32>
      %452 = vector.shape_cast %446 : vector<8x1xi1> to vector<8x1xi1>
      %453 = vector.broadcast %452 : vector<8x1xi1> to vector<8x256xi1>
      %454 = arith.select %453, %451, %413 : vector<8x256xi1>, vector<8x256xf32>
      %c0_138 = arith.constant 0 : index
      %c0_139 = arith.constant 0 : index
      %455 = vector.load %arg6[%c0_138, %c0_139] : memref<8x256xf32, #tpu.memory_space<vmem>>, vector<8x256xf32>
      tpu.vector_store %arg6[%c0_138, %c0_139], %454 {strides = array<i32>} : memref<8x256xf32, #tpu.memory_space<vmem>>, vector<8x256xf32>,
      %456 = vector.shape_cast %446 : vector<8x1xi1> to vector<8x1xi1>
      %457 = vector.broadcast %456 : vector<8x1xi1> to vector<8x128xi1>
      %458 = arith.select %457, %442, %414 : vector<8x128xi1>, vector<8x128xf32>
      %c0_140 = arith.constant 0 : index
      %c0_141 = arith.constant 0 : index
      %459 = vector.load %arg7[%c0_140, %c0_141] : memref<8x128xf32, #tpu.memory_space<vmem>>, vector<8x128xf32>
      tpu.vector_store %arg7[%c0_140, %c0_141], %458 {strides = array<i32>} : memref<8x128xf32, #tpu.memory_space<vmem>>, vector<8x128xf32>,
      %cst_142 = arith.constant 0.000000e+00 : f32
      %460 = vector.shape_cast %446 : vector<8x1xi1> to vector<8x1xi1>
      %461 = vector.broadcast %460 : vector<8x1xi1> to vector<8x128xi1>
      %462 = vector.broadcast %cst_142 : f32 to vector<8x128xf32>
      %463 = arith.select %461, %444, %462 : vector<8x128xi1>, vector<8x128xf32>
      %464 = arith.index_cast %c7_i32 : i32 to index
      %c0_143 = arith.constant 0 : index
      %c0_144 = arith.constant 0 : index
      %465 = vector.load %arg5[%464, %c0_143, %c0_144] : memref<8x8x128xf32, #tpu.memory_space<vmem>>, vector<1x8x128xf32>
      %466 = vector.shape_cast %465 : vector<1x8x128xf32> to vector<8x128xf32>
      %467 = vector.shape_cast %463 : vector<8x128xf32> to vector<1x8x128xf32>
      tpu.vector_store %arg5[%464, %c0_143, %c0_144], %467 {strides = array<i32>} : memref<8x8x128xf32, #tpu.memory_space<vmem>>, vector<1x8x128xf32>,
      %c8_i32_145 = arith.constant 8 : i32
    } else {
    }
    %true = arith.constant true
    %8 = arith.xori %5, %true : i1
    %9 = arith.extui %8 : i1 to i32
    %c0_i32_2 = arith.constant 0 : i32
    %10 = arith.cmpi ne, %9, %c0_i32_2 : i32
    scf.if %10 {
      %cst = arith.constant 0.000000e+00 : f32
      %11 = vector.broadcast %cst : f32 to vector<8x8x128xf32>
      %c0_3 = arith.constant 0 : index
      %c0_4 = arith.constant 0 : index
      %c0_5 = arith.constant 0 : index
      %12 = vector.load %arg5[%c0_3, %c0_4, %c0_5] : memref<8x8x128xf32, #tpu.memory_space<vmem>>, vector<8x8x128xf32>
      tpu.vector_store %arg5[%c0_3, %c0_4, %c0_5], %11 {strides = array<i32>} : memref<8x8x128xf32, #tpu.memory_space<vmem>>, vector<8x8x128xf32>,
    } else {
    }
    return
  }
  func.func @transform_0(%arg0: i32, %arg1: memref<1xi32, #tpu.memory_space<smem>>) -> (i32, i32) {
    %c0_i32 = arith.constant 0 : i32
    %c0_i32_0 = arith.constant 0 : i32
    %c0_i32_1 = arith.constant 0 : i32
    return %c0_i32, %c0_i32_0 : i32, i32
  }
  func.func @transform_1(%arg0: i32, %arg1: memref<1xi32, #tpu.memory_space<smem>>) -> (i32, i32, i32) {
    %c0_i32 = arith.constant 0 : i32
    %c0_i32_0 = arith.constant 0 : i32
    %c0_i32_1 = arith.constant 0 : i32
    return %arg0, %c0_i32, %c0_i32_0 : i32, i32, i32
  }
  func.func @transform_2(%arg0: i32, %arg1: memref<1xi32, #tpu.memory_space<smem>>) -> (i32, i32) {
    %c0_i32 = arith.constant 0 : i32
    %c0_i32_0 = arith.constant 0 : i32
    %c0_i32_1 = arith.constant 0 : i32
    return %c0_i32, %c0_i32_0 : i32, i32
  }
  func.func @transform_3(%arg0: i32, %arg1: memref<1xi32, #tpu.memory_space<smem>>) -> (i32, i32, i32) {
    %c0_i32 = arith.constant 0 : i32
    %c0_i32_0 = arith.constant 0 : i32
    %c0_i32_1 = arith.constant 0 : i32
    return %arg0, %c0_i32, %c0_i32_0 : i32, i32, i32
  }
}

module attributes {stable_mosaic.version = 11 : i64} {
  func.func @_aoa_attn_kernel(%arg0: i32, %arg1: memref<8x8x128xf32, #tpu.memory_space<vmem>>, %arg2: memref<8x4x128xf32, #tpu.memory_space<vmem>>, %arg3: memref<8x128xf32, #tpu.memory_space<vmem>>) attributes {dimension_semantics = [#tpu.dimension_semantics<parallel>], iteration_bounds = array<i64: 1>, scalar_prefetch = 0 : i64, scratch_operands = 0 : i64, tpu.core_type = #tpu.core_type<tc>, window_params = [{transform_indices = @transform_0, window_bounds = array<i64: 8, 8, 128>}, {transform_indices = @transform_1, window_bounds = array<i64: 8, 4, 128>}, {transform_indices = @transform_2, window_bounds = array<i64: 8, 128>}]} {
    %c0 = arith.constant 0 : index
    %c0_0 = arith.constant 0 : index
    %c0_1 = arith.constant 0 : index
    %0 = vector.load %arg1[%c0, %c0_0, %c0_1] : memref<8x8x128xf32, #tpu.memory_space<vmem>>, vector<8x8x128xf32>
    %c0_2 = arith.constant 0 : index
    %c0_3 = arith.constant 0 : index
    %c0_4 = arith.constant 0 : index
    %1 = vector.load %arg2[%c0_2, %c0_3, %c0_4] : memref<8x4x128xf32, #tpu.memory_space<vmem>>, vector<8x4x128xf32>
    "tpu.trace_start"() <{level = 10 : i32, message = "bsd,btd->bst"}> : () -> ()
    %cst = arith.constant dense<0.000000e+00> : vector<8x4x8xf32>
    %2 = tpu.matmul %1, %0, %cst {dimension_numbers = #tpu.dot_dimension_numbers<[2], [2], [1], [1], [0, 0, 0, 1, 1, 1], [0], [0]>} : vector<8x4x128xf32>, vector<8x8x128xf32>, vector<8x4x8xf32> -> vector<8x4x8xf32>
    "tpu.trace_stop"() : () -> ()
    %cst_5 = arith.constant dense<0xFF800000> : vector<8x4xf32>
    %3 = vector.multi_reduction <maximumf>, %2, %cst_5 [2] : vector<8x4x8xf32> to vector<8x4xf32>
    %4 = vector.shape_cast %3 : vector<8x4xf32> to vector<8x4x1xf32>
    %cst_6 = arith.constant dense<0xFF800000> : vector<8x1xf32>
    %5 = vector.multi_reduction <maximumf>, %4, %cst_6 [1] : vector<8x4x1xf32> to vector<8x1xf32>
    %6 = vector.shape_cast %5 : vector<8x1xf32> to vector<8x1x1xf32>
    %7 = vector.broadcast %6 : vector<8x1x1xf32> to vector<8x4x8xf32>
    %8 = arith.subf %2, %7 : vector<8x4x8xf32>
    %9 = math.exp %8 : vector<8x4x8xf32>
    %cst_7 = arith.constant dense<0.000000e+00> : vector<8x4xf32>
    %10 = vector.multi_reduction <add>, %9, %cst_7 [2] : vector<8x4x8xf32> to vector<8x4xf32>
    %11 = vector.shape_cast %10 : vector<8x4xf32> to vector<8x4x1xf32>
    %cst_8 = arith.constant dense<0.000000e+00> : vector<8x8xf32>
    %12 = vector.multi_reduction <add>, %9, %cst_8 [1] : vector<8x4x8xf32> to vector<8x8xf32>
    %13 = vector.shape_cast %12 : vector<8x8xf32> to vector<8x1x8xf32>
    %14 = tpu.reciprocal %13 {approx = true} : vector<8x1x8xf32> -> vector<8x1x8xf32>
    %15 = vector.broadcast %14 : vector<8x1x8xf32> to vector<8x4x8xf32>
    %16 = arith.mulf %9, %15 : vector<8x4x8xf32>
    %cst_9 = arith.constant dense<0.000000e+00> : vector<8x4xf32>
    %17 = vector.multi_reduction <add>, %16, %cst_9 [2] : vector<8x4x8xf32> to vector<8x4xf32>
    %18 = vector.shape_cast %17 : vector<8x4xf32> to vector<8x4x1xf32>
    %cst_10 = arith.constant 8.000000e+00 : f32
    %19 = vector.broadcast %cst_10 : f32 to vector<8x4x1xf32>
    %20 = arith.divf %18, %19 : vector<8x4x1xf32>
    %21 = tpu.reciprocal %11 {approx = true} : vector<8x4x1xf32> -> vector<8x4x1xf32>
    %22 = arith.mulf %20, %21 : vector<8x4x1xf32>
    %23 = vector.broadcast %22 : vector<8x4x1xf32> to vector<8x4x8xf32>
    %24 = arith.mulf %9, %23 : vector<8x4x8xf32>
    "tpu.trace_start"() <{level = 10 : i32, message = "bst,btd->bsd"}> : () -> ()
    %cst_11 = arith.constant dense<0.000000e+00> : vector<8x4x128xf32>
    %25 = tpu.matmul %24, %0, %cst_11 {dimension_numbers = #tpu.dot_dimension_numbers<[2], [1], [1], [2], [0, 0, 0, 1, 1, 2], [0], [0]>} : vector<8x4x8xf32>, vector<8x8x128xf32>, vector<8x4x128xf32> -> vector<8x4x128xf32>
    "tpu.trace_stop"() : () -> ()
    %cst_12 = arith.constant dense<0.000000e+00> : vector<8x128xf32>
    %26 = vector.multi_reduction <add>, %25, %cst_12 [1] : vector<8x4x128xf32> to vector<8x128xf32>
    %c0_13 = arith.constant 0 : index
    %c0_14 = arith.constant 0 : index
    %27 = vector.load %arg3[%c0_13, %c0_14] : memref<8x128xf32, #tpu.memory_space<vmem>>, vector<8x128xf32>
    tpu.vector_store %arg3[%c0_13, %c0_14], %26 {strides = array<i32>} : memref<8x128xf32, #tpu.memory_space<vmem>>, vector<8x128xf32>,
    return
  }
  func.func @transform_0(%arg0: i32) -> (i32, i32, i32) {
    %c0_i32 = arith.constant 0 : i32
    %c0_i32_0 = arith.constant 0 : i32
    %c0_i32_1 = arith.constant 0 : i32
    return %arg0, %c0_i32, %c0_i32_0 : i32, i32, i32
  }
  func.func @transform_1(%arg0: i32) -> (i32, i32, i32) {
    %c0_i32 = arith.constant 0 : i32
    %c0_i32_0 = arith.constant 0 : i32
    %c0_i32_1 = arith.constant 0 : i32
    return %arg0, %c0_i32, %c0_i32_0 : i32, i32, i32
  }
  func.func @transform_2(%arg0: i32) -> (i32, i32) {
    %c0_i32 = arith.constant 0 : i32
    %c0_i32_0 = arith.constant 0 : i32
    return %arg0, %c0_i32 : i32, i32
  }
}

</mosaic_0001>

<llo_original>
// kernel: aoa_forward.3
$region0: #{aoa_forward.3}
  #allocation0 [shape = 'u32[]', space=smem, size = 0x4, offset = 0x4, fixed_abs, tag = 'smem constant byte address 0x4 - core index']
  #allocation1 [shape = 'u32[72,128]{1,0:T(1,128)}', space=vmem, size = 0x9000, scoped, tag = 'internal scratch']
  %s0 = inlined_call_operand.vmem [shape: f32[8,8,128], index: 0, kind: input, shape index: {}]
  %s1 = inlined_call_operand.vmem [shape: f32[8,4,128], index: 1, kind: input, shape index: {}]
  %s2 = inlined_call_operand.vmem [shape: f32[8,128], index: 2, kind: output, shape index: {}]
  %s3 = sld [smem:[#allocation0]]
  $region18: #{aoa_forward.3} parent=0
    _
  %s5 = ssub.s32 1, %s3
  %s6 = scalar_select 0, %s5, %s3
  // Predicated region
  $region2: #{aoa_forward.3} parent=0 // pred_check
    _
  $region3: #{aoa_forward.3} parent=0 // pred_check_branch
    %8 = sbr.rel (0) target = $region5
  $region4: #{aoa_forward.3} parent=0 // pred_region
    _
  $region5: #{aoa_forward.3} parent=0 // pred_fallthru
    _
  // Predicated region
  $region6: #{aoa_forward.3} parent=0 // pred_check
    _
  $region7: #{aoa_forward.3} parent=0 // pred_check_branch
    %10 = sbr.rel (0) target = $region9
  $region8: #{aoa_forward.3} parent=0 // pred_region
    _
  $region9: #{aoa_forward.3} parent=0 // pred_fallthru
    _
  %v11 = vld [vmem:[%s0] sm:$0xff]
  %v12 = vld [vmem:[%s0 + $0x8] sm:$0xff]
  %v13 = vld [vmem:[%s0 + $0x10] sm:$0xff]
  %v14 = vld [vmem:[%s0 + $0x18] sm:$0xff]
  %v15 = vld [vmem:[%s0 + $0x20] sm:$0xff]
  %v16 = vld [vmem:[%s0 + $0x28] sm:$0xff]
  %v17 = vld [vmem:[%s0 + $0x30] sm:$0xff]
  %v18 = vld [vmem:[%s0 + $0x38] sm:$0xff]
  %v19 = vld [vmem:[%s1] sm:$0xf]
  %v20 = vld [vmem:[%s1 + $0x4] sm:$0xf]
  %v21 = vld [vmem:[%s1 + $0x8] sm:$0xf]
  %v22 = vld [vmem:[%s1 + $0xc] sm:$0xf]
  %v23 = vld [vmem:[%s1 + $0x10] sm:$0xf]
  %v24 = vld [vmem:[%s1 + $0x14] sm:$0xf]
  %v25 = vld [vmem:[%s1 + $0x18] sm:$0xf]
  %v26 = vld [vmem:[%s1 + $0x1c] sm:$0xf]
  %27 = vmatpush.xpose.msra.mxu0 0.0
  %28 = vmatpush.xpose.msra.mxu0 0.0
  %29 = vmatpush.xpose.msra.mxu0 0.0
  %30 = vmatpush.xpose.msra.mxu0 0.0
  %31 = vmatpush.xpose.msra.mxu0 0.0
  %32 = vmatpush.xpose.msra.mxu0 0.0
  %33 = vmatpush.xpose.msra.mxu0 0.0
  %34 = vmatpush.xpose.msra.mxu0 0.0
  %35 = vmatpush.xpose.msra.mxu0 0.0
  %36 = vmatpush.xpose.msra.mxu0 0.0
  %37 = vmatpush.xpose.msra.mxu0 0.0
  %38 = vmatpush.xpose.msra.mxu0 0.0
  %39 = vmatpush.xpose.msra.mxu0 0.0
  %40 = vmatpush.xpose.msra.mxu0 0.0
  %41 = vmatpush.xpose.msra.mxu0 0.0
  %42 = vmatpush.xpose.msra.mxu0 %v11
  %43 = vmatmul.f32.gmra.mxu0 %v19
  %v44 = vpop.f32.mrf.mxu0
  %v45 = vadd.f32 0.0, %v44
  %46 = vdwg.mxu0
  %47 = vmatpush.xpose.msra.mxu0 0.0
  %48 = vmatpush.xpose.msra.mxu0 0.0
  %49 = vmatpush.xpose.msra.mxu0 0.0
  %50 = vmatpush.xpose.msra.mxu0 0.0
  %51 = vmatpush.xpose.msra.mxu0 0.0
  %52 = vmatpush.xpose.msra.mxu0 0.0
  %53 = vmatpush.xpose.msra.mxu0 0.0
  %54 = vmatpush.xpose.msra.mxu0 0.0
  %55 = vmatpush.xpose.msra.mxu0 0.0
  %56 = vmatpush.xpose.msra.mxu0 0.0
  %57 = vmatpush.xpose.msra.mxu0 0.0
  %58 = vmatpush.xpose.msra.mxu0 0.0
  %59 = vmatpush.xpose.msra.mxu0 0.0
  %60 = vmatpush.xpose.msra.mxu0 0.0
  %61 = vmatpush.xpose.msra.mxu0 0.0
  %62 = vmatpush.xpose.msra.mxu0 %v12
  %63 = vmatmul.f32.gmra.mxu0 %v20
  %v64 = vpop.f32.mrf.mxu0
  %v65 = vadd.f32 0.0, %v64
  %66 = vdwg.mxu0
  %67 = vmatpush.xpose.msra.mxu0 0.0
  %68 = vmatpush.xpose.msra.mxu0 0.0
  %69 = vmatpush.xpose.msra.mxu0 0.0
  %70 = vmatpush.xpose.msra.mxu0 0.0
  %71 = vmatpush.xpose.msra.mxu0 0.0
  %72 = vmatpush.xpose.msra.mxu0 0.0
  %73 = vmatpush.xpose.msra.mxu0 0.0
  %74 = vmatpush.xpose.msra.mxu0 0.0
  %75 = vmatpush.xpose.msra.mxu0 0.0
  %76 = vmatpush.xpose.msra.mxu0 0.0
  %77 = vmatpush.xpose.msra.mxu0 0.0
  %78 = vmatpush.xpose.msra.mxu0 0.0
  %79 = vmatpush.xpose.msra.mxu0 0.0
  %80 = vmatpush.xpose.msra.mxu0 0.0
  %81 = vmatpush.xpose.msra.mxu0 0.0
  %82 = vmatpush.xpose.msra.mxu0 %v13
  %83 = vmatmul.f32.gmra.mxu0 %v21
  %v84 = vpop.f32.mrf.mxu0
  %v85 = vadd.f32 0.0, %v84
  %86 = vdwg.mxu0
  %87 = vmatpush.xpose.msra.mxu0 0.0
  %88 = vmatpush.xpose.msra.mxu0 0.0
  %89 = vmatpush.xpose.msra.mxu0 0.0
  %90 = vmatpush.xpose.msra.mxu0 0.0
  %91 = vmatpush.xpose.msra.mxu0 0.0
  %92 = vmatpush.xpose.msra.mxu0 0.0
  %93 = vmatpush.xpose.msra.mxu0 0.0
  %94 = vmatpush.xpose.msra.mxu0 0.0
  %95 = vmatpush.xpose.msra.mxu0 0.0
  %96 = vmatpush.xpose.msra.mxu0 0.0
  %97 = vmatpush.xpose.msra.mxu0 0.0
  %98 = vmatpush.xpose.msra.mxu0 0.0
  %99 = vmatpush.xpose.msra.mxu0 0.0
  %100 = vmatpush.xpose.msra.mxu0 0.0
  %101 = vmatpush.xpose.msra.mxu0 0.0
  %102 = vmatpush.xpose.msra.mxu0 %v14
  %103 = vmatmul.f32.gmra.mxu0 %v22
  %v104 = vpop.f32.mrf.mxu0
  %v105 = vadd.f32 0.0, %v104
  %106 = vdwg.mxu0
  %107 = vmatpush.xpose.msra.mxu0 0.0
  %108 = vmatpush.xpose.msra.mxu0 0.0
  %109 = vmatpush.xpose.msra.mxu0 0.0
  %110 = vmatpush.xpose.msra.mxu0 0.0
  %111 = vmatpush.xpose.msra.mxu0 0.0
  %112 = vmatpush.xpose.msra.mxu0 0.0
  %113 = vmatpush.xpose.msra.mxu0 0.0
  %114 = vmatpush.xpose.msra.mxu0 0.0
  %115 = vmatpush.xpose.msra.mxu0 0.0
  %116 = vmatpush.xpose.msra.mxu0 0.0
  %117 = vmatpush.xpose.msra.mxu0 0.0
  %118 = vmatpush.xpose.msra.mxu0 0.0
  %119 = vmatpush.xpose.msra.mxu0 0.0
  %120 = vmatpush.xpose.msra.mxu0 0.0
  %121 = vmatpush.xpose.msra.mxu0 0.0
  %122 = vmatpush.xpose.msra.mxu0 %v15
  %123 = vmatmul.f32.gmra.mxu0 %v23
  %v124 = vpop.f32.mrf.mxu0
  %v125 = vadd.f32 0.0, %v124
  %126 = vdwg.mxu0
  %127 = vmatpush.xpose.msra.mxu0 0.0
  %128 = vmatpush.xpose.msra.mxu0 0.0
  %129 = vmatpush.xpose.msra.mxu0 0.0
  %130 = vmatpush.xpose.msra.mxu0 0.0
  %131 = vmatpush.xpose.msra.mxu0 0.0
  %132 = vmatpush.xpose.msra.mxu0 0.0
  %133 = vmatpush.xpose.msra.mxu0 0.0
  %134 = vmatpush.xpose.msra.mxu0 0.0
  %135 = vmatpush.xpose.msra.mxu0 0.0
  %136 = vmatpush.xpose.msra.mxu0 0.0
  %137 = vmatpush.xpose.msra.mxu0 0.0
  %138 = vmatpush.xpose.msra.mxu0 0.0
  %139 = vmatpush.xpose.msra.mxu0 0.0
  %140 = vmatpush.xpose.msra.mxu0 0.0
  %141 = vmatpush.xpose.msra.mxu0 0.0
  %142 = vmatpush.xpose.msra.mxu0 %v16
  %143 = vmatmul.f32.gmra.mxu0 %v24
  %v144 = vpop.f32.mrf.mxu0
  %v145 = vadd.f32 0.0, %v144
  %146 = vdwg.mxu0
  %147 = vmatpush.xpose.msra.mxu0 0.0
  %148 = vmatpush.xpose.msra.mxu0 0.0
  %149 = vmatpush.xpose.msra.mxu0 0.0
  %150 = vmatpush.xpose.msra.mxu0 0.0
  %151 = vmatpush.xpose.msra.mxu0 0.0
  %152 = vmatpush.xpose.msra.mxu0 0.0
  %153 = vmatpush.xpose.msra.mxu0 0.0
  %154 = vmatpush.xpose.msra.mxu0 0.0
  %155 = vmatpush.xpose.msra.mxu0 0.0
  %156 = vmatpush.xpose.msra.mxu0 0.0
  %157 = vmatpush.xpose.msra.mxu0 0.0
  %158 = vmatpush.xpose.msra.mxu0 0.0
  %159 = vmatpush.xpose.msra.mxu0 0.0
  %160 = vmatpush.xpose.msra.mxu0 0.0
  %161 = vmatpush.xpose.msra.mxu0 0.0
  %162 = vmatpush.xpose.msra.mxu0 %v17
  %163 = vmatmul.f32.gmra.mxu0 %v25
  %v164 = vpop.f32.mrf.mxu0
  %v165 = vadd.f32 0.0, %v164
  %166 = vdwg.mxu0
  %167 = vmatpush.xpose.msra.mxu0 0.0
  %168 = vmatpush.xpose.msra.mxu0 0.0
  %169 = vmatpush.xpose.msra.mxu0 0.0
  %170 = vmatpush.xpose.msra.mxu0 0.0
  %171 = vmatpush.xpose.msra.mxu0 0.0
  %172 = vmatpush.xpose.msra.mxu0 0.0
  %173 = vmatpush.xpose.msra.mxu0 0.0
  %174 = vmatpush.xpose.msra.mxu0 0.0
  %175 = vmatpush.xpose.msra.mxu0 0.0
  %176 = vmatpush.xpose.msra.mxu0 0.0
  %177 = vmatpush.xpose.msra.mxu0 0.0
  %178 = vmatpush.xpose.msra.mxu0 0.0
  %179 = vmatpush.xpose.msra.mxu0 0.0
  %180 = vmatpush.xpose.msra.mxu0 0.0
  %181 = vmatpush.xpose.msra.mxu0 0.0
  %182 = vmatpush.xpose.msra.mxu0 %v18
  %183 = vmatmul.f32.gmra.mxu0 %v26
  %v184 = vpop.f32.mrf.mxu0
  %v185 = vadd.f32 0.0, %v184
  %186 = vdwg.mxu0
  %vm187 = vcmask 60416
  %v188 = vsel %vm187, %v45, -inf
  %189 = vmax.xlane.f32.xlu0 %v188
  %v190 = vpop.xlane.xlu0 %189
  %v191 = vsel %vm187, %v65, -inf
  %192 = vmax.xlane.f32.xlu0 %v191
  %v193 = vpop.xlane.xlu0 %192
  %v194 = vsel %vm187, %v85, -inf
  %195 = vmax.xlane.f32.xlu0 %v194
  %v196 = vpop.xlane.xlu0 %195
  %v197 = vsel %vm187, %v105, -inf
  %198 = vmax.xlane.f32.xlu0 %v197
  %v199 = vpop.xlane.xlu0 %198
  %v200 = vsel %vm187, %v125, -inf
  %201 = vmax.xlane.f32.xlu0 %v200
  %v202 = vpop.xlane.xlu0 %201
  %v203 = vsel %vm187, %v145, -inf
  %204 = vmax.xlane.f32.xlu0 %v203
  %v205 = vpop.xlane.xlu0 %204
  %v206 = vsel %vm187, %v165, -inf
  %207 = vmax.xlane.f32.xlu0 %v206
  %v208 = vpop.xlane.xlu0 %207
  %v209 = vsel %vm187, %v185, -inf
  %210 = vmax.xlane.f32.xlu0 %v209
  %v211 = vpop.xlane.xlu0 %210
  %vm212 = vcmask 1043456
  %v213 = vsel %vm212, %v190, -inf
  %v214 = vrot.slane %v213, 4
  %v215 = vmax.f32 %v213, %v214
  %v216 = vrot.slane %v215, 2
  %v217 = vmax.f32 %v215, %v216
  %v218 = vrot.slane %v217, 1
  %v219 = vmax.f32 %v217, %v218
  %v220 = vsel %vm212, %v193, -inf
  %v221 = vrot.slane %v220, 4
  %v222 = vmax.f32 %v220, %v221
  %v223 = vrot.slane %v222, 2
  %v224 = vmax.f32 %v222, %v223
  %v225 = vrot.slane %v224, 1
  %v226 = vmax.f32 %v224, %v225
  %v227 = vsel %vm212, %v196, -inf
  %v228 = vrot.slane %v227, 4
  %v229 = vmax.f32 %v227, %v228
  %v230 = vrot.slane %v229, 2
  %v231 = vmax.f32 %v229, %v230
  %v232 = vrot.slane %v231, 1
  %v233 = vmax.f32 %v231, %v232
  %v234 = vsel %vm212, %v199, -inf
  %v235 = vrot.slane %v234, 4
  %v236 = vmax.f32 %v234, %v235
  %v237 = vrot.slane %v236, 2
  %v238 = vmax.f32 %v236, %v237
  %v239 = vrot.slane %v238, 1
  %v240 = vmax.f32 %v238, %v239
  %v241 = vsel %vm212, %v202, -inf
  %v242 = vrot.slane %v241, 4
  %v243 = vmax.f32 %v241, %v242
  %v244 = vrot.slane %v243, 2
  %v245 = vmax.f32 %v243, %v244
  %v246 = vrot.slane %v245, 1
  %v247 = vmax.f32 %v245, %v246
  %v248 = vsel %vm212, %v205, -inf
  %v249 = vrot.slane %v248, 4
  %v250 = vmax.f32 %v248, %v249
  %v251 = vrot.slane %v250, 2
  %v252 = vmax.f32 %v250, %v251
  %v253 = vrot.slane %v252, 1
  %v254 = vmax.f32 %v252, %v253
  %v255 = vsel %vm212, %v208, -inf
  %v256 = vrot.slane %v255, 4
  %v257 = vmax.f32 %v255, %v256
  %v258 = vrot.slane %v257, 2
  %v259 = vmax.f32 %v257, %v258
  %v260 = vrot.slane %v259, 1
  %v261 = vmax.f32 %v259, %v260
  %v262 = vsel %vm212, %v211, -inf
  %v263 = vrot.slane %v262, 4
  %v264 = vmax.f32 %v262, %v263
  %v265 = vrot.slane %v264, 2
  %v266 = vmax.f32 %v264, %v265
  %v267 = vrot.slane %v266, 1
  %v268 = vmax.f32 %v266, %v267
  %v269 = vsub.f32 %v45, %v219
  %v270 = vsub.f32 %v65, %v226
  %v271 = vsub.f32 %v85, %v233
  %v272 = vsub.f32 %v105, %v240
  %v273 = vsub.f32 %v125, %v247
  %v274 = vsub.f32 %v145, %v254
  %v275 = vsub.f32 %v165, %v261
  %v276 = vsub.f32 %v185, %v268
  %v277 = vmul.f32 %v269, 1.442695
  %v278 = vpow.pop %v277
  %v279 = vmul.f32 %v270, 1.442695
  %v280 = vpow.pop %v279
  %v281 = vmul.f32 %v271, 1.442695
  %v282 = vpow.pop %v281
  %v283 = vmul.f32 %v272, 1.442695
  %v284 = vpow.pop %v283
  %v285 = vmul.f32 %v273, 1.442695
  %v286 = vpow.pop %v285
  %v287 = vmul.f32 %v274, 1.442695
  %v288 = vpow.pop %v287
  %v289 = vmul.f32 %v275, 1.442695
  %v290 = vpow.pop %v289
  %v291 = vmul.f32 %v276, 1.442695
  %v292 = vpow.pop %v291
  %v293 = vsel %vm187, %v278, 0.0
  %294 = vadd.xlane.f32.xlu0 %v293
  %v295 = vpop.xlane.xlu0 %294
  %v296 = vsel %vm187, %v280, 0.0
  %297 = vadd.xlane.f32.xlu0 %v296
  %v298 = vpop.xlane.xlu0 %297
  %v299 = vsel %vm187, %v282, 0.0
  %300 = vadd.xlane.f32.xlu0 %v299
  %v301 = vpop.xlane.xlu0 %300
  %v302 = vsel %vm187, %v284, 0.0
  %303 = vadd.xlane.f32.xlu0 %v302
  %v304 = vpop.xlane.xlu0 %303
  %v305 = vsel %vm187, %v286, 0.0
  %306 = vadd.xlane.f32.xlu0 %v305
  %v307 = vpop.xlane.xlu0 %306
  %v308 = vsel %vm187, %v288, 0.0
  %309 = vadd.xlane.f32.xlu0 %v308
  %v310 = vpop.xlane.xlu0 %309
  %v311 = vsel %vm187, %v290, 0.0
  %312 = vadd.xlane.f32.xlu0 %v311
  %v313 = vpop.xlane.xlu0 %312
  %v314 = vsel %vm187, %v292, 0.0
  %315 = vadd.xlane.f32.xlu0 %v314
  %v316 = vpop.xlane.xlu0 %315
  %v317 = vrot.slane %v293, 4
  %v318 = vadd.f32 %v293, %v317
  %v319 = vrot.slane %v318, 2
  %v320 = vadd.f32 %v318, %v319
  %v321 = vrot.slane %v320, 1
  %v322 = vadd.f32 %v320, %v321
  %v323 = vrot.slane %v296, 4
  %v324 = vadd.f32 %v296, %v323
  %v325 = vrot.slane %v324, 2
  %v326 = vadd.f32 %v324, %v325
  %v327 = vrot.slane %v326, 1
  %v328 = vadd.f32 %v326, %v327
  %v329 = vrot.slane %v299, 4
  %v330 = vadd.f32 %v299, %v329
  %v331 = vrot.slane %v330, 2
  %v332 = vadd.f32 %v330, %v331
  %v333 = vrot.slane %v332, 1
  %v334 = vadd.f32 %v332, %v333
  %v335 = vrot.slane %v302, 4
  %v336 = vadd.f32 %v302, %v335
  %v337 = vrot.slane %v336, 2
  %v338 = vadd.f32 %v336, %v337
  %v339 = vrot.slane %v338, 1
  %v340 = vadd.f32 %v338, %v339
  %v341 = vrot.slane %v305, 4
  %v342 = vadd.f32 %v305, %v341
  %v343 = vrot.slane %v342, 2
  %v344 = vadd.f32 %v342, %v343
  %v345 = vrot.slane %v344, 1
  %v346 = vadd.f32 %v344, %v345
  %v347 = vrot.slane %v308, 4
  %v348 = vadd.f32 %v308, %v347
  %v349 = vrot.slane %v348, 2
  %v350 = vadd.f32 %v348, %v349
  %v351 = vrot.slane %v350, 1
  %v352 = vadd.f32 %v350, %v351
  %v353 = vrot.slane %v311, 4
  %v354 = vadd.f32 %v311, %v353
  %v355 = vrot.slane %v354, 2
  %v356 = vadd.f32 %v354, %v355
  %v357 = vrot.slane %v356, 1
  %v358 = vadd.f32 %v356, %v357
  %v359 = vrot.slane %v314, 4
  %v360 = vadd.f32 %v314, %v359
  %v361 = vrot.slane %v360, 2
  %v362 = vadd.f32 %v360, %v361
  %v363 = vrot.slane %v362, 1
  %v364 = vadd.f32 %v362, %v363
  %v365 = vrcp.pop %v322
  %v366 = vrcp.pop %v328
  %v367 = vrcp.pop %v334
  %v368 = vrcp.pop %v340
  %v369 = vrcp.pop %v346
  %v370 = vrcp.pop %v352
  %v371 = vrcp.pop %v358
  %v372 = vrcp.pop %v364
  %v373 = vmul.f32 %v278, %v365
  %v374 = vmul.f32 %v280, %v366
  %v375 = vmul.f32 %v282, %v367
  %v376 = vmul.f32 %v284, %v368
  %v377 = vmul.f32 %v286, %v369
  %v378 = vmul.f32 %v288, %v370
  %v379 = vmul.f32 %v290, %v371
  %v380 = vmul.f32 %v292, %v372
  %v381 = vsel %vm187, %v373, 0.0
  %382 = vadd.xlane.f32.xlu0 %v381
  %v383 = vpop.xlane.xlu0 %382
  %v384 = vsel %vm187, %v374, 0.0
  %385 = vadd.xlane.f32.xlu0 %v384
  %v386 = vpop.xlane.xlu0 %385
  %v387 = vsel %vm187, %v375, 0.0
  %388 = vadd.xlane.f32.xlu0 %v387
  %v389 = vpop.xlane.xlu0 %388
  %v390 = vsel %vm187, %v376, 0.0
  %391 = vadd.xlane.f32.xlu0 %v390
  %v392 = vpop.xlane.xlu0 %391
  %v393 = vsel %vm187, %v377, 0.0
  %394 = vadd.xlane.f32.xlu0 %v393
  %v395 = vpop.xlane.xlu0 %394
  %v396 = vsel %vm187, %v378, 0.0
  %397 = vadd.xlane.f32.xlu0 %v396
  %v398 = vpop.xlane.xlu0 %397
  %v399 = vsel %vm187, %v379, 0.0
  %400 = vadd.xlane.f32.xlu0 %v399
  %v401 = vpop.xlane.xlu0 %400
  %v402 = vsel %vm187, %v380, 0.0
  %403 = vadd.xlane.f32.xlu0 %v402
  %v404 = vpop.xlane.xlu0 %403
  %v405 = vrcp.pop 8.0
  %v406 = vmul.f32 8.0, %v405
  %v407 = vsub.f32 1.0, %v406
  %v408 = vmul.f32 %v405, %v407
  %v409 = vadd.f32 %v405, %v408
  %vm410 = vweird.f32 %v405
  %v411 = vsel %vm410, %v405, %v409
  %v412 = vmul.f32 %v383, %v411
  %v413 = vmul.f32 %v386, %v411
  %v414 = vmul.f32 %v389, %v411
  %v415 = vmul.f32 %v392, %v411
  %v416 = vmul.f32 %v395, %v411
  %v417 = vmul.f32 %v398, %v411
  %v418 = vmul.f32 %v401, %v411
  %v419 = vmul.f32 %v404, %v411
  %v420 = vrcp.pop %v295
  %v421 = vrcp.pop %v298
  %v422 = vrcp.pop %v301
  %v423 = vrcp.pop %v304
  %v424 = vrcp.pop %v307
  %v425 = vrcp.pop %v310
  %v426 = vrcp.pop %v313
  %v427 = vrcp.pop %v316
  %v428 = vmul.f32 %v412, %v420
  %v429 = vmul.f32 %v413, %v421
  %v430 = vmul.f32 %v414, %v422
  %v431 = vmul.f32 %v415, %v423
  %v432 = vmul.f32 %v416, %v424
  %v433 = vmul.f32 %v417, %v425
  %v434 = vmul.f32 %v418, %v426
  %v435 = vmul.f32 %v419, %v427
  %v436 = vmul.f32 %v278, %v428
  %v437 = vmul.f32 %v280, %v429
  %v438 = vmul.f32 %v282, %v430
  %v439 = vmul.f32 %v284, %v431
  %v440 = vmul.f32 %v286, %v432
  %v441 = vmul.f32 %v288, %v433
  %v442 = vmul.f32 %v290, %v434
  %v443 = vmul.f32 %v292, %v435
  %vm444 = vcmask 64512
  %v446 = vsel %vm444, %v436, 0
  %448 = vmatpush.msra.mxu0 0.0
  %449 = vmatpush.msra.mxu0 0.0
  %450 = vmatpush.msra.mxu0 0.0
  %451 = vmatpush.msra.mxu0 0.0
  %452 = vmatpush.msra.mxu0 0.0
  %453 = vmatpush.msra.mxu0 0.0
  %454 = vmatpush.msra.mxu0 0.0
  %455 = vmatpush.msra.mxu0 0.0
  %456 = vmatpush.msra.mxu0 0.0
  %457 = vmatpush.msra.mxu0 0.0
  %458 = vmatpush.msra.mxu0 0.0
  %459 = vmatpush.msra.mxu0 0.0
  %460 = vmatpush.msra.mxu0 0.0
  %461 = vmatpush.msra.mxu0 0.0
  %462 = vmatpush.msra.mxu0 0.0
  %463 = vmatpush.msra.mxu0 %v11
  %464 = vmatmul.f32.gmra.mxu0 %v446
  %v465 = vpop.f32.mrf.mxu0
  %v466 = vadd.f32 0.0, %v465
  %467 = vdwg.mxu0
  %v469 = vsel %vm444, %v437, 0
  %471 = vmatpush.msra.mxu0 0.0
  %472 = vmatpush.msra.mxu0 0.0
  %473 = vmatpush.msra.mxu0 0.0
  %474 = vmatpush.msra.mxu0 0.0
  %475 = vmatpush.msra.mxu0 0.0
  %476 = vmatpush.msra.mxu0 0.0
  %477 = vmatpush.msra.mxu0 0.0
  %478 = vmatpush.msra.mxu0 0.0
  %479 = vmatpush.msra.mxu0 0.0
  %480 = vmatpush.msra.mxu0 0.0
  %481 = vmatpush.msra.mxu0 0.0
  %482 = vmatpush.msra.mxu0 0.0
  %483 = vmatpush.msra.mxu0 0.0
  %484 = vmatpush.msra.mxu0 0.0
  %485 = vmatpush.msra.mxu0 0.0
  %486 = vmatpush.msra.mxu0 %v12
  %487 = vmatmul.f32.gmra.mxu0 %v469
  %v488 = vpop.f32.mrf.mxu0
  %v489 = vadd.f32 0.0, %v488
  %490 = vdwg.mxu0
  %v492 = vsel %vm444, %v438, 0
  %494 = vmatpush.msra.mxu0 0.0
  %495 = vmatpush.msra.mxu0 0.0
  %496 = vmatpush.msra.mxu0 0.0
  %497 = vmatpush.msra.mxu0 0.0
  %498 = vmatpush.msra.mxu0 0.0
  %499 = vmatpush.msra.mxu0 0.0
  %500 = vmatpush.msra.mxu0 0.0
  %501 = vmatpush.msra.mxu0 0.0
  %502 = vmatpush.msra.mxu0 0.0
  %503 = vmatpush.msra.mxu0 0.0
  %504 = vmatpush.msra.mxu0 0.0
  %505 = vmatpush.msra.mxu0 0.0
  %506 = vmatpush.msra.mxu0 0.0
  %507 = vmatpush.msra.mxu0 0.0
  %508 = vmatpush.msra.mxu0 0.0
  %509 = vmatpush.msra.mxu0 %v13
  %510 = vmatmul.f32.gmra.mxu0 %v492
  %v511 = vpop.f32.mrf.mxu0
  %v512 = vadd.f32 0.0, %v511
  %513 = vdwg.mxu0
  %v515 = vsel %vm444, %v439, 0
  %517 = vmatpush.msra.mxu0 0.0
  %518 = vmatpush.msra.mxu0 0.0
  %519 = vmatpush.msra.mxu0 0.0
  %520 = vmatpush.msra.mxu0 0.0
  %521 = vmatpush.msra.mxu0 0.0
  %522 = vmatpush.msra.mxu0 0.0
  %523 = vmatpush.msra.mxu0 0.0
  %524 = vmatpush.msra.mxu0 0.0
  %525 = vmatpush.msra.mxu0 0.0
  %526 = vmatpush.msra.mxu0 0.0
  %527 = vmatpush.msra.mxu0 0.0
  %528 = vmatpush.msra.mxu0 0.0
  %529 = vmatpush.msra.mxu0 0.0
  %530 = vmatpush.msra.mxu0 0.0
  %531 = vmatpush.msra.mxu0 0.0
  %532 = vmatpush.msra.mxu0 %v14
  %533 = vmatmul.f32.gmra.mxu0 %v515
  %v534 = vpop.f32.mrf.mxu0
  %v535 = vadd.f32 0.0, %v534
  %536 = vdwg.mxu0
  %v538 = vsel %vm444, %v440, 0
  %540 = vmatpush.msra.mxu0 0.0
  %541 = vmatpush.msra.mxu0 0.0
  %542 = vmatpush.msra.mxu0 0.0
  %543 = vmatpush.msra.mxu0 0.0
  %544 = vmatpush.msra.mxu0 0.0
  %545 = vmatpush.msra.mxu0 0.0
  %546 = vmatpush.msra.mxu0 0.0
  %547 = vmatpush.msra.mxu0 0.0
  %548 = vmatpush.msra.mxu0 0.0
  %549 = vmatpush.msra.mxu0 0.0
  %550 = vmatpush.msra.mxu0 0.0
  %551 = vmatpush.msra.mxu0 0.0
  %552 = vmatpush.msra.mxu0 0.0
  %553 = vmatpush.msra.mxu0 0.0
  %554 = vmatpush.msra.mxu0 0.0
  %555 = vmatpush.msra.mxu0 %v15
  %556 = vmatmul.f32.gmra.mxu0 %v538
  %v557 = vpop.f32.mrf.mxu0
  %v558 = vadd.f32 0.0, %v557
  %559 = vdwg.mxu0
  %v561 = vsel %vm444, %v441, 0
  %563 = vmatpush.msra.mxu0 0.0
  %564 = vmatpush.msra.mxu0 0.0
  %565 = vmatpush.msra.mxu0 0.0
  %566 = vmatpush.msra.mxu0 0.0
  %567 = vmatpush.msra.mxu0 0.0
  %568 = vmatpush.msra.mxu0 0.0
  %569 = vmatpush.msra.mxu0 0.0
  %570 = vmatpush.msra.mxu0 0.0
  %571 = vmatpush.msra.mxu0 0.0
  %572 = vmatpush.msra.mxu0 0.0
  %573 = vmatpush.msra.mxu0 0.0
  %574 = vmatpush.msra.mxu0 0.0
  %575 = vmatpush.msra.mxu0 0.0
  %576 = vmatpush.msra.mxu0 0.0
  %577 = vmatpush.msra.mxu0 0.0
  %578 = vmatpush.msra.mxu0 %v16
  %579 = vmatmul.f32.gmra.mxu0 %v561
  %v580 = vpop.f32.mrf.mxu0
  %v581 = vadd.f32 0.0, %v580
  %582 = vdwg.mxu0
  %v584 = vsel %vm444, %v442, 0
  %586 = vmatpush.msra.mxu0 0.0
  %587 = vmatpush.msra.mxu0 0.0
  %588 = vmatpush.msra.mxu0 0.0
  %589 = vmatpush.msra.mxu0 0.0
  %590 = vmatpush.msra.mxu0 0.0
  %591 = vmatpush.msra.mxu0 0.0
  %592 = vmatpush.msra.mxu0 0.0
  %593 = vmatpush.msra.mxu0 0.0
  %594 = vmatpush.msra.mxu0 0.0
  %595 = vmatpush.msra.mxu0 0.0
  %596 = vmatpush.msra.mxu0 0.0
  %597 = vmatpush.msra.mxu0 0.0
  %598 = vmatpush.msra.mxu0 0.0
  %599 = vmatpush.msra.mxu0 0.0
  %600 = vmatpush.msra.mxu0 0.0
  %601 = vmatpush.msra.mxu0 %v17
  %602 = vmatmul.f32.gmra.mxu0 %v584
  %v603 = vpop.f32.mrf.mxu0
  %v604 = vadd.f32 0.0, %v603
  %605 = vdwg.mxu0
  %v607 = vsel %vm444, %v443, 0
  %609 = vmatpush.msra.mxu0 0.0
  %610 = vmatpush.msra.mxu0 0.0
  %611 = vmatpush.msra.mxu0 0.0
  %612 = vmatpush.msra.mxu0 0.0
  %613 = vmatpush.msra.mxu0 0.0
  %614 = vmatpush.msra.mxu0 0.0
  %615 = vmatpush.msra.mxu0 0.0
  %616 = vmatpush.msra.mxu0 0.0
  %617 = vmatpush.msra.mxu0 0.0
  %618 = vmatpush.msra.mxu0 0.0
  %619 = vmatpush.msra.mxu0 0.0
  %620 = vmatpush.msra.mxu0 0.0
  %621 = vmatpush.msra.mxu0 0.0
  %622 = vmatpush.msra.mxu0 0.0
  %623 = vmatpush.msra.mxu0 0.0
  %624 = vmatpush.msra.mxu0 %v18
  %625 = vmatmul.f32.gmra.mxu0 %v607
  %v626 = vpop.f32.mrf.mxu0
  %v627 = vadd.f32 0.0, %v626
  %628 = vdwg.mxu0
  %v629 = vsel %vm212, %v466, 0.0
  %v630 = vrot.slane %v629, 4
  %v631 = vadd.f32 %v629, %v630
  %v632 = vrot.slane %v631, 2
  %v633 = vadd.f32 %v631, %v632
  %v634 = vrot.slane %v633, 1
  %v635 = vadd.f32 %v633, %v634
  %v636 = vsel %vm212, %v489, 0.0
  %v637 = vrot.slane %v636, 4
  %v638 = vadd.f32 %v636, %v637
  %v639 = vrot.slane %v638, 2
  %v640 = vadd.f32 %v638, %v639
  %v641 = vrot.slane %v640, 1
  %v642 = vadd.f32 %v640, %v641
  %v643 = vsel %vm212, %v512, 0.0
  %v644 = vrot.slane %v643, 4
  %v645 = vadd.f32 %v643, %v644
  %v646 = vrot.slane %v645, 2
  %v647 = vadd.f32 %v645, %v646
  %v648 = vrot.slane %v647, 1
  %v649 = vadd.f32 %v647, %v648
  %v650 = vsel %vm212, %v535, 0.0
  %v651 = vrot.slane %v650, 4
  %v652 = vadd.f32 %v650, %v651
  %v653 = vrot.slane %v652, 2
  %v654 = vadd.f32 %v652, %v653
  %v655 = vrot.slane %v654, 1
  %v656 = vadd.f32 %v654, %v655
  %v657 = vsel %vm212, %v558, 0.0
  %v658 = vrot.slane %v657, 4
  %v659 = vadd.f32 %v657, %v658
  %v660 = vrot.slane %v659, 2
  %v661 = vadd.f32 %v659, %v660
  %v662 = vrot.slane %v661, 1
  %v663 = vadd.f32 %v661, %v662
  %v664 = vsel %vm212, %v581, 0.0
  %v665 = vrot.slane %v664, 4
  %v666 = vadd.f32 %v664, %v665
  %v667 = vrot.slane %v666, 2
  %v668 = vadd.f32 %v666, %v667
  %v669 = vrot.slane %v668, 1
  %v670 = vadd.f32 %v668, %v669
  %v671 = vsel %vm212, %v604, 0.0
  %v672 = vrot.slane %v671, 4
  %v673 = vadd.f32 %v671, %v672
  %v674 = vrot.slane %v673, 2
  %v675 = vadd.f32 %v673, %v674
  %v676 = vrot.slane %v675, 1
  %v677 = vadd.f32 %v675, %v676
  %v678 = vsel %vm212, %v627, 0.0
  %v679 = vrot.slane %v678, 4
  %v680 = vadd.f32 %v678, %v679
  %v681 = vrot.slane %v680, 2
  %v682 = vadd.f32 %v680, %v681
  %v683 = vrot.slane %v682, 1
  %v684 = vadd.f32 %v682, %v683
  %vm693 = vcmask 1041409
  %v694 = vsel %vm693, %v642, %v635
  %vm695 = vcmask 1042434
  %v696 = vsel %vm695, %v649, %v694
  %vm697 = vcmask 1043459
  %v698 = vsel %vm697, %v656, %v696
  %vm699 = vcmask 1044484
  %v700 = vsel %vm699, %v663, %v698
  %vm701 = vcmask 1045509
  %v702 = vsel %vm701, %v670, %v700
  %vm703 = vcmask 1046534
  %v704 = vsel %vm703, %v677, %v702
  %vm705 = vcmask 1047559
  %v706 = vsel %vm705, %v684, %v704
  %708 = vst [vmem:[%s2] sm:$0xff] %v706
  // Predicated region
  $region10: #{aoa_forward.3} parent=0 // pred_check
    _
  $region11: #{aoa_forward.3} parent=0 // pred_check_branch
    %710 = sbr.rel (0) target = $region13
  $region12: #{aoa_forward.3} parent=0 // pred_region
    _
  $region13: #{aoa_forward.3} parent=0 // pred_fallthru
    _
  // Predicated region
  $region14: #{aoa_forward.3} parent=0 // pred_check
    _
  $region15: #{aoa_forward.3} parent=0 // pred_check_branch
    %712 = sbr.rel (0) target = $region17
  $region16: #{aoa_forward.3} parent=0 // pred_region
    _
  $region17: #{aoa_forward.3} parent=0 // pred_fallthru
    _

// kernel: aoa_forward.2
$region0: #{aoa_forward.2}
  #allocation0 [shape = 'u32[]', space=smem, size = 0x4, offset = 0x4, fixed_abs, tag = 'smem constant byte address 0x4 - core index']
  #allocation1 [shape = 'u32[72,128]{1,0:T(1,128)}', space=vmem, size = 0x9000, scoped, tag = 'internal scratch']
  #allocation2 [shape = 'f32[8,256]{1,0:T(8,128)}', space=vmem, size = 0x2000, scoped, tag = 'scratch operand']
  #allocation3 [shape = 'f32[8,128]{1,0:T(8,128)}', space=vmem, size = 0x1000, scoped, tag = 'scratch operand']
  #allocation4 [shape = 's32[1]{0}', space=sflag, size = 0x4, scoped, tag = 'scoped memory for aoa_forward.2']
  #allocation5 [shape = 's32[1]{0:T(128)S(6)}', space=smem, size = 0x200, scoped, tag = 'prefetched SMEM operand 0']
  %s0 = inlined_call_operand.<no memory space> [shape: s32[1], index: 0, kind: input, shape index: {}]
  %s1 = inlined_call_operand.vmem [shape: s32[8,1], index: 1, kind: input, shape index: {}]
  %s2 = inlined_call_operand.vmem [shape: f32[8,8,512], index: 2, kind: input, shape index: {}]
  %s3 = inlined_call_operand.hbm [shape: f32[256,512], index: 3, kind: input, shape index: {}]
  %s4 = inlined_call_operand.vmem [shape: f32[8,8,128], index: 4, kind: output, shape index: {}]
  %s5 = sld [smem:[#allocation0]]
  $region38: #{aoa_forward.2} parent=0
    _
  %s7 = ssub.s32 1, %s5
  %s8 = scalar_select 0, %s7, %s5
  %9 = sst [smem:[#allocation5]] %s0
  $region1: #{aoa_forward.2} parent=0
    #allocation6 [shape = 'u8[524288]{0}', space=vmem, size = 0x80000, scoped, tag = 'input window, operand 3, single buffered']
    #allocation7 [shape = 's32[1]{0}', space=sflag, size = 0x4, scoped, tag = 'scoped memory for aoa_forward.2']
    %10 = vsyncpa [#allocation7], 0
    // Predicated region
    $region2: #{aoa_forward.2} parent=1 // pred_check
      _
    $region3: #{aoa_forward.2} parent=1 // pred_check_branch
      %12 = sbr.rel (0) target = $region5
    $region4: #{aoa_forward.2} parent=1 // pred_region
      _
    $region5: #{aoa_forward.2} parent=1 // pred_fallthru
      _
    // Predicated region
    $region6: #{aoa_forward.2} parent=1 // pred_check
      _
    $region7: #{aoa_forward.2} parent=1 // pred_check_branch
      %14 = sbr.rel (0) target = $region9
    $region8: #{aoa_forward.2} parent=1 // pred_region
      _
    $region9: #{aoa_forward.2} parent=1 // pred_fallthru
      _
    // Predicated region
    $region10: #{aoa_forward.2} parent=1 // pred_check
      _
    $region11: #{aoa_forward.2} parent=1 // pred_check_branch
      %16 = sbr.rel (0) target = $region13
    $region12: #{aoa_forward.2} parent=1 // pred_region
      %18 = vsyncadd [#allocation7], 0
      %s19 = sshll.u32 %s3, 4
      %s20 = int_to_ptr.hbm [resolvable:$true] %s19
      %s21 = sshll.u32 [#allocation6], 4
      %s22 = int_to_ptr.vmem [resolvable:$true] %s21
      %27 = dma.hbm_to_vmem [thread:$0]  %s20, 16384, %s22, [#allocation7], 512, 512, 32
    $region13: #{aoa_forward.2} parent=1 // pred_fallthru
      _
    // Predicated region
    $region14: #{aoa_forward.2} parent=1 // pred_check
      _
    $region15: #{aoa_forward.2} parent=1 // pred_check_branch
      %29 = sbr.rel (0) target = $region17
    $region16: #{aoa_forward.2} parent=1 // pred_region
      %31 = dma.done [#allocation7], 16384
    $region17: #{aoa_forward.2} parent=1 // pred_fallthru
      _
    %p32 = scmp.eq.s32.totalorder 0, 0
    // Predicated region
    $region18: #{aoa_forward.2} parent=1 // pred_check
      %p33 = pneg %p32
    $region19: #{aoa_forward.2} parent=1 // pred_check_branch
      %35 = sbr.rel (%p33) target = $region21
    $region20: #{aoa_forward.2} parent=1 // pred_region
      %36 = vst [vmem:[#allocation2] sm:$0xff] 0.0
      %37 = vst [vmem:[#allocation2 + $0x8] sm:$0xff] 0.0
      %38 = vst [vmem:[#allocation3] sm:$0xff] 0.0
    $region21: #{aoa_forward.2} parent=1 // pred_fallthru
      _
    %s39 = smul.u32 0, 8
    %s40 = sld [smem:[#allocation5]]
    %p41 = scmp.lt.s32.totalorder %s39, %s40
    // Predicated region
    $region22: #{aoa_forward.2} parent=1 // pred_check
      %p42 = pneg %p41
    $region23: #{aoa_forward.2} parent=1 // pred_check_branch
      %44 = sbr.rel (%p42) target = $region25
    $region24: #{aoa_forward.2} parent=1 // pred_region
      %v45 = vld [vmem:[%s1] sm:$0xff]
      %v46 = vld [vmem:[#allocation6] sm:$0xff]
      %v47 = vld [vmem:[#allocation6 + $0x8] sm:$0xff]
      %v48 = vld [vmem:[#allocation6 + $0x10] sm:$0xff]
      %v49 = vld [vmem:[#allocation6 + $0x18] sm:$0xff]
      %v50 = vld [vmem:[#allocation6 + $0x20] sm:$0xff]
      %v51 = vld [vmem:[#allocation6 + $0x28] sm:$0xff]
      %v52 = vld [vmem:[#allocation6 + $0x30] sm:$0xff]
      %v53 = vld [vmem:[#allocation6 + $0x38] sm:$0xff]
      %v54 = vld [vmem:[#allocation6 + $0x40] sm:$0xff]
      %v55 = vld [vmem:[#allocation6 + $0x48] sm:$0xff]
      %v56 = vld [vmem:[#allocation6 + $0x50] sm:$0xff]
      %v57 = vld [vmem:[#allocation6 + $0x58] sm:$0xff]
      %v58 = vld [vmem:[#allocation6 + $0x60] sm:$0xff]
      %v59 = vld [vmem:[#allocation6 + $0x68] sm:$0xff]
      %v60 = vld [vmem:[#allocation6 + $0x70] sm:$0xff]
      %v61 = vld [vmem:[#allocation6 + $0x78] sm:$0xff]
      %v62 = vld [vmem:[#allocation6 + $0x80] sm:$0xff]
      %v63 = vld [vmem:[#allocation6 + $0x88] sm:$0xff]
      %v64 = vld [vmem:[#allocation6 + $0x90] sm:$0xff]
      %v65 = vld [vmem:[#allocation6 + $0x98] sm:$0xff]
      %v66 = vld [vmem:[#allocation6 + $0xa0] sm:$0xff]
      %v67 = vld [vmem:[#allocation6 + $0xa8] sm:$0xff]
      %v68 = vld [vmem:[#allocation6 + $0xb0] sm:$0xff]
      %v69 = vld [vmem:[#allocation6 + $0xb8] sm:$0xff]
      %v70 = vld [vmem:[#allocation6 + $0xc0] sm:$0xff]
      %v71 = vld [vmem:[#allocation6 + $0xc8] sm:$0xff]
      %v72 = vld [vmem:[#allocation6 + $0xd0] sm:$0xff]
      %v73 = vld [vmem:[#allocation6 + $0xd8] sm:$0xff]
      %v74 = vld [vmem:[#allocation6 + $0xe0] sm:$0xff]
      %v75 = vld [vmem:[#allocation6 + $0xe8] sm:$0xff]
      %v76 = vld [vmem:[#allocation6 + $0xf0] sm:$0xff]
      %v77 = vld [vmem:[#allocation6 + $0xf8] sm:$0xff]
      %v78 = vld [vmem:[#allocation6 + $0x100] sm:$0xff]
      %v79 = vld [vmem:[#allocation6 + $0x108] sm:$0xff]
      %v80 = vld [vmem:[#allocation6 + $0x110] sm:$0xff]
      %v81 = vld [vmem:[#allocation6 + $0x118] sm:$0xff]
      %v82 = vld [vmem:[#allocation6 + $0x120] sm:$0xff]
      %v83 = vld [vmem:[#allocation6 + $0x128] sm:$0xff]
      %v84 = vld [vmem:[#allocation6 + $0x130] sm:$0xff]
      %v85 = vld [vmem:[#allocation6 + $0x138] sm:$0xff]
      %v86 = vld [vmem:[#allocation6 + $0x140] sm:$0xff]
      %v87 = vld [vmem:[#allocation6 + $0x148] sm:$0xff]
      %v88 = vld [vmem:[#allocation6 + $0x150] sm:$0xff]
      %v89 = vld [vmem:[#allocation6 + $0x158] sm:$0xff]
      %v90 = vld [vmem:[#allocation6 + $0x160] sm:$0xff]
      %v91 = vld [vmem:[#allocation6 + $0x168] sm:$0xff]
      %v92 = vld [vmem:[#allocation6 + $0x170] sm:$0xff]
      %v93 = vld [vmem:[#allocation6 + $0x178] sm:$0xff]
      %v94 = vld [vmem:[#allocation6 + $0x180] sm:$0xff]
      %v95 = vld [vmem:[#allocation6 + $0x188] sm:$0xff]
      %v96 = vld [vmem:[#allocation6 + $0x190] sm:$0xff]
      %v97 = vld [vmem:[#allocation6 + $0x198] sm:$0xff]
      %v98 = vld [vmem:[#allocation6 + $0x1a0] sm:$0xff]
      %v99 = vld [vmem:[#allocation6 + $0x1a8] sm:$0xff]
      %v100 = vld [vmem:[#allocation6 + $0x1b0] sm:$0xff]
      %v101 = vld [vmem:[#allocation6 + $0x1b8] sm:$0xff]
      %v102 = vld [vmem:[#allocation6 + $0x1c0] sm:$0xff]
      %v103 = vld [vmem:[#allocation6 + $0x1c8] sm:$0xff]
      %v104 = vld [vmem:[#allocation6 + $0x1d0] sm:$0xff]
      %v105 = vld [vmem:[#allocation6 + $0x1d8] sm:$0xff]
      %v106 = vld [vmem:[#allocation6 + $0x1e0] sm:$0xff]
      %v107 = vld [vmem:[#allocation6 + $0x1e8] sm:$0xff]
      %v108 = vld [vmem:[#allocation6 + $0x1f0] sm:$0xff]
      %v109 = vld [vmem:[#allocation6 + $0x1f8] sm:$0xff]
      %v110 = vld [vmem:[#allocation6 + $0x200] sm:$0xff]
      %v111 = vld [vmem:[#allocation6 + $0x208] sm:$0xff]
      %v112 = vld [vmem:[#allocation6 + $0x210] sm:$0xff]
      %v113 = vld [vmem:[#allocation6 + $0x218] sm:$0xff]
      %v114 = vld [vmem:[#allocation6 + $0x220] sm:$0xff]
      %v115 = vld [vmem:[#allocation6 + $0x228] sm:$0xff]
      %v116 = vld [vmem:[#allocation6 + $0x230] sm:$0xff]
      %v117 = vld [vmem:[#allocation6 + $0x238] sm:$0xff]
      %v118 = vld [vmem:[#allocation6 + $0x240] sm:$0xff]
      %v119 = vld [vmem:[#allocation6 + $0x248] sm:$0xff]
      %v120 = vld [vmem:[#allocation6 + $0x250] sm:$0xff]
      %v121 = vld [vmem:[#allocation6 + $0x258] sm:$0xff]
      %v122 = vld [vmem:[#allocation6 + $0x260] sm:$0xff]
      %v123 = vld [vmem:[#allocation6 + $0x268] sm:$0xff]
      %v124 = vld [vmem:[#allocation6 + $0x270] sm:$0xff]
      %v125 = vld [vmem:[#allocation6 + $0x278] sm:$0xff]
      %v126 = vld [vmem:[#allocation6 + $0x280] sm:$0xff]
      %v127 = vld [vmem:[#allocation6 + $0x288] sm:$0xff]
      %v128 = vld [vmem:[#allocation6 + $0x290] sm:$0xff]
      %v129 = vld [vmem:[#allocation6 + $0x298] sm:$0xff]
      %v130 = vld [vmem:[#allocation6 + $0x2a0] sm:$0xff]
      %v131 = vld [vmem:[#allocation6 + $0x2a8] sm:$0xff]
      %v132 = vld [vmem:[#allocation6 + $0x2b0] sm:$0xff]
      %v133 = vld [vmem:[#allocation6 + $0x2b8] sm:$0xff]
      %v134 = vld [vmem:[#allocation6 + $0x2c0] sm:$0xff]
      %v135 = vld [vmem:[#allocation6 + $0x2c8] sm:$0xff]
      %v136 = vld [vmem:[#allocation6 + $0x2d0] sm:$0xff]
      %v137 = vld [vmem:[#allocation6 + $0x2d8] sm:$0xff]
      %v138 = vld [vmem:[#allocation6 + $0x2e0] sm:$0xff]
      %v139 = vld [vmem:[#allocation6 + $0x2e8] sm:$0xff]
      %v140 = vld [vmem:[#allocation6 + $0x2f0] sm:$0xff]
      %v141 = vld [vmem:[#allocation6 + $0x2f8] sm:$0xff]
      %v142 = vld [vmem:[#allocation6 + $0x300] sm:$0xff]
      %v143 = vld [vmem:[#allocation6 + $0x308] sm:$0xff]
      %v144 = vld [vmem:[#allocation6 + $0x310] sm:$0xff]
      %v145 = vld [vmem:[#allocation6 + $0x318] sm:$0xff]
      %v146 = vld [vmem:[#allocation6 + $0x320] sm:$0xff]
      %v147 = vld [vmem:[#allocation6 + $0x328] sm:$0xff]
      %v148 = vld [vmem:[#allocation6 + $0x330] sm:$0xff]
      %v149 = vld [vmem:[#allocation6 + $0x338] sm:$0xff]
      %v150 = vld [vmem:[#allocation6 + $0x340] sm:$0xff]
      %v151 = vld [vmem:[#allocation6 + $0x348] sm:$0xff]
      %v152 = vld [vmem:[#allocation6 + $0x350] sm:$0xff]
      %v153 = vld [vmem:[#allocation6 + $0x358] sm:$0xff]
      %v154 = vld [vmem:[#allocation6 + $0x360] sm:$0xff]
      %v155 = vld [vmem:[#allocation6 + $0x368] sm:$0xff]
      %v156 = vld [vmem:[#allocation6 + $0x370] sm:$0xff]
      %v157 = vld [vmem:[#allocation6 + $0x378] sm:$0xff]
      %v158 = vld [vmem:[#allocation6 + $0x380] sm:$0xff]
      %v159 = vld [vmem:[#allocation6 + $0x388] sm:$0xff]
      %v160 = vld [vmem:[#allocation6 + $0x390] sm:$0xff]
      %v161 = vld [vmem:[#allocation6 + $0x398] sm:$0xff]
      %v162 = vld [vmem:[#allocation6 + $0x3a0] sm:$0xff]
      %v163 = vld [vmem:[#allocation6 + $0x3a8] sm:$0xff]
      %v164 = vld [vmem:[#allocation6 + $0x3b0] sm:$0xff]
      %v165 = vld [vmem:[#allocation6 + $0x3b8] sm:$0xff]
      %v166 = vld [vmem:[#allocation6 + $0x3c0] sm:$0xff]
      %v167 = vld [vmem:[#allocation6 + $0x3c8] sm:$0xff]
      %v168 = vld [vmem:[#allocation6 + $0x3d0] sm:$0xff]
      %v169 = vld [vmem:[#allocation6 + $0x3d8] sm:$0xff]
      %v170 = vld [vmem:[#allocation6 + $0x3e0] sm:$0xff]
      %v171 = vld [vmem:[#allocation6 + $0x3e8] sm:$0xff]
      %v172 = vld [vmem:[#allocation6 + $0x3f0] sm:$0xff]
      %v173 = vld [vmem:[#allocation6 + $0x3f8] sm:$0xff]
      %v174 = vlaneseq
      %v175 = vshrl.u32 %v174, 7
      %vm176 = vcmp.lt.s32.totalorder %v175, 2
      %v177 = vsel %vm176, 1, 0
      %v178 = vcvt.s32.f32 %v177
      %v179 = vsub.f32 1.0, %v178
      %v180 = vld [vmem:[#allocation2] sm:$0xff]
      %v181 = vld [vmem:[#allocation2 + $0x8] sm:$0xff]
      %v182 = vld [vmem:[#allocation3] sm:$0xff]
      %v183 = vld [vmem:[%s2] sm:$0xff]
      %v184 = vld [vmem:[%s2 + $0x8] sm:$0xff]
      %v185 = vld [vmem:[%s2 + $0x10] sm:$0xff]
      %v186 = vld [vmem:[%s2 + $0x18] sm:$0xff]
      %187 = vmatpush.msra.mxu0 %v106
      %188 = vmatpush.msra.mxu0 %v102
      %189 = vmatpush.msra.mxu0 %v98
      %190 = vmatpush.msra.mxu0 %v94
      %191 = vmatpush.msra.mxu0 %v90
      %192 = vmatpush.msra.mxu0 %v86
      %193 = vmatpush.msra.mxu0 %v82
      %194 = vmatpush.msra.mxu0 %v78
      %195 = vmatpush.msra.mxu0 %v74
      %196 = vmatpush.msra.mxu0 %v70
      %197 = vmatpush.msra.mxu0 %v66
      %198 = vmatpush.msra.mxu0 %v62
      %199 = vmatpush.msra.mxu0 %v58
      %200 = vmatpush.msra.mxu0 %v54
      %201 = vmatpush.msra.mxu0 %v50
      %202 = vmatpush.msra.mxu0 %v46
      %203 = vmatmul.f32.gmra.mxu0 %v180
      %v204 = vpop.f32.mrf.mxu0
      %v205 = vadd.f32 0.0, %v204
      %206 = vdwg.mxu0
      %207 = vmatpush.msra.mxu0 %v170
      %208 = vmatpush.msra.mxu0 %v166
      %209 = vmatpush.msra.mxu0 %v162
      %210 = vmatpush.msra.mxu0 %v158
      %211 = vmatpush.msra.mxu0 %v154
      %212 = vmatpush.msra.mxu0 %v150
      %213 = vmatpush.msra.mxu0 %v146
      %214 = vmatpush.msra.mxu0 %v142
      %215 = vmatpush.msra.mxu0 %v138
      %216 = vmatpush.msra.mxu0 %v134
      %217 = vmatpush.msra.mxu0 %v130
      %218 = vmatpush.msra.mxu0 %v126
      %219 = vmatpush.msra.mxu0 %v122
      %220 = vmatpush.msra.mxu0 %v118
      %221 = vmatpush.msra.mxu0 %v114
      %222 = vmatpush.msra.mxu0 %v110
      %223 = vmatmul.f32.gmra.mxu0 %v181
      %v224 = vpop.f32.mrf.mxu0
      %v225 = vadd.f32 %v205, %v224
      %226 = vdwg.mxu0
      %227 = vmatpush.msra.mxu0 %v107
      %228 = vmatpush.msra.mxu0 %v103
      %229 = vmatpush.msra.mxu0 %v99
      %230 = vmatpush.msra.mxu0 %v95
      %231 = vmatpush.msra.mxu0 %v91
      %232 = vmatpush.msra.mxu0 %v87
      %233 = vmatpush.msra.mxu0 %v83
      %234 = vmatpush.msra.mxu0 %v79
      %235 = vmatpush.msra.mxu0 %v75
      %236 = vmatpush.msra.mxu0 %v71
      %237 = vmatpush.msra.mxu0 %v67
      %238 = vmatpush.msra.mxu0 %v63
      %239 = vmatpush.msra.mxu0 %v59
      %240 = vmatpush.msra.mxu0 %v55
      %241 = vmatpush.msra.mxu0 %v51
      %242 = vmatpush.msra.mxu0 %v47
      %243 = vmatmul.f32.gmra.mxu0 %v180
      %v244 = vpop.f32.mrf.mxu0
      %v245 = vadd.f32 0.0, %v244
      %246 = vdwg.mxu0
      %247 = vmatpush.msra.mxu0 %v171
      %248 = vmatpush.msra.mxu0 %v167
      %249 = vmatpush.msra.mxu0 %v163
      %250 = vmatpush.msra.mxu0 %v159
      %251 = vmatpush.msra.mxu0 %v155
      %252 = vmatpush.msra.mxu0 %v151
      %253 = vmatpush.msra.mxu0 %v147
      %254 = vmatpush.msra.mxu0 %v143
      %255 = vmatpush.msra.mxu0 %v139
      %256 = vmatpush.msra.mxu0 %v135
      %257 = vmatpush.msra.mxu0 %v131
      %258 = vmatpush.msra.mxu0 %v127
      %259 = vmatpush.msra.mxu0 %v123
      %260 = vmatpush.msra.mxu0 %v119
      %261 = vmatpush.msra.mxu0 %v115
      %262 = vmatpush.msra.mxu0 %v111
      %263 = vmatmul.f32.gmra.mxu0 %v181
      %v264 = vpop.f32.mrf.mxu0
      %v265 = vadd.f32 %v245, %v264
      %266 = vdwg.mxu0
      %267 = vmatpush.msra.mxu0 %v108
      %268 = vmatpush.msra.mxu0 %v104
      %269 = vmatpush.msra.mxu0 %v100
      %270 = vmatpush.msra.mxu0 %v96
      %271 = vmatpush.msra.mxu0 %v92
      %272 = vmatpush.msra.mxu0 %v88
      %273 = vmatpush.msra.mxu0 %v84
      %274 = vmatpush.msra.mxu0 %v80
      %275 = vmatpush.msra.mxu0 %v76
      %276 = vmatpush.msra.mxu0 %v72
      %277 = vmatpush.msra.mxu0 %v68
      %278 = vmatpush.msra.mxu0 %v64
      %279 = vmatpush.msra.mxu0 %v60
      %280 = vmatpush.msra.mxu0 %v56
      %281 = vmatpush.msra.mxu0 %v52
      %282 = vmatpush.msra.mxu0 %v48
      %283 = vmatmul.f32.gmra.mxu0 %v180
      %v284 = vpop.f32.mrf.mxu0
      %v285 = vadd.f32 0.0, %v284
      %286 = vdwg.mxu0
      %287 = vmatpush.msra.mxu0 %v172
      %288 = vmatpush.msra.mxu0 %v168
      %289 = vmatpush.msra.mxu0 %v164
      %290 = vmatpush.msra.mxu0 %v160
      %291 = vmatpush.msra.mxu0 %v156
      %292 = vmatpush.msra.mxu0 %v152
      %293 = vmatpush.msra.mxu0 %v148
      %294 = vmatpush.msra.mxu0 %v144
      %295 = vmatpush.msra.mxu0 %v140
      %296 = vmatpush.msra.mxu0 %v136
      %297 = vmatpush.msra.mxu0 %v132
      %298 = vmatpush.msra.mxu0 %v128
      %299 = vmatpush.msra.mxu0 %v124
      %300 = vmatpush.msra.mxu0 %v120
      %301 = vmatpush.msra.mxu0 %v116
      %302 = vmatpush.msra.mxu0 %v112
      %303 = vmatmul.f32.gmra.mxu0 %v181
      %v304 = vpop.f32.mrf.mxu0
      %v305 = vadd.f32 %v285, %v304
      %306 = vdwg.mxu0
      %307 = vmatpush.msra.mxu0 %v109
      %308 = vmatpush.msra.mxu0 %v105
      %309 = vmatpush.msra.mxu0 %v101
      %310 = vmatpush.msra.mxu0 %v97
      %311 = vmatpush.msra.mxu0 %v93
      %312 = vmatpush.msra.mxu0 %v89
      %313 = vmatpush.msra.mxu0 %v85
      %314 = vmatpush.msra.mxu0 %v81
      %315 = vmatpush.msra.mxu0 %v77
      %316 = vmatpush.msra.mxu0 %v73
      %317 = vmatpush.msra.mxu0 %v69
      %318 = vmatpush.msra.mxu0 %v65
      %319 = vmatpush.msra.mxu0 %v61
      %320 = vmatpush.msra.mxu0 %v57
      %321 = vmatpush.msra.mxu0 %v53
      %322 = vmatpush.msra.mxu0 %v49
      %323 = vmatmul.f32.gmra.mxu0 %v180
      %v324 = vpop.f32.mrf.mxu0
      %v325 = vadd.f32 0.0, %v324
      %326 = vdwg.mxu0
      %327 = vmatpush.msra.mxu0 %v173
      %328 = vmatpush.msra.mxu0 %v169
      %329 = vmatpush.msra.mxu0 %v165
      %330 = vmatpush.msra.mxu0 %v161
      %331 = vmatpush.msra.mxu0 %v157
      %332 = vmatpush.msra.mxu0 %v153
      %333 = vmatpush.msra.mxu0 %v149
      %334 = vmatpush.msra.mxu0 %v145
      %335 = vmatpush.msra.mxu0 %v141
      %336 = vmatpush.msra.mxu0 %v137
      %337 = vmatpush.msra.mxu0 %v133
      %338 = vmatpush.msra.mxu0 %v129
      %339 = vmatpush.msra.mxu0 %v125
      %340 = vmatpush.msra.mxu0 %v121
      %341 = vmatpush.msra.mxu0 %v117
      %342 = vmatpush.msra.mxu0 %v113
      %343 = vmatmul.f32.gmra.mxu0 %v181
      %v344 = vpop.f32.mrf.mxu0
      %v345 = vadd.f32 %v325, %v344
      %346 = vdwg.mxu0
      %v347 = vadd.f32 %v183, %v225
      %v348 = vadd.f32 %v184, %v265
      %v349 = vadd.f32 %v185, %v305
      %v350 = vadd.f32 %v186, %v345
      %v351 = vxor.u32 %v347, 2147483648
      %v352 = vmul.f32 %v351, 1.442695
      %v353 = vpow.pop %v352
      %v354 = vadd.f32 %v353, 1.0
      %v355 = vrcp.pop %v354
      %v356 = vmul.f32 %v354, %v355
      %v357 = vsub.f32 1.0, %v356
      %v358 = vmul.f32 %v355, %v357
      %v359 = vadd.f32 %v355, %v358
      %vm360 = vweird.f32 %v354
      %vm361 = vweird.f32 %v355
      %vm362 = vmor %vm360, %vm361
      %v363 = vsel %vm362, %v355, %v359
      %v364 = vand.u32 2147483647, %v354
      %vm365 = vcmp.eq.f32.partialorder %v364, 8.507059e+37
      %v366 = vand.u32 %v354, 2147483648
      %v367 = vor.u32 1.1754944e-38, %v366
      %v368 = vsel %vm365, %v367, %v363
      %v369 = vmul.f32 1.0, %v368
      %v370 = vxor.u32 %v348, 2147483648
      %v371 = vmul.f32 %v370, 1.442695
      %v372 = vpow.pop %v371
      %v373 = vadd.f32 %v372, 1.0
      %v374 = vrcp.pop %v373
      %v375 = vmul.f32 %v373, %v374
      %v376 = vsub.f32 1.0, %v375
      %v377 = vmul.f32 %v374, %v376
      %v378 = vadd.f32 %v374, %v377
      %vm379 = vweird.f32 %v373
      %vm380 = vweird.f32 %v374
      %vm381 = vmor %vm379, %vm380
      %v382 = vsel %vm381, %v374, %v378
      %v383 = vand.u32 2147483647, %v373
      %vm384 = vcmp.eq.f32.partialorder %v383, 8.507059e+37
      %v385 = vand.u32 %v373, 2147483648
      %v386 = vor.u32 1.1754944e-38, %v385
      %v387 = vsel %vm384, %v386, %v382
      %v388 = vmul.f32 1.0, %v387
      %v389 = vtanh.pop %v349
      %v390 = vxor.u32 %v350, 2147483648
      %v391 = vmul.f32 %v390, 1.442695
      %v392 = vpow.pop %v391
      %v393 = vadd.f32 %v392, 1.0
      %v394 = vrcp.pop %v393
      %v395 = vmul.f32 %v393, %v394
      %v396 = vsub.f32 1.0, %v395
      %v397 = vmul.f32 %v394, %v396
      %v398 = vadd.f32 %v394, %v397
      %vm399 = vweird.f32 %v393
      %vm400 = vweird.f32 %v394
      %vm401 = vmor %vm399, %vm400
      %v402 = vsel %vm401, %v394, %v398
      %v403 = vand.u32 2147483647, %v393
      %vm404 = vcmp.eq.f32.partialorder %v403, 8.507059e+37
      %v405 = vand.u32 %v393, 2147483648
      %v406 = vor.u32 1.1754944e-38, %v405
      %v407 = vsel %vm404, %v406, %v402
      %v408 = vmul.f32 1.0, %v407
      %v409 = vmul.f32 %v388, %v182
      %v410 = vmul.f32 %v369, %v389
      %v411 = vadd.f32 %v409, %v410
      %v412 = vtanh.pop %v411
      %v413 = vmul.f32 %v408, %v412
      %v414 = vstv %s39
      %vm415 = vcmp.lt.s32.totalorder %v414, %v45
      %v416 = vmul.f32 %v413, %v178
      %v417 = vmul.f32 %v413, %v179
      %v418 = vsel %vm415, 1, 0
      %419 = vset.pattern.permute.xlu0 0
      %420 = vperm.xlu0 %419, %v418
      %v421 = vpop.permute.xlu0 %420
      %vm422 = vcmp.eq.s32.totalorder %v421, 1
      %v423 = vsel %vm422, %v416, %v180
      %v424 = vsel %vm422, %v417, %v181
      %425 = vst [vmem:[#allocation2] sm:$0xff] %v423
      %426 = vst [vmem:[#allocation2 + $0x8] sm:$0xff] %v424
      %v427 = vsel %vm422, %v411, %v182
      %428 = vst [vmem:[#allocation3] sm:$0xff] %v427
      %v429 = vsel %vm422, %v413, 0.0
      %430 = vst [vmem:[%s4] sm:$0xff] %v429
      %s431 = sadd.s32 %s39, 1
      %v432 = vld [vmem:[#allocation2] sm:$0xff]
      %v433 = vld [vmem:[#allocation2 + $0x8] sm:$0xff]
      %v434 = vld [vmem:[#allocation3] sm:$0xff]
      %s435 = scalar_lea.vmem %s2, 32
      %v436 = vld [vmem:[%s435] sm:$0xff]
      %v437 = vld [vmem:[%s435 + $0x8] sm:$0xff]
      %v438 = vld [vmem:[%s435 + $0x10] sm:$0xff]
      %v439 = vld [vmem:[%s435 + $0x18] sm:$0xff]
      %440 = vmatpush.msra.mxu0 %v106
      %441 = vmatpush.msra.mxu0 %v102
      %442 = vmatpush.msra.mxu0 %v98
      %443 = vmatpush.msra.mxu0 %v94
      %444 = vmatpush.msra.mxu0 %v90
      %445 = vmatpush.msra.mxu0 %v86
      %446 = vmatpush.msra.mxu0 %v82
      %447 = vmatpush.msra.mxu0 %v78
      %448 = vmatpush.msra.mxu0 %v74
      %449 = vmatpush.msra.mxu0 %v70
      %450 = vmatpush.msra.mxu0 %v66
      %451 = vmatpush.msra.mxu0 %v62
      %452 = vmatpush.msra.mxu0 %v58
      %453 = vmatpush.msra.mxu0 %v54
      %454 = vmatpush.msra.mxu0 %v50
      %455 = vmatpush.msra.mxu0 %v46
      %456 = vmatmul.f32.gmra.mxu0 %v432
      %v457 = vpop.f32.mrf.mxu0
      %v458 = vadd.f32 0.0, %v457
      %459 = vdwg.mxu0
      %460 = vmatpush.msra.mxu0 %v170
      %461 = vmatpush.msra.mxu0 %v166
      %462 = vmatpush.msra.mxu0 %v162
      %463 = vmatpush.msra.mxu0 %v158
      %464 = vmatpush.msra.mxu0 %v154
      %465 = vmatpush.msra.mxu0 %v150
      %466 = vmatpush.msra.mxu0 %v146
      %467 = vmatpush.msra.mxu0 %v142
      %468 = vmatpush.msra.mxu0 %v138
      %469 = vmatpush.msra.mxu0 %v134
      %470 = vmatpush.msra.mxu0 %v130
      %471 = vmatpush.msra.mxu0 %v126
      %472 = vmatpush.msra.mxu0 %v122
      %473 = vmatpush.msra.mxu0 %v118
      %474 = vmatpush.msra.mxu0 %v114
      %475 = vmatpush.msra.mxu0 %v110
      %476 = vmatmul.f32.gmra.mxu0 %v433
      %v477 = vpop.f32.mrf.mxu0
      %v478 = vadd.f32 %v458, %v477
      %479 = vdwg.mxu0
      %480 = vmatpush.msra.mxu0 %v107
      %481 = vmatpush.msra.mxu0 %v103
      %482 = vmatpush.msra.mxu0 %v99
      %483 = vmatpush.msra.mxu0 %v95
      %484 = vmatpush.msra.mxu0 %v91
      %485 = vmatpush.msra.mxu0 %v87
      %486 = vmatpush.msra.mxu0 %v83
      %487 = vmatpush.msra.mxu0 %v79
      %488 = vmatpush.msra.mxu0 %v75
      %489 = vmatpush.msra.mxu0 %v71
      %490 = vmatpush.msra.mxu0 %v67
      %491 = vmatpush.msra.mxu0 %v63
      %492 = vmatpush.msra.mxu0 %v59
      %493 = vmatpush.msra.mxu0 %v55
      %494 = vmatpush.msra.mxu0 %v51
      %495 = vmatpush.msra.mxu0 %v47
      %496 = vmatmul.f32.gmra.mxu0 %v432
      %v497 = vpop.f32.mrf.mxu0
      %v498 = vadd.f32 0.0, %v497
      %499 = vdwg.mxu0
      %500 = vmatpush.msra.mxu0 %v171
      %501 = vmatpush.msra.mxu0 %v167
      %502 = vmatpush.msra.mxu0 %v163
      %503 = vmatpush.msra.mxu0 %v159
      %504 = vmatpush.msra.mxu0 %v155
      %505 = vmatpush.msra.mxu0 %v151
      %506 = vmatpush.msra.mxu0 %v147
      %507 = vmatpush.msra.mxu0 %v143
      %508 = vmatpush.msra.mxu0 %v139
      %509 = vmatpush.msra.mxu0 %v135
      %510 = vmatpush.msra.mxu0 %v131
      %511 = vmatpush.msra.mxu0 %v127
      %512 = vmatpush.msra.mxu0 %v123
      %513 = vmatpush.msra.mxu0 %v119
      %514 = vmatpush.msra.mxu0 %v115
      %515 = vmatpush.msra.mxu0 %v111
      %516 = vmatmul.f32.gmra.mxu0 %v433
      %v517 = vpop.f32.mrf.mxu0
      %v518 = vadd.f32 %v498, %v517
      %519 = vdwg.mxu0
      %520 = vmatpush.msra.mxu0 %v108
      %521 = vmatpush.msra.mxu0 %v104
      %522 = vmatpush.msra.mxu0 %v100
      %523 = vmatpush.msra.mxu0 %v96
      %524 = vmatpush.msra.mxu0 %v92
      %525 = vmatpush.msra.mxu0 %v88
      %526 = vmatpush.msra.mxu0 %v84
      %527 = vmatpush.msra.mxu0 %v80
      %528 = vmatpush.msra.mxu0 %v76
      %529 = vmatpush.msra.mxu0 %v72
      %530 = vmatpush.msra.mxu0 %v68
      %531 = vmatpush.msra.mxu0 %v64
      %532 = vmatpush.msra.mxu0 %v60
      %533 = vmatpush.msra.mxu0 %v56
      %534 = vmatpush.msra.mxu0 %v52
      %535 = vmatpush.msra.mxu0 %v48
      %536 = vmatmul.f32.gmra.mxu0 %v432
      %v537 = vpop.f32.mrf.mxu0
      %v538 = vadd.f32 0.0, %v537
      %539 = vdwg.mxu0
      %540 = vmatpush.msra.mxu0 %v172
      %541 = vmatpush.msra.mxu0 %v168
      %542 = vmatpush.msra.mxu0 %v164
      %543 = vmatpush.msra.mxu0 %v160
      %544 = vmatpush.msra.mxu0 %v156
      %545 = vmatpush.msra.mxu0 %v152
      %546 = vmatpush.msra.mxu0 %v148
      %547 = vmatpush.msra.mxu0 %v144
      %548 = vmatpush.msra.mxu0 %v140
      %549 = vmatpush.msra.mxu0 %v136
      %550 = vmatpush.msra.mxu0 %v132
      %551 = vmatpush.msra.mxu0 %v128
      %552 = vmatpush.msra.mxu0 %v124
      %553 = vmatpush.msra.mxu0 %v120
      %554 = vmatpush.msra.mxu0 %v116
      %555 = vmatpush.msra.mxu0 %v112
      %556 = vmatmul.f32.gmra.mxu0 %v433
      %v557 = vpop.f32.mrf.mxu0
      %v558 = vadd.f32 %v538, %v557
      %559 = vdwg.mxu0
      %560 = vmatpush.msra.mxu0 %v109
      %561 = vmatpush.msra.mxu0 %v105
      %562 = vmatpush.msra.mxu0 %v101
      %563 = vmatpush.msra.mxu0 %v97
      %564 = vmatpush.msra.mxu0 %v93
      %565 = vmatpush.msra.mxu0 %v89
      %566 = vmatpush.msra.mxu0 %v85
      %567 = vmatpush.msra.mxu0 %v81
      %568 = vmatpush.msra.mxu0 %v77
      %569 = vmatpush.msra.mxu0 %v73
      %570 = vmatpush.msra.mxu0 %v69
      %571 = vmatpush.msra.mxu0 %v65
      %572 = vmatpush.msra.mxu0 %v61
      %573 = vmatpush.msra.mxu0 %v57
      %574 = vmatpush.msra.mxu0 %v53
      %575 = vmatpush.msra.mxu0 %v49
      %576 = vmatmul.f32.gmra.mxu0 %v432
      %v577 = vpop.f32.mrf.mxu0
      %v578 = vadd.f32 0.0, %v577
      %579 = vdwg.mxu0
      %580 = vmatpush.msra.mxu0 %v173
      %581 = vmatpush.msra.mxu0 %v169
      %582 = vmatpush.msra.mxu0 %v165
      %583 = vmatpush.msra.mxu0 %v161
      %584 = vmatpush.msra.mxu0 %v157
      %585 = vmatpush.msra.mxu0 %v153
      %586 = vmatpush.msra.mxu0 %v149
      %587 = vmatpush.msra.mxu0 %v145
      %588 = vmatpush.msra.mxu0 %v141
      %589 = vmatpush.msra.mxu0 %v137
      %590 = vmatpush.msra.mxu0 %v133
      %591 = vmatpush.msra.mxu0 %v129
      %592 = vmatpush.msra.mxu0 %v125
      %593 = vmatpush.msra.mxu0 %v121
      %594 = vmatpush.msra.mxu0 %v117
      %595 = vmatpush.msra.mxu0 %v113
      %596 = vmatmul.f32.gmra.mxu0 %v433
      %v597 = vpop.f32.mrf.mxu0
      %v598 = vadd.f32 %v578, %v597
      %599 = vdwg.mxu0
      %v600 = vadd.f32 %v436, %v478
      %v601 = vadd.f32 %v437, %v518
      %v602 = vadd.f32 %v438, %v558
      %v603 = vadd.f32 %v439, %v598
      %v604 = vxor.u32 %v600, 2147483648
      %v605 = vmul.f32 %v604, 1.442695
      %v606 = vpow.pop %v605
      %v607 = vadd.f32 %v606, 1.0
      %v608 = vrcp.pop %v607
      %v609 = vmul.f32 %v607, %v608
      %v610 = vsub.f32 1.0, %v609
      %v611 = vmul.f32 %v608, %v610
      %v612 = vadd.f32 %v608, %v611
      %vm613 = vweird.f32 %v607
      %vm614 = vweird.f32 %v608
      %vm615 = vmor %vm613, %vm614
      %v616 = vsel %vm615, %v608, %v612
      %v617 = vand.u32 2147483647, %v607
      %vm618 = vcmp.eq.f32.partialorder %v617, 8.507059e+37
      %v619 = vand.u32 %v607, 2147483648
      %v620 = vor.u32 1.1754944e-38, %v619
      %v621 = vsel %vm618, %v620, %v616
      %v622 = vmul.f32 1.0, %v621
      %v623 = vxor.u32 %v601, 2147483648
      %v624 = vmul.f32 %v623, 1.442695
      %v625 = vpow.pop %v624
      %v626 = vadd.f32 %v625, 1.0
      %v627 = vrcp.pop %v626
      %v628 = vmul.f32 %v626, %v627
      %v629 = vsub.f32 1.0, %v628
      %v630 = vmul.f32 %v627, %v629
      %v631 = vadd.f32 %v627, %v630
      %vm632 = vweird.f32 %v626
      %vm633 = vweird.f32 %v627
      %vm634 = vmor %vm632, %vm633
      %v635 = vsel %vm634, %v627, %v631
      %v636 = vand.u32 2147483647, %v626
      %vm637 = vcmp.eq.f32.partialorder %v636, 8.507059e+37
      %v638 = vand.u32 %v626, 2147483648
      %v639 = vor.u32 1.1754944e-38, %v638
      %v640 = vsel %vm637, %v639, %v635
      %v641 = vmul.f32 1.0, %v640
      %v642 = vtanh.pop %v602
      %v643 = vxor.u32 %v603, 2147483648
      %v644 = vmul.f32 %v643, 1.442695
      %v645 = vpow.pop %v644
      %v646 = vadd.f32 %v645, 1.0
      %v647 = vrcp.pop %v646
      %v648 = vmul.f32 %v646, %v647
      %v649 = vsub.f32 1.0, %v648
      %v650 = vmul.f32 %v647, %v649
      %v651 = vadd.f32 %v647, %v650
      %vm652 = vweird.f32 %v646
      %vm653 = vweird.f32 %v647
      %vm654 = vmor %vm652, %vm653
      %v655 = vsel %vm654, %v647, %v651
      %v656 = vand.u32 2147483647, %v646
      %vm657 = vcmp.eq.f32.partialorder %v656, 8.507059e+37
      %v658 = vand.u32 %v646, 2147483648
      %v659 = vor.u32 1.1754944e-38, %v658
      %v660 = vsel %vm657, %v659, %v655
      %v661 = vmul.f32 1.0, %v660
      %v662 = vmul.f32 %v641, %v434
      %v663 = vmul.f32 %v622, %v642
      %v664 = vadd.f32 %v662, %v663
      %v665 = vtanh.pop %v664
      %v666 = vmul.f32 %v661, %v665
      %v667 = vstv %s431
      %vm668 = vcmp.lt.s32.totalorder %v667, %v45
      %v669 = vmul.f32 %v666, %v178
      %v670 = vmul.f32 %v666, %v179
      %v671 = vsel %vm668, 1, 0
      %672 = vset.pattern.permute.xlu0 0
      %673 = vperm.xlu0 %672, %v671
      %v674 = vpop.permute.xlu0 %673
      %vm675 = vcmp.eq.s32.totalorder %v674, 1
      %v676 = vsel %vm675, %v669, %v432
      %v677 = vsel %vm675, %v670, %v433
      %678 = vst [vmem:[#allocation2] sm:$0xff] %v676
      %679 = vst [vmem:[#allocation2 + $0x8] sm:$0xff] %v677
      %v680 = vsel %vm675, %v664, %v434
      %681 = vst [vmem:[#allocation3] sm:$0xff] %v680
      %v682 = vsel %vm675, %v666, 0.0
      %s683 = scalar_lea.vmem %s4, 8
      %684 = vst [vmem:[%s683] sm:$0xff] %v682
      %s685 = sadd.s32 %s39, 2
      %v686 = vld [vmem:[#allocation2] sm:$0xff]
      %v687 = vld [vmem:[#allocation2 + $0x8] sm:$0xff]
      %v688 = vld [vmem:[#allocation3] sm:$0xff]
      %s689 = scalar_lea.vmem %s2, 64
      %v690 = vld [vmem:[%s689] sm:$0xff]
      %v691 = vld [vmem:[%s689 + $0x8] sm:$0xff]
      %v692 = vld [vmem:[%s689 + $0x10] sm:$0xff]
      %v693 = vld [vmem:[%s689 + $0x18] sm:$0xff]
      %694 = vmatpush.msra.mxu0 %v106
      %695 = vmatpush.msra.mxu0 %v102
      %696 = vmatpush.msra.mxu0 %v98
      %697 = vmatpush.msra.mxu0 %v94
      %698 = vmatpush.msra.mxu0 %v90
      %699 = vmatpush.msra.mxu0 %v86
      %700 = vmatpush.msra.mxu0 %v82
      %701 = vmatpush.msra.mxu0 %v78
      %702 = vmatpush.msra.mxu0 %v74
      %703 = vmatpush.msra.mxu0 %v70
      %704 = vmatpush.msra.mxu0 %v66
      %705 = vmatpush.msra.mxu0 %v62
      %706 = vmatpush.msra.mxu0 %v58
      %707 = vmatpush.msra.mxu0 %v54
      %708 = vmatpush.msra.mxu0 %v50
      %709 = vmatpush.msra.mxu0 %v46
      %710 = vmatmul.f32.gmra.mxu0 %v686
      %v711 = vpop.f32.mrf.mxu0
      %v712 = vadd.f32 0.0, %v711
      %713 = vdwg.mxu0
      %714 = vmatpush.msra.mxu0 %v170
      %715 = vmatpush.msra.mxu0 %v166
      %716 = vmatpush.msra.mxu0 %v162
      %717 = vmatpush.msra.mxu0 %v158
      %718 = vmatpush.msra.mxu0 %v154
      %719 = vmatpush.msra.mxu0 %v150
      %720 = vmatpush.msra.mxu0 %v146
      %721 = vmatpush.msra.mxu0 %v142
      %722 = vmatpush.msra.mxu0 %v138
      %723 = vmatpush.msra.mxu0 %v134
      %724 = vmatpush.msra.mxu0 %v130
      %725 = vmatpush.msra.mxu0 %v126
      %726 = vmatpush.msra.mxu0 %v122
      %727 = vmatpush.msra.mxu0 %v118
      %728 = vmatpush.msra.mxu0 %v114
      %729 = vmatpush.msra.mxu0 %v110
      %730 = vmatmul.f32.gmra.mxu0 %v687
      %v731 = vpop.f32.mrf.mxu0
      %v732 = vadd.f32 %v712, %v731
      %733 = vdwg.mxu0
      %734 = vmatpush.msra.mxu0 %v107
      %735 = vmatpush.msra.mxu0 %v103
      %736 = vmatpush.msra.mxu0 %v99
      %737 = vmatpush.msra.mxu0 %v95
      %738 = vmatpush.msra.mxu0 %v91
      %739 = vmatpush.msra.mxu0 %v87
      %740 = vmatpush.msra.mxu0 %v83
      %741 = vmatpush.msra.mxu0 %v79
      %742 = vmatpush.msra.mxu0 %v75
      %743 = vmatpush.msra.mxu0 %v71
      %744 = vmatpush.msra.mxu0 %v67
      %745 = vmatpush.msra.mxu0 %v63
      %746 = vmatpush.msra.mxu0 %v59
      %747 = vmatpush.msra.mxu0 %v55
      %748 = vmatpush.msra.mxu0 %v51
      %749 = vmatpush.msra.mxu0 %v47
      %750 = vmatmul.f32.gmra.mxu0 %v686
      %v751 = vpop.f32.mrf.mxu0
      %v752 = vadd.f32 0.0, %v751
      %753 = vdwg.mxu0
      %754 = vmatpush.msra.mxu0 %v171
      %755 = vmatpush.msra.mxu0 %v167
      %756 = vmatpush.msra.mxu0 %v163
      %757 = vmatpush.msra.mxu0 %v159
      %758 = vmatpush.msra.mxu0 %v155
      %759 = vmatpush.msra.mxu0 %v151
      %760 = vmatpush.msra.mxu0 %v147
      %761 = vmatpush.msra.mxu0 %v143
      %762 = vmatpush.msra.mxu0 %v139
      %763 = vmatpush.msra.mxu0 %v135
      %764 = vmatpush.msra.mxu0 %v131
      %765 = vmatpush.msra.mxu0 %v127
      %766 = vmatpush.msra.mxu0 %v123
      %767 = vmatpush.msra.mxu0 %v119
      %768 = vmatpush.msra.mxu0 %v115
      %769 = vmatpush.msra.mxu0 %v111
      %770 = vmatmul.f32.gmra.mxu0 %v687
      %v771 = vpop.f32.mrf.mxu0
      %v772 = vadd.f32 %v752, %v771
      %773 = vdwg.mxu0
      %774 = vmatpush.msra.mxu0 %v108
      %775 = vmatpush.msra.mxu0 %v104
      %776 = vmatpush.msra.mxu0 %v100
      %777 = vmatpush.msra.mxu0 %v96
      %778 = vmatpush.msra.mxu0 %v92
      %779 = vmatpush.msra.mxu0 %v88
      %780 = vmatpush.msra.mxu0 %v84
      %781 = vmatpush.msra.mxu0 %v80
      %782 = vmatpush.msra.mxu0 %v76
      %783 = vmatpush.msra.mxu0 %v72
      %784 = vmatpush.msra.mxu0 %v68
      %785 = vmatpush.msra.mxu0 %v64
      %786 = vmatpush.msra.mxu0 %v60
      %787 = vmatpush.msra.mxu0 %v56
      %788 = vmatpush.msra.mxu0 %v52
      %789 = vmatpush.msra.mxu0 %v48
      %790 = vmatmul.f32.gmra.mxu0 %v686
      %v791 = vpop.f32.mrf.mxu0
      %v792 = vadd.f32 0.0, %v791
      %793 = vdwg.mxu0
      %794 = vmatpush.msra.mxu0 %v172
      %795 = vmatpush.msra.mxu0 %v168
      %796 = vmatpush.msra.mxu0 %v164
      %797 = vmatpush.msra.mxu0 %v160
      %798 = vmatpush.msra.mxu0 %v156
      %799 = vmatpush.msra.mxu0 %v152
      %800 = vmatpush.msra.mxu0 %v148
      %801 = vmatpush.msra.mxu0 %v144
      %802 = vmatpush.msra.mxu0 %v140
      %803 = vmatpush.msra.mxu0 %v136
      %804 = vmatpush.msra.mxu0 %v132
      %805 = vmatpush.msra.mxu0 %v128
      %806 = vmatpush.msra.mxu0 %v124
      %807 = vmatpush.msra.mxu0 %v120
      %808 = vmatpush.msra.mxu0 %v116
      %809 = vmatpush.msra.mxu0 %v112
      %810 = vmatmul.f32.gmra.mxu0 %v687
      %v811 = vpop.f32.mrf.mxu0
      %v812 = vadd.f32 %v792, %v811
      %813 = vdwg.mxu0
      %814 = vmatpush.msra.mxu0 %v109
      %815 = vmatpush.msra.mxu0 %v105
      %816 = vmatpush.msra.mxu0 %v101
      %817 = vmatpush.msra.mxu0 %v97
      %818 = vmatpush.msra.mxu0 %v93
      %819 = vmatpush.msra.mxu0 %v89
      %820 = vmatpush.msra.mxu0 %v85
      %821 = vmatpush.msra.mxu0 %v81
      %822 = vmatpush.msra.mxu0 %v77
      %823 = vmatpush.msra.mxu0 %v73
      %824 = vmatpush.msra.mxu0 %v69
      %825 = vmatpush.msra.mxu0 %v65
      %826 = vmatpush.msra.mxu0 %v61
      %827 = vmatpush.msra.mxu0 %v57
      %828 = vmatpush.msra.mxu0 %v53
      %829 = vmatpush.msra.mxu0 %v49
      %830 = vmatmul.f32.gmra.mxu0 %v686
      %v831 = vpop.f32.mrf.mxu0
      %v832 = vadd.f32 0.0, %v831
      %833 = vdwg.mxu0
      %834 = vmatpush.msra.mxu0 %v173
      %835 = vmatpush.msra.mxu0 %v169
      %836 = vmatpush.msra.mxu0 %v165
      %837 = vmatpush.msra.mxu0 %v161
      %838 = vmatpush.msra.mxu0 %v157
      %839 = vmatpush.msra.mxu0 %v153
      %840 = vmatpush.msra.mxu0 %v149
      %841 = vmatpush.msra.mxu0 %v145
      %842 = vmatpush.msra.mxu0 %v141
      %843 = vmatpush.msra.mxu0 %v137
      %844 = vmatpush.msra.mxu0 %v133
      %845 = vmatpush.msra.mxu0 %v129
      %846 = vmatpush.msra.mxu0 %v125
      %847 = vmatpush.msra.mxu0 %v121
      %848 = vmatpush.msra.mxu0 %v117
      %849 = vmatpush.msra.mxu0 %v113
      %850 = vmatmul.f32.gmra.mxu0 %v687
      %v851 = vpop.f32.mrf.mxu0
      %v852 = vadd.f32 %v832, %v851
      %853 = vdwg.mxu0
      %v854 = vadd.f32 %v690, %v732
      %v855 = vadd.f32 %v691, %v772
      %v856 = vadd.f32 %v692, %v812
      %v857 = vadd.f32 %v693, %v852
      %v858 = vxor.u32 %v854, 2147483648
      %v859 = vmul.f32 %v858, 1.442695
      %v860 = vpow.pop %v859
      %v861 = vadd.f32 %v860, 1.0
      %v862 = vrcp.pop %v861
      %v863 = vmul.f32 %v861, %v862
      %v864 = vsub.f32 1.0, %v863
      %v865 = vmul.f32 %v862, %v864
      %v866 = vadd.f32 %v862, %v865
      %vm867 = vweird.f32 %v861
      %vm868 = vweird.f32 %v862
      %vm869 = vmor %vm867, %vm868
      %v870 = vsel %vm869, %v862, %v866
      %v871 = vand.u32 2147483647, %v861
      %vm872 = vcmp.eq.f32.partialorder %v871, 8.507059e+37
      %v873 = vand.u32 %v861, 2147483648
      %v874 = vor.u32 1.1754944e-38, %v873
      %v875 = vsel %vm872, %v874, %v870
      %v876 = vmul.f32 1.0, %v875
      %v877 = vxor.u32 %v855, 2147483648
      %v878 = vmul.f32 %v877, 1.442695
      %v879 = vpow.pop %v878
      %v880 = vadd.f32 %v879, 1.0
      %v881 = vrcp.pop %v880
      %v882 = vmul.f32 %v880, %v881
      %v883 = vsub.f32 1.0, %v882
      %v884 = vmul.f32 %v881, %v883
      %v885 = vadd.f32 %v881, %v884
      %vm886 = vweird.f32 %v880
      %vm887 = vweird.f32 %v881
      %vm888 = vmor %vm886, %vm887
      %v889 = vsel %vm888, %v881, %v885
      %v890 = vand.u32 2147483647, %v880
      %vm891 = vcmp.eq.f32.partialorder %v890, 8.507059e+37
      %v892 = vand.u32 %v880, 2147483648
      %v893 = vor.u32 1.1754944e-38, %v892
      %v894 = vsel %vm891, %v893, %v889
      %v895 = vmul.f32 1.0, %v894
      %v896 = vtanh.pop %v856
      %v897 = vxor.u32 %v857, 2147483648
      %v898 = vmul.f32 %v897, 1.442695
      %v899 = vpow.pop %v898
      %v900 = vadd.f32 %v899, 1.0
      %v901 = vrcp.pop %v900
      %v902 = vmul.f32 %v900, %v901
      %v903 = vsub.f32 1.0, %v902
      %v904 = vmul.f32 %v901, %v903
      %v905 = vadd.f32 %v901, %v904
      %vm906 = vweird.f32 %v900
      %vm907 = vweird.f32 %v901
      %vm908 = vmor %vm906, %vm907
      %v909 = vsel %vm908, %v901, %v905
      %v910 = vand.u32 2147483647, %v900
      %vm911 = vcmp.eq.f32.partialorder %v910, 8.507059e+37
      %v912 = vand.u32 %v900, 2147483648
      %v913 = vor.u32 1.1754944e-38, %v912
      %v914 = vsel %vm911, %v913, %v909
      %v915 = vmul.f32 1.0, %v914
      %v916 = vmul.f32 %v895, %v688
      %v917 = vmul.f32 %v876, %v896
      %v918 = vadd.f32 %v916, %v917
      %v919 = vtanh.pop %v918
      %v920 = vmul.f32 %v915, %v919
      %v921 = vstv %s685
      %vm922 = vcmp.lt.s32.totalorder %v921, %v45
      %v923 = vmul.f32 %v920, %v178
      %v924 = vmul.f32 %v920, %v179
      %v925 = vsel %vm922, 1, 0
      %926 = vset.pattern.permute.xlu0 0
      %927 = vperm.xlu0 %926, %v925
      %v928 = vpop.permute.xlu0 %927
      %vm929 = vcmp.eq.s32.totalorder %v928, 1
      %v930 = vsel %vm929, %v923, %v686
      %v931 = vsel %vm929, %v924, %v687
      %932 = vst [vmem:[#allocation2] sm:$0xff] %v930
      %933 = vst [vmem:[#allocation2 + $0x8] sm:$0xff] %v931
      %v934 = vsel %vm929, %v918, %v688
      %935 = vst [vmem:[#allocation3] sm:$0xff] %v934
      %v936 = vsel %vm929, %v920, 0.0
      %s937 = scalar_lea.vmem %s4, 16
      %938 = vst [vmem:[%s937] sm:$0xff] %v936
      %s939 = sadd.s32 %s39, 3
      %v940 = vld [vmem:[#allocation2] sm:$0xff]
      %v941 = vld [vmem:[#allocation2 + $0x8] sm:$0xff]
      %v942 = vld [vmem:[#allocation3] sm:$0xff]
      %s943 = scalar_lea.vmem %s2, 96
      %v944 = vld [vmem:[%s943] sm:$0xff]
      %v945 = vld [vmem:[%s943 + $0x8] sm:$0xff]
      %v946 = vld [vmem:[%s943 + $0x10] sm:$0xff]
      %v947 = vld [vmem:[%s943 + $0x18] sm:$0xff]
      %948 = vmatpush.msra.mxu0 %v106
      %949 = vmatpush.msra.mxu0 %v102
      %950 = vmatpush.msra.mxu0 %v98
      %951 = vmatpush.msra.mxu0 %v94
      %952 = vmatpush.msra.mxu0 %v90
      %953 = vmatpush.msra.mxu0 %v86
      %954 = vmatpush.msra.mxu0 %v82
      %955 = vmatpush.msra.mxu0 %v78
      %956 = vmatpush.msra.mxu0 %v74
      %957 = vmatpush.msra.mxu0 %v70
      %958 = vmatpush.msra.mxu0 %v66
      %959 = vmatpush.msra.mxu0 %v62
      %960 = vmatpush.msra.mxu0 %v58
      %961 = vmatpush.msra.mxu0 %v54
      %962 = vmatpush.msra.mxu0 %v50
      %963 = vmatpush.msra.mxu0 %v46
      %964 = vmatmul.f32.gmra.mxu0 %v940
      %v965 = vpop.f32.mrf.mxu0
      %v966 = vadd.f32 0.0, %v965
      %967 = vdwg.mxu0
      %968 = vmatpush.msra.mxu0 %v170
      %969 = vmatpush.msra.mxu0 %v166
      %970 = vmatpush.msra.mxu0 %v162
      %971 = vmatpush.msra.mxu0 %v158
      %972 = vmatpush.msra.mxu0 %v154
      %973 = vmatpush.msra.mxu0 %v150
      %974 = vmatpush.msra.mxu0 %v146
      %975 = vmatpush.msra.mxu0 %v142
      %976 = vmatpush.msra.mxu0 %v138
      %977 = vmatpush.msra.mxu0 %v134
      %978 = vmatpush.msra.mxu0 %v130
      %979 = vmatpush.msra.mxu0 %v126
      %980 = vmatpush.msra.mxu0 %v122
      %981 = vmatpush.msra.mxu0 %v118
      %982 = vmatpush.msra.mxu0 %v114
      %983 = vmatpush.msra.mxu0 %v110
      %984 = vmatmul.f32.gmra.mxu0 %v941
      %v985 = vpop.f32.mrf.mxu0
      %v986 = vadd.f32 %v966, %v985
      %987 = vdwg.mxu0
      %988 = vmatpush.msra.mxu0 %v107
      %989 = vmatpush.msra.mxu0 %v103
      %990 = vmatpush.msra.mxu0 %v99
      %991 = vmatpush.msra.mxu0 %v95
      %992 = vmatpush.msra.mxu0 %v91
      %993 = vmatpush.msra.mxu0 %v87
      %994 = vmatpush.msra.mxu0 %v83
      %995 = vmatpush.msra.mxu0 %v79
      %996 = vmatpush.msra.mxu0 %v75
      %997 = vmatpush.msra.mxu0 %v71
      %998 = vmatpush.msra.mxu0 %v67
      %999 = vmatpush.msra.mxu0 %v63
      %1000 = vmatpush.msra.mxu0 %v59
      %1001 = vmatpush.msra.mxu0 %v55
      %1002 = vmatpush.msra.mxu0 %v51
      %1003 = vmatpush.msra.mxu0 %v47
      %1004 = vmatmul.f32.gmra.mxu0 %v940
      %v1005 = vpop.f32.mrf.mxu0
      %v1006 = vadd.f32 0.0, %v1005
      %1007 = vdwg.mxu0
      %1008 = vmatpush.msra.mxu0 %v171
      %1009 = vmatpush.msra.mxu0 %v167
      %1010 = vmatpush.msra.mxu0 %v163
      %1011 = vmatpush.msra.mxu0 %v159
      %1012 = vmatpush.msra.mxu0 %v155
      %1013 = vmatpush.msra.mxu0 %v151
      %1014 = vmatpush.msra.mxu0 %v147
      %1015 = vmatpush.msra.mxu0 %v143
      %1016 = vmatpush.msra.mxu0 %v139
      %1017 = vmatpush.msra.mxu0 %v135
      %1018 = vmatpush.msra.mxu0 %v131
      %1019 = vmatpush.msra.mxu0 %v127
      %1020 = vmatpush.msra.mxu0 %v123
      %1021 = vmatpush.msra.mxu0 %v119
      %1022 = vmatpush.msra.mxu0 %v115
      %1023 = vmatpush.msra.mxu0 %v111
      %1024 = vmatmul.f32.gmra.mxu0 %v941
      %v1025 = vpop.f32.mrf.mxu0
      %v1026 = vadd.f32 %v1006, %v1025
      %1027 = vdwg.mxu0
      %1028 = vmatpush.msra.mxu0 %v108
      %1029 = vmatpush.msra.mxu0 %v104
      %1030 = vmatpush.msra.mxu0 %v100
      %1031 = vmatpush.msra.mxu0 %v96
      %1032 = vmatpush.msra.mxu0 %v92
      %1033 = vmatpush.msra.mxu0 %v88
      %1034 = vmatpush.msra.mxu0 %v84
      %1035 = vmatpush.msra.mxu0 %v80
      %1036 = vmatpush.msra.mxu0 %v76
      %1037 = vmatpush.msra.mxu0 %v72
      %1038 = vmatpush.msra.mxu0 %v68
      %1039 = vmatpush.msra.mxu0 %v64
      %1040 = vmatpush.msra.mxu0 %v60
      %1041 = vmatpush.msra.mxu0 %v56
      %1042 = vmatpush.msra.mxu0 %v52
      %1043 = vmatpush.msra.mxu0 %v48
      %1044 = vmatmul.f32.gmra.mxu0 %v940
      %v1045 = vpop.f32.mrf.mxu0
      %v1046 = vadd.f32 0.0, %v1045
      %1047 = vdwg.mxu0
      %1048 = vmatpush.msra.mxu0 %v172
      %1049 = vmatpush.msra.mxu0 %v168
      %1050 = vmatpush.msra.mxu0 %v164
      %1051 = vmatpush.msra.mxu0 %v160
      %1052 = vmatpush.msra.mxu0 %v156
      %1053 = vmatpush.msra.mxu0 %v152
      %1054 = vmatpush.msra.mxu0 %v148
      %1055 = vmatpush.msra.mxu0 %v144
      %1056 = vmatpush.msra.mxu0 %v140
      %1057 = vmatpush.msra.mxu0 %v136
      %1058 = vmatpush.msra.mxu0 %v132
      %1059 = vmatpush.msra.mxu0 %v128
      %1060 = vmatpush.msra.mxu0 %v124
      %1061 = vmatpush.msra.mxu0 %v120
      %1062 = vmatpush.msra.mxu0 %v116
      %1063 = vmatpush.msra.mxu0 %v112
      %1064 = vmatmul.f32.gmra.mxu0 %v941
      %v1065 = vpop.f32.mrf.mxu0
      %v1066 = vadd.f32 %v1046, %v1065
      %1067 = vdwg.mxu0
      %1068 = vmatpush.msra.mxu0 %v109
      %1069 = vmatpush.msra.mxu0 %v105
      %1070 = vmatpush.msra.mxu0 %v101
      %1071 = vmatpush.msra.mxu0 %v97
      %1072 = vmatpush.msra.mxu0 %v93
      %1073 = vmatpush.msra.mxu0 %v89
      %1074 = vmatpush.msra.mxu0 %v85
      %1075 = vmatpush.msra.mxu0 %v81
      %1076 = vmatpush.msra.mxu0 %v77
      %1077 = vmatpush.msra.mxu0 %v73
      %1078 = vmatpush.msra.mxu0 %v69
      %1079 = vmatpush.msra.mxu0 %v65
      %1080 = vmatpush.msra.mxu0 %v61
      %1081 = vmatpush.msra.mxu0 %v57
      %1082 = vmatpush.msra.mxu0 %v53
      %1083 = vmatpush.msra.mxu0 %v49
      %1084 = vmatmul.f32.gmra.mxu0 %v940
      %v1085 = vpop.f32.mrf.mxu0
      %v1086 = vadd.f32 0.0, %v1085
      %1087 = vdwg.mxu0
      %1088 = vmatpush.msra.mxu0 %v173
      %1089 = vmatpush.msra.mxu0 %v169
      %1090 = vmatpush.msra.mxu0 %v165
      %1091 = vmatpush.msra.mxu0 %v161
      %1092 = vmatpush.msra.mxu0 %v157
      %1093 = vmatpush.msra.mxu0 %v153
      %1094 = vmatpush.msra.mxu0 %v149
      %1095 = vmatpush.msra.mxu0 %v145
      %1096 = vmatpush.msra.mxu0 %v141
      %1097 = vmatpush.msra.mxu0 %v137
      %1098 = vmatpush.msra.mxu0 %v133
      %1099 = vmatpush.msra.mxu0 %v129
      %1100 = vmatpush.msra.mxu0 %v125
      %1101 = vmatpush.msra.mxu0 %v121
      %1102 = vmatpush.msra.mxu0 %v117
      %1103 = vmatpush.msra.mxu0 %v113
      %1104 = vmatmul.f32.gmra.mxu0 %v941
      %v1105 = vpop.f32.mrf.mxu0
      %v1106 = vadd.f32 %v1086, %v1105
      %1107 = vdwg.mxu0
      %v1108 = vadd.f32 %v944, %v986
      %v1109 = vadd.f32 %v945, %v1026
      %v1110 = vadd.f32 %v946, %v1066
      %v1111 = vadd.f32 %v947, %v1106
      %v1112 = vxor.u32 %v1108, 2147483648
      %v1113 = vmul.f32 %v1112, 1.442695
      %v1114 = vpow.pop %v1113
      %v1115 = vadd.f32 %v1114, 1.0
      %v1116 = vrcp.pop %v1115
      %v1117 = vmul.f32 %v1115, %v1116
      %v1118 = vsub.f32 1.0, %v1117
      %v1119 = vmul.f32 %v1116, %v1118
      %v1120 = vadd.f32 %v1116, %v1119
      %vm1121 = vweird.f32 %v1115
      %vm1122 = vweird.f32 %v1116
      %vm1123 = vmor %vm1121, %vm1122
      %v1124 = vsel %vm1123, %v1116, %v1120
      %v1125 = vand.u32 2147483647, %v1115
      %vm1126 = vcmp.eq.f32.partialorder %v1125, 8.507059e+37
      %v1127 = vand.u32 %v1115, 2147483648
      %v1128 = vor.u32 1.1754944e-38, %v1127
      %v1129 = vsel %vm1126, %v1128, %v1124
      %v1130 = vmul.f32 1.0, %v1129
      %v1131 = vxor.u32 %v1109, 2147483648
      %v1132 = vmul.f32 %v1131, 1.442695
      %v1133 = vpow.pop %v1132
      %v1134 = vadd.f32 %v1133, 1.0
      %v1135 = vrcp.pop %v1134
      %v1136 = vmul.f32 %v1134, %v1135
      %v1137 = vsub.f32 1.0, %v1136
      %v1138 = vmul.f32 %v1135, %v1137
      %v1139 = vadd.f32 %v1135, %v1138
      %vm1140 = vweird.f32 %v1134
      %vm1141 = vweird.f32 %v1135
      %vm1142 = vmor %vm1140, %vm1141
      %v1143 = vsel %vm1142, %v1135, %v1139
      %v1144 = vand.u32 2147483647, %v1134
      %vm1145 = vcmp.eq.f32.partialorder %v1144, 8.507059e+37
      %v1146 = vand.u32 %v1134, 2147483648
      %v1147 = vor.u32 1.1754944e-38, %v1146
      %v1148 = vsel %vm1145, %v1147, %v1143
      %v1149 = vmul.f32 1.0, %v1148
      %v1150 = vtanh.pop %v1110
      %v1151 = vxor.u32 %v1111, 2147483648
      %v1152 = vmul.f32 %v1151, 1.442695
      %v1153 = vpow.pop %v1152
      %v1154 = vadd.f32 %v1153, 1.0
      %v1155 = vrcp.pop %v1154
      %v1156 = vmul.f32 %v1154, %v1155
      %v1157 = vsub.f32 1.0, %v1156
      %v1158 = vmul.f32 %v1155, %v1157
      %v1159 = vadd.f32 %v1155, %v1158
      %vm1160 = vweird.f32 %v1154
      %vm1161 = vweird.f32 %v1155
      %vm1162 = vmor %vm1160, %vm1161
      %v1163 = vsel %vm1162, %v1155, %v1159
      %v1164 = vand.u32 2147483647, %v1154
      %vm1165 = vcmp.eq.f32.partialorder %v1164, 8.507059e+37
      %v1166 = vand.u32 %v1154, 2147483648
      %v1167 = vor.u32 1.1754944e-38, %v1166
      %v1168 = vsel %vm1165, %v1167, %v1163
      %v1169 = vmul.f32 1.0, %v1168
      %v1170 = vmul.f32 %v1149, %v942
      %v1171 = vmul.f32 %v1130, %v1150
      %v1172 = vadd.f32 %v1170, %v1171
      %v1173 = vtanh.pop %v1172
      %v1174 = vmul.f32 %v1169, %v1173
      %v1175 = vstv %s939
      %vm1176 = vcmp.lt.s32.totalorder %v1175, %v45
      %v1177 = vmul.f32 %v1174, %v178
      %v1178 = vmul.f32 %v1174, %v179
      %v1179 = vsel %vm1176, 1, 0
      %1180 = vset.pattern.permute.xlu0 0
      %1181 = vperm.xlu0 %1180, %v1179
      %v1182 = vpop.permute.xlu0 %1181
      %vm1183 = vcmp.eq.s32.totalorder %v1182, 1
      %v1184 = vsel %vm1183, %v1177, %v940
      %v1185 = vsel %vm1183, %v1178, %v941
      %1186 = vst [vmem:[#allocation2] sm:$0xff] %v1184
      %1187 = vst [vmem:[#allocation2 + $0x8] sm:$0xff] %v1185
      %v1188 = vsel %vm1183, %v1172, %v942
      %1189 = vst [vmem:[#allocation3] sm:$0xff] %v1188
      %v1190 = vsel %vm1183, %v1174, 0.0
      %s1191 = scalar_lea.vmem %s4, 24
      %1192 = vst [vmem:[%s1191] sm:$0xff] %v1190
      %s1193 = sadd.s32 %s39, 4
      %v1194 = vld [vmem:[#allocation2] sm:$0xff]
      %v1195 = vld [vmem:[#allocation2 + $0x8] sm:$0xff]
      %v1196 = vld [vmem:[#allocation3] sm:$0xff]
      %s1197 = scalar_lea.vmem %s2, 128
      %v1198 = vld [vmem:[%s1197] sm:$0xff]
      %v1199 = vld [vmem:[%s1197 + $0x8] sm:$0xff]
      %v1200 = vld [vmem:[%s1197 + $0x10] sm:$0xff]
      %v1201 = vld [vmem:[%s1197 + $0x18] sm:$0xff]
      %1202 = vmatpush.msra.mxu0 %v106
      %1203 = vmatpush.msra.mxu0 %v102
      %1204 = vmatpush.msra.mxu0 %v98
      %1205 = vmatpush.msra.mxu0 %v94
      %1206 = vmatpush.msra.mxu0 %v90
      %1207 = vmatpush.msra.mxu0 %v86
      %1208 = vmatpush.msra.mxu0 %v82
      %1209 = vmatpush.msra.mxu0 %v78
      %1210 = vmatpush.msra.mxu0 %v74
      %1211 = vmatpush.msra.mxu0 %v70
      %1212 = vmatpush.msra.mxu0 %v66
      %1213 = vmatpush.msra.mxu0 %v62
      %1214 = vmatpush.msra.mxu0 %v58
      %1215 = vmatpush.msra.mxu0 %v54
      %1216 = vmatpush.msra.mxu0 %v50
      %1217 = vmatpush.msra.mxu0 %v46
      %1218 = vmatmul.f32.gmra.mxu0 %v1194
      %v1219 = vpop.f32.mrf.mxu0
      %v1220 = vadd.f32 0.0, %v1219
      %1221 = vdwg.mxu0
      %1222 = vmatpush.msra.mxu0 %v170
      %1223 = vmatpush.msra.mxu0 %v166
      %1224 = vmatpush.msra.mxu0 %v162
      %1225 = vmatpush.msra.mxu0 %v158
      %1226 = vmatpush.msra.mxu0 %v154
      %1227 = vmatpush.msra.mxu0 %v150
      %1228 = vmatpush.msra.mxu0 %v146
      %1229 = vmatpush.msra.mxu0 %v142
      %1230 = vmatpush.msra.mxu0 %v138
      %1231 = vmatpush.msra.mxu0 %v134
      %1232 = vmatpush.msra.mxu0 %v130
      %1233 = vmatpush.msra.mxu0 %v126
      %1234 = vmatpush.msra.mxu0 %v122
      %1235 = vmatpush.msra.mxu0 %v118
      %1236 = vmatpush.msra.mxu0 %v114
      %1237 = vmatpush.msra.mxu0 %v110
      %1238 = vmatmul.f32.gmra.mxu0 %v1195
      %v1239 = vpop.f32.mrf.mxu0
      %v1240 = vadd.f32 %v1220, %v1239
      %1241 = vdwg.mxu0
      %1242 = vmatpush.msra.mxu0 %v107
      %1243 = vmatpush.msra.mxu0 %v103
      %1244 = vmatpush.msra.mxu0 %v99
      %1245 = vmatpush.msra.mxu0 %v95
      %1246 = vmatpush.msra.mxu0 %v91
      %1247 = vmatpush.msra.mxu0 %v87
      %1248 = vmatpush.msra.mxu0 %v83
      %1249 = vmatpush.msra.mxu0 %v79
      %1250 = vmatpush.msra.mxu0 %v75
      %1251 = vmatpush.msra.mxu0 %v71
      %1252 = vmatpush.msra.mxu0 %v67
      %1253 = vmatpush.msra.mxu0 %v63
      %1254 = vmatpush.msra.mxu0 %v59
      %1255 = vmatpush.msra.mxu0 %v55
      %1256 = vmatpush.msra.mxu0 %v51
      %1257 = vmatpush.msra.mxu0 %v47
      %1258 = vmatmul.f32.gmra.mxu0 %v1194
      %v1259 = vpop.f32.mrf.mxu0
      %v1260 = vadd.f32 0.0, %v1259
      %1261 = vdwg.mxu0
      %1262 = vmatpush.msra.mxu0 %v171
      %1263 = vmatpush.msra.mxu0 %v167
      %1264 = vmatpush.msra.mxu0 %v163
      %1265 = vmatpush.msra.mxu0 %v159
      %1266 = vmatpush.msra.mxu0 %v155
      %1267 = vmatpush.msra.mxu0 %v151
      %1268 = vmatpush.msra.mxu0 %v147
      %1269 = vmatpush.msra.mxu0 %v143
      %1270 = vmatpush.msra.mxu0 %v139
      %1271 = vmatpush.msra.mxu0 %v135
      %1272 = vmatpush.msra.mxu0 %v131
      %1273 = vmatpush.msra.mxu0 %v127
      %1274 = vmatpush.msra.mxu0 %v123
      %1275 = vmatpush.msra.mxu0 %v119
      %1276 = vmatpush.msra.mxu0 %v115
      %1277 = vmatpush.msra.mxu0 %v111
      %1278 = vmatmul.f32.gmra.mxu0 %v1195
      %v1279 = vpop.f32.mrf.mxu0
      %v1280 = vadd.f32 %v1260, %v1279
      %1281 = vdwg.mxu0
      %1282 = vmatpush.msra.mxu0 %v108
      %1283 = vmatpush.msra.mxu0 %v104
      %1284 = vmatpush.msra.mxu0 %v100
      %1285 = vmatpush.msra.mxu0 %v96
      %1286 = vmatpush.msra.mxu0 %v92
      %1287 = vmatpush.msra.mxu0 %v88
      %1288 = vmatpush.msra.mxu0 %v84
      %1289 = vmatpush.msra.mxu0 %v80
      %1290 = vmatpush.msra.mxu0 %v76
      %1291 = vmatpush.msra.mxu0 %v72
      %1292 = vmatpush.msra.mxu0 %v68
      %1293 = vmatpush.msra.mxu0 %v64
      %1294 = vmatpush.msra.mxu0 %v60
      %1295 = vmatpush.msra.mxu0 %v56
      %1296 = vmatpush.msra.mxu0 %v52
      %1297 = vmatpush.msra.mxu0 %v48
      %1298 = vmatmul.f32.gmra.mxu0 %v1194
      %v1299 = vpop.f32.mrf.mxu0
      %v1300 = vadd.f32 0.0, %v1299
      %1301 = vdwg.mxu0
      %1302 = vmatpush.msra.mxu0 %v172
      %1303 = vmatpush.msra.mxu0 %v168
      %1304 = vmatpush.msra.mxu0 %v164
      %1305 = vmatpush.msra.mxu0 %v160
      %1306 = vmatpush.msra.mxu0 %v156
      %1307 = vmatpush.msra.mxu0 %v152
      %1308 = vmatpush.msra.mxu0 %v148
      %1309 = vmatpush.msra.mxu0 %v144
      %1310 = vmatpush.msra.mxu0 %v140
      %1311 = vmatpush.msra.mxu0 %v136
      %1312 = vmatpush.msra.mxu0 %v132
      %1313 = vmatpush.msra.mxu0 %v128
      %1314 = vmatpush.msra.mxu0 %v124
      %1315 = vmatpush.msra.mxu0 %v120
      %1316 = vmatpush.msra.mxu0 %v116
      %1317 = vmatpush.msra.mxu0 %v112
      %1318 = vmatmul.f32.gmra.mxu0 %v1195
      %v1319 = vpop.f32.mrf.mxu0
      %v1320 = vadd.f32 %v1300, %v1319
      %1321 = vdwg.mxu0
      %1322 = vmatpush.msra.mxu0 %v109
      %1323 = vmatpush.msra.mxu0 %v105
      %1324 = vmatpush.msra.mxu0 %v101
      %1325 = vmatpush.msra.mxu0 %v97
      %1326 = vmatpush.msra.mxu0 %v93
      %1327 = vmatpush.msra.mxu0 %v89
      %1328 = vmatpush.msra.mxu0 %v85
      %1329 = vmatpush.msra.mxu0 %v81
      %1330 = vmatpush.msra.mxu0 %v77
      %1331 = vmatpush.msra.mxu0 %v73
      %1332 = vmatpush.msra.mxu0 %v69
      %1333 = vmatpush.msra.mxu0 %v65
      %1334 = vmatpush.msra.mxu0 %v61
      %1335 = vmatpush.msra.mxu0 %v57
      %1336 = vmatpush.msra.mxu0 %v53
      %1337 = vmatpush.msra.mxu0 %v49
      %1338 = vmatmul.f32.gmra.mxu0 %v1194
      %v1339 = vpop.f32.mrf.mxu0
      %v1340 = vadd.f32 0.0, %v1339
      %1341 = vdwg.mxu0
      %1342 = vmatpush.msra.mxu0 %v173
      %1343 = vmatpush.msra.mxu0 %v169
      %1344 = vmatpush.msra.mxu0 %v165
      %1345 = vmatpush.msra.mxu0 %v161
      %1346 = vmatpush.msra.mxu0 %v157
      %1347 = vmatpush.msra.mxu0 %v153
      %1348 = vmatpush.msra.mxu0 %v149
      %1349 = vmatpush.msra.mxu0 %v145
      %1350 = vmatpush.msra.mxu0 %v141
      %1351 = vmatpush.msra.mxu0 %v137
      %1352 = vmatpush.msra.mxu0 %v133
      %1353 = vmatpush.msra.mxu0 %v129
      %1354 = vmatpush.msra.mxu0 %v125
      %1355 = vmatpush.msra.mxu0 %v121
      %1356 = vmatpush.msra.mxu0 %v117
      %1357 = vmatpush.msra.mxu0 %v113
      %1358 = vmatmul.f32.gmra.mxu0 %v1195
      %v1359 = vpop.f32.mrf.mxu0
      %v1360 = vadd.f32 %v1340, %v1359
      %1361 = vdwg.mxu0
      %v1362 = vadd.f32 %v1198, %v1240
      %v1363 = vadd.f32 %v1199, %v1280
      %v1364 = vadd.f32 %v1200, %v1320
      %v1365 = vadd.f32 %v1201, %v1360
      %v1366 = vxor.u32 %v1362, 2147483648
      %v1367 = vmul.f32 %v1366, 1.442695
      %v1368 = vpow.pop %v1367
      %v1369 = vadd.f32 %v1368, 1.0
      %v1370 = vrcp.pop %v1369
      %v1371 = vmul.f32 %v1369, %v1370
      %v1372 = vsub.f32 1.0, %v1371
      %v1373 = vmul.f32 %v1370, %v1372
      %v1374 = vadd.f32 %v1370, %v1373
      %vm1375 = vweird.f32 %v1369
      %vm1376 = vweird.f32 %v1370
      %vm1377 = vmor %vm1375, %vm1376
      %v1378 = vsel %vm1377, %v1370, %v1374
      %v1379 = vand.u32 2147483647, %v1369
      %vm1380 = vcmp.eq.f32.partialorder %v1379, 8.507059e+37
      %v1381 = vand.u32 %v1369, 2147483648
      %v1382 = vor.u32 1.1754944e-38, %v1381
      %v1383 = vsel %vm1380, %v1382, %v1378
      %v1384 = vmul.f32 1.0, %v1383
      %v1385 = vxor.u32 %v1363, 2147483648
      %v1386 = vmul.f32 %v1385, 1.442695
      %v1387 = vpow.pop %v1386
      %v1388 = vadd.f32 %v1387, 1.0
      %v1389 = vrcp.pop %v1388
      %v1390 = vmul.f32 %v1388, %v1389
      %v1391 = vsub.f32 1.0, %v1390
      %v1392 = vmul.f32 %v1389, %v1391
      %v1393 = vadd.f32 %v1389, %v1392
      %vm1394 = vweird.f32 %v1388
      %vm1395 = vweird.f32 %v1389
      %vm1396 = vmor %vm1394, %vm1395
      %v1397 = vsel %vm1396, %v1389, %v1393
      %v1398 = vand.u32 2147483647, %v1388
      %vm1399 = vcmp.eq.f32.partialorder %v1398, 8.507059e+37
      %v1400 = vand.u32 %v1388, 2147483648
      %v1401 = vor.u32 1.1754944e-38, %v1400
      %v1402 = vsel %vm1399, %v1401, %v1397
      %v1403 = vmul.f32 1.0, %v1402
      %v1404 = vtanh.pop %v1364
      %v1405 = vxor.u32 %v1365, 2147483648
      %v1406 = vmul.f32 %v1405, 1.442695
      %v1407 = vpow.pop %v1406
      %v1408 = vadd.f32 %v1407, 1.0
      %v1409 = vrcp.pop %v1408
      %v1410 = vmul.f32 %v1408, %v1409
      %v1411 = vsub.f32 1.0, %v1410
      %v1412 = vmul.f32 %v1409, %v1411
      %v1413 = vadd.f32 %v1409, %v1412
      %vm1414 = vweird.f32 %v1408
      %vm1415 = vweird.f32 %v1409
      %vm1416 = vmor %vm1414, %vm1415
      %v1417 = vsel %vm1416, %v1409, %v1413
      %v1418 = vand.u32 2147483647, %v1408
      %vm1419 = vcmp.eq.f32.partialorder %v1418, 8.507059e+37
      %v1420 = vand.u32 %v1408, 2147483648
      %v1421 = vor.u32 1.1754944e-38, %v1420
      %v1422 = vsel %vm1419, %v1421, %v1417
      %v1423 = vmul.f32 1.0, %v1422
      %v1424 = vmul.f32 %v1403, %v1196
      %v1425 = vmul.f32 %v1384, %v1404
      %v1426 = vadd.f32 %v1424, %v1425
      %v1427 = vtanh.pop %v1426
      %v1428 = vmul.f32 %v1423, %v1427
      %v1429 = vstv %s1193
      %vm1430 = vcmp.lt.s32.totalorder %v1429, %v45
      %v1431 = vmul.f32 %v1428, %v178
      %v1432 = vmul.f32 %v1428, %v179
      %v1433 = vsel %vm1430, 1, 0
      %1434 = vset.pattern.permute.xlu0 0
      %1435 = vperm.xlu0 %1434, %v1433
      %v1436 = vpop.permute.xlu0 %1435
      %vm1437 = vcmp.eq.s32.totalorder %v1436, 1
      %v1438 = vsel %vm1437, %v1431, %v1194
      %v1439 = vsel %vm1437, %v1432, %v1195
      %1440 = vst [vmem:[#allocation2] sm:$0xff] %v1438
      %1441 = vst [vmem:[#allocation2 + $0x8] sm:$0xff] %v1439
      %v1442 = vsel %vm1437, %v1426, %v1196
      %1443 = vst [vmem:[#allocation3] sm:$0xff] %v1442
      %v1444 = vsel %vm1437, %v1428, 0.0
      %s1445 = scalar_lea.vmem %s4, 32
      %1446 = vst [vmem:[%s1445] sm:$0xff] %v1444
      %s1447 = sadd.s32 %s39, 5
      %v1448 = vld [vmem:[#allocation2] sm:$0xff]
      %v1449 = vld [vmem:[#allocation2 + $0x8] sm:$0xff]
      %v1450 = vld [vmem:[#allocation3] sm:$0xff]
      %s1451 = scalar_lea.vmem %s2, 160
      %v1452 = vld [vmem:[%s1451] sm:$0xff]
      %v1453 = vld [vmem:[%s1451 + $0x8] sm:$0xff]
      %v1454 = vld [vmem:[%s1451 + $0x10] sm:$0xff]
      %v1455 = vld [vmem:[%s1451 + $0x18] sm:$0xff]
      %1456 = vmatpush.msra.mxu0 %v106
      %1457 = vmatpush.msra.mxu0 %v102
      %1458 = vmatpush.msra.mxu0 %v98
      %1459 = vmatpush.msra.mxu0 %v94
      %1460 = vmatpush.msra.mxu0 %v90
      %1461 = vmatpush.msra.mxu0 %v86
      %1462 = vmatpush.msra.mxu0 %v82
      %1463 = vmatpush.msra.mxu0 %v78
      %1464 = vmatpush.msra.mxu0 %v74
      %1465 = vmatpush.msra.mxu0 %v70
      %1466 = vmatpush.msra.mxu0 %v66
      %1467 = vmatpush.msra.mxu0 %v62
      %1468 = vmatpush.msra.mxu0 %v58
      %1469 = vmatpush.msra.mxu0 %v54
      %1470 = vmatpush.msra.mxu0 %v50
      %1471 = vmatpush.msra.mxu0 %v46
      %1472 = vmatmul.f32.gmra.mxu0 %v1448
      %v1473 = vpop.f32.mrf.mxu0
      %v1474 = vadd.f32 0.0, %v1473
      %1475 = vdwg.mxu0
      %1476 = vmatpush.msra.mxu0 %v170
      %1477 = vmatpush.msra.mxu0 %v166
      %1478 = vmatpush.msra.mxu0 %v162
      %1479 = vmatpush.msra.mxu0 %v158
      %1480 = vmatpush.msra.mxu0 %v154
      %1481 = vmatpush.msra.mxu0 %v150
      %1482 = vmatpush.msra.mxu0 %v146
      %1483 = vmatpush.msra.mxu0 %v142
      %1484 = vmatpush.msra.mxu0 %v138
      %1485 = vmatpush.msra.mxu0 %v134
      %1486 = vmatpush.msra.mxu0 %v130
      %1487 = vmatpush.msra.mxu0 %v126
      %1488 = vmatpush.msra.mxu0 %v122
      %1489 = vmatpush.msra.mxu0 %v118
      %1490 = vmatpush.msra.mxu0 %v114
      %1491 = vmatpush.msra.mxu0 %v110
      %1492 = vmatmul.f32.gmra.mxu0 %v1449
      %v1493 = vpop.f32.mrf.mxu0
      %v1494 = vadd.f32 %v1474, %v1493
      %1495 = vdwg.mxu0
      %1496 = vmatpush.msra.mxu0 %v107
      %1497 = vmatpush.msra.mxu0 %v103
      %1498 = vmatpush.msra.mxu0 %v99
      %1499 = vmatpush.msra.mxu0 %v95
      %1500 = vmatpush.msra.mxu0 %v91
      %1501 = vmatpush.msra.mxu0 %v87
      %1502 = vmatpush.msra.mxu0 %v83
      %1503 = vmatpush.msra.mxu0 %v79
      %1504 = vmatpush.msra.mxu0 %v75
      %1505 = vmatpush.msra.mxu0 %v71
      %1506 = vmatpush.msra.mxu0 %v67
      %1507 = vmatpush.msra.mxu0 %v63
      %1508 = vmatpush.msra.mxu0 %v59
      %1509 = vmatpush.msra.mxu0 %v55
      %1510 = vmatpush.msra.mxu0 %v51
      %1511 = vmatpush.msra.mxu0 %v47
      %1512 = vmatmul.f32.gmra.mxu0 %v1448
      %v1513 = vpop.f32.mrf.mxu0
      %v1514 = vadd.f32 0.0, %v1513
      %1515 = vdwg.mxu0
      %1516 = vmatpush.msra.mxu0 %v171
      %1517 = vmatpush.msra.mxu0 %v167
      %1518 = vmatpush.msra.mxu0 %v163
      %1519 = vmatpush.msra.mxu0 %v159
      %1520 = vmatpush.msra.mxu0 %v155
      %1521 = vmatpush.msra.mxu0 %v151
      %1522 = vmatpush.msra.mxu0 %v147
      %1523 = vmatpush.msra.mxu0 %v143
      %1524 = vmatpush.msra.mxu0 %v139
      %1525 = vmatpush.msra.mxu0 %v135
      %1526 = vmatpush.msra.mxu0 %v131
      %1527 = vmatpush.msra.mxu0 %v127
      %1528 = vmatpush.msra.mxu0 %v123
      %1529 = vmatpush.msra.mxu0 %v119
      %1530 = vmatpush.msra.mxu0 %v115
      %1531 = vmatpush.msra.mxu0 %v111
      %1532 = vmatmul.f32.gmra.mxu0 %v1449
      %v1533 = vpop.f32.mrf.mxu0
      %v1534 = vadd.f32 %v1514, %v1533
      %1535 = vdwg.mxu0
      %1536 = vmatpush.msra.mxu0 %v108
      %1537 = vmatpush.msra.mxu0 %v104
      %1538 = vmatpush.msra.mxu0 %v100
      %1539 = vmatpush.msra.mxu0 %v96
      %1540 = vmatpush.msra.mxu0 %v92
      %1541 = vmatpush.msra.mxu0 %v88
      %1542 = vmatpush.msra.mxu0 %v84
      %1543 = vmatpush.msra.mxu0 %v80
      %1544 = vmatpush.msra.mxu0 %v76
      %1545 = vmatpush.msra.mxu0 %v72
      %1546 = vmatpush.msra.mxu0 %v68
      %1547 = vmatpush.msra.mxu0 %v64
      %1548 = vmatpush.msra.mxu0 %v60
      %1549 = vmatpush.msra.mxu0 %v56
      %1550 = vmatpush.msra.mxu0 %v52
      %1551 = vmatpush.msra.mxu0 %v48
      %1552 = vmatmul.f32.gmra.mxu0 %v1448
      %v1553 = vpop.f32.mrf.mxu0
      %v1554 = vadd.f32 0.0, %v1553
      %1555 = vdwg.mxu0
      %1556 = vmatpush.msra.mxu0 %v172
      %1557 = vmatpush.msra.mxu0 %v168
      %1558 = vmatpush.msra.mxu0 %v164
      %1559 = vmatpush.msra.mxu0 %v160
      %1560 = vmatpush.msra.mxu0 %v156
      %1561 = vmatpush.msra.mxu0 %v152
      %1562 = vmatpush.msra.mxu0 %v148
      %1563 = vmatpush.msra.mxu0 %v144
      %1564 = vmatpush.msra.mxu0 %v140
      %1565 = vmatpush.msra.mxu0 %v136
      %1566 = vmatpush.msra.mxu0 %v132
      %1567 = vmatpush.msra.mxu0 %v128
      %1568 = vmatpush.msra.mxu0 %v124
      %1569 = vmatpush.msra.mxu0 %v120
      %1570 = vmatpush.msra.mxu0 %v116
      %1571 = vmatpush.msra.mxu0 %v112
      %1572 = vmatmul.f32.gmra.mxu0 %v1449
      %v1573 = vpop.f32.mrf.mxu0
      %v1574 = vadd.f32 %v1554, %v1573
      %1575 = vdwg.mxu0
      %1576 = vmatpush.msra.mxu0 %v109
      %1577 = vmatpush.msra.mxu0 %v105
      %1578 = vmatpush.msra.mxu0 %v101
      %1579 = vmatpush.msra.mxu0 %v97
      %1580 = vmatpush.msra.mxu0 %v93
      %1581 = vmatpush.msra.mxu0 %v89
      %1582 = vmatpush.msra.mxu0 %v85
      %1583 = vmatpush.msra.mxu0 %v81
      %1584 = vmatpush.msra.mxu0 %v77
      %1585 = vmatpush.msra.mxu0 %v73
      %1586 = vmatpush.msra.mxu0 %v69
      %1587 = vmatpush.msra.mxu0 %v65
      %1588 = vmatpush.msra.mxu0 %v61
      %1589 = vmatpush.msra.mxu0 %v57
      %1590 = vmatpush.msra.mxu0 %v53
      %1591 = vmatpush.msra.mxu0 %v49
      %1592 = vmatmul.f32.gmra.mxu0 %v1448
      %v1593 = vpop.f32.mrf.mxu0
      %v1594 = vadd.f32 0.0, %v1593
      %1595 = vdwg.mxu0
      %1596 = vmatpush.msra.mxu0 %v173
      %1597 = vmatpush.msra.mxu0 %v169
      %1598 = vmatpush.msra.mxu0 %v165
      %1599 = vmatpush.msra.mxu0 %v161
      %1600 = vmatpush.msra.mxu0 %v157
      %1601 = vmatpush.msra.mxu0 %v153
      %1602 = vmatpush.msra.mxu0 %v149
      %1603 = vmatpush.msra.mxu0 %v145
      %1604 = vmatpush.msra.mxu0 %v141
      %1605 = vmatpush.msra.mxu0 %v137
      %1606 = vmatpush.msra.mxu0 %v133
      %1607 = vmatpush.msra.mxu0 %v129
      %1608 = vmatpush.msra.mxu0 %v125
      %1609 = vmatpush.msra.mxu0 %v121
      %1610 = vmatpush.msra.mxu0 %v117
      %1611 = vmatpush.msra.mxu0 %v113
      %1612 = vmatmul.f32.gmra.mxu0 %v1449
      %v1613 = vpop.f32.mrf.mxu0
      %v1614 = vadd.f32 %v1594, %v1613
      %1615 = vdwg.mxu0
      %v1616 = vadd.f32 %v1452, %v1494
      %v1617 = vadd.f32 %v1453, %v1534
      %v1618 = vadd.f32 %v1454, %v1574
      %v1619 = vadd.f32 %v1455, %v1614
      %v1620 = vxor.u32 %v1616, 2147483648
      %v1621 = vmul.f32 %v1620, 1.442695
      %v1622 = vpow.pop %v1621
      %v1623 = vadd.f32 %v1622, 1.0
      %v1624 = vrcp.pop %v1623
      %v1625 = vmul.f32 %v1623, %v1624
      %v1626 = vsub.f32 1.0, %v1625
      %v1627 = vmul.f32 %v1624, %v1626
      %v1628 = vadd.f32 %v1624, %v1627
      %vm1629 = vweird.f32 %v1623
      %vm1630 = vweird.f32 %v1624
      %vm1631 = vmor %vm1629, %vm1630
      %v1632 = vsel %vm1631, %v1624, %v1628
      %v1633 = vand.u32 2147483647, %v1623
      %vm1634 = vcmp.eq.f32.partialorder %v1633, 8.507059e+37
      %v1635 = vand.u32 %v1623, 2147483648
      %v1636 = vor.u32 1.1754944e-38, %v1635
      %v1637 = vsel %vm1634, %v1636, %v1632
      %v1638 = vmul.f32 1.0, %v1637
      %v1639 = vxor.u32 %v1617, 2147483648
      %v1640 = vmul.f32 %v1639, 1.442695
      %v1641 = vpow.pop %v1640
      %v1642 = vadd.f32 %v1641, 1.0
      %v1643 = vrcp.pop %v1642
      %v1644 = vmul.f32 %v1642, %v1643
      %v1645 = vsub.f32 1.0, %v1644
      %v1646 = vmul.f32 %v1643, %v1645
      %v1647 = vadd.f32 %v1643, %v1646
      %vm1648 = vweird.f32 %v1642
      %vm1649 = vweird.f32 %v1643
      %vm1650 = vmor %vm1648, %vm1649
      %v1651 = vsel %vm1650, %v1643, %v1647
      %v1652 = vand.u32 2147483647, %v1642
      %vm1653 = vcmp.eq.f32.partialorder %v1652, 8.507059e+37
      %v1654 = vand.u32 %v1642, 2147483648
      %v1655 = vor.u32 1.1754944e-38, %v1654
      %v1656 = vsel %vm1653, %v1655, %v1651
      %v1657 = vmul.f32 1.0, %v1656
      %v1658 = vtanh.pop %v1618
      %v1659 = vxor.u32 %v1619, 2147483648
      %v1660 = vmul.f32 %v1659, 1.442695
      %v1661 = vpow.pop %v1660
      %v1662 = vadd.f32 %v1661, 1.0
      %v1663 = vrcp.pop %v1662
      %v1664 = vmul.f32 %v1662, %v1663
      %v1665 = vsub.f32 1.0, %v1664
      %v1666 = vmul.f32 %v1663, %v1665
      %v1667 = vadd.f32 %v1663, %v1666
      %vm1668 = vweird.f32 %v1662
      %vm1669 = vweird.f32 %v1663
      %vm1670 = vmor %vm1668, %vm1669
      %v1671 = vsel %vm1670, %v1663, %v1667
      %v1672 = vand.u32 2147483647, %v1662
      %vm1673 = vcmp.eq.f32.partialorder %v1672, 8.507059e+37
      %v1674 = vand.u32 %v1662, 2147483648
      %v1675 = vor.u32 1.1754944e-38, %v1674
      %v1676 = vsel %vm1673, %v1675, %v1671
      %v1677 = vmul.f32 1.0, %v1676
      %v1678 = vmul.f32 %v1657, %v1450
      %v1679 = vmul.f32 %v1638, %v1658
      %v1680 = vadd.f32 %v1678, %v1679
      %v1681 = vtanh.pop %v1680
      %v1682 = vmul.f32 %v1677, %v1681
      %v1683 = vstv %s1447
      %vm1684 = vcmp.lt.s32.totalorder %v1683, %v45
      %v1685 = vmul.f32 %v1682, %v178
      %v1686 = vmul.f32 %v1682, %v179
      %v1687 = vsel %vm1684, 1, 0
      %1688 = vset.pattern.permute.xlu0 0
      %1689 = vperm.xlu0 %1688, %v1687
      %v1690 = vpop.permute.xlu0 %1689
      %vm1691 = vcmp.eq.s32.totalorder %v1690, 1
      %v1692 = vsel %vm1691, %v1685, %v1448
      %v1693 = vsel %vm1691, %v1686, %v1449
      %1694 = vst [vmem:[#allocation2] sm:$0xff] %v1692
      %1695 = vst [vmem:[#allocation2 + $0x8] sm:$0xff] %v1693
      %v1696 = vsel %vm1691, %v1680, %v1450
      %1697 = vst [vmem:[#allocation3] sm:$0xff] %v1696
      %v1698 = vsel %vm1691, %v1682, 0.0
      %s1699 = scalar_lea.vmem %s4, 40
      %1700 = vst [vmem:[%s1699] sm:$0xff] %v1698
      %s1701 = sadd.s32 %s39, 6
      %v1702 = vld [vmem:[#allocation2] sm:$0xff]
      %v1703 = vld [vmem:[#allocation2 + $0x8] sm:$0xff]
      %v1704 = vld [vmem:[#allocation3] sm:$0xff]
      %s1705 = scalar_lea.vmem %s2, 192
      %v1706 = vld [vmem:[%s1705] sm:$0xff]
      %v1707 = vld [vmem:[%s1705 + $0x8] sm:$0xff]
      %v1708 = vld [vmem:[%s1705 + $0x10] sm:$0xff]
      %v1709 = vld [vmem:[%s1705 + $0x18] sm:$0xff]
      %1710 = vmatpush.msra.mxu0 %v106
      %1711 = vmatpush.msra.mxu0 %v102
      %1712 = vmatpush.msra.mxu0 %v98
      %1713 = vmatpush.msra.mxu0 %v94
      %1714 = vmatpush.msra.mxu0 %v90
      %1715 = vmatpush.msra.mxu0 %v86
      %1716 = vmatpush.msra.mxu0 %v82
      %1717 = vmatpush.msra.mxu0 %v78
      %1718 = vmatpush.msra.mxu0 %v74
      %1719 = vmatpush.msra.mxu0 %v70
      %1720 = vmatpush.msra.mxu0 %v66
      %1721 = vmatpush.msra.mxu0 %v62
      %1722 = vmatpush.msra.mxu0 %v58
      %1723 = vmatpush.msra.mxu0 %v54
      %1724 = vmatpush.msra.mxu0 %v50
      %1725 = vmatpush.msra.mxu0 %v46
      %1726 = vmatmul.f32.gmra.mxu0 %v1702
      %v1727 = vpop.f32.mrf.mxu0
      %v1728 = vadd.f32 0.0, %v1727
      %1729 = vdwg.mxu0
      %1730 = vmatpush.msra.mxu0 %v170
      %1731 = vmatpush.msra.mxu0 %v166
      %1732 = vmatpush.msra.mxu0 %v162
      %1733 = vmatpush.msra.mxu0 %v158
      %1734 = vmatpush.msra.mxu0 %v154
      %1735 = vmatpush.msra.mxu0 %v150
      %1736 = vmatpush.msra.mxu0 %v146
      %1737 = vmatpush.msra.mxu0 %v142
      %1738 = vmatpush.msra.mxu0 %v138
      %1739 = vmatpush.msra.mxu0 %v134
      %1740 = vmatpush.msra.mxu0 %v130
      %1741 = vmatpush.msra.mxu0 %v126
      %1742 = vmatpush.msra.mxu0 %v122
      %1743 = vmatpush.msra.mxu0 %v118
      %1744 = vmatpush.msra.mxu0 %v114
      %1745 = vmatpush.msra.mxu0 %v110
      %1746 = vmatmul.f32.gmra.mxu0 %v1703
      %v1747 = vpop.f32.mrf.mxu0
      %v1748 = vadd.f32 %v1728, %v1747
      %1749 = vdwg.mxu0
      %1750 = vmatpush.msra.mxu0 %v107
      %1751 = vmatpush.msra.mxu0 %v103
      %1752 = vmatpush.msra.mxu0 %v99
      %1753 = vmatpush.msra.mxu0 %v95
      %1754 = vmatpush.msra.mxu0 %v91
      %1755 = vmatpush.msra.mxu0 %v87
      %1756 = vmatpush.msra.mxu0 %v83
      %1757 = vmatpush.msra.mxu0 %v79
      %1758 = vmatpush.msra.mxu0 %v75
      %1759 = vmatpush.msra.mxu0 %v71
      %1760 = vmatpush.msra.mxu0 %v67
      %1761 = vmatpush.msra.mxu0 %v63
      %1762 = vmatpush.msra.mxu0 %v59
      %1763 = vmatpush.msra.mxu0 %v55
      %1764 = vmatpush.msra.mxu0 %v51
      %1765 = vmatpush.msra.mxu0 %v47
      %1766 = vmatmul.f32.gmra.mxu0 %v1702
      %v1767 = vpop.f32.mrf.mxu0
      %v1768 = vadd.f32 0.0, %v1767
      %1769 = vdwg.mxu0
      %1770 = vmatpush.msra.mxu0 %v171
      %1771 = vmatpush.msra.mxu0 %v167
      %1772 = vmatpush.msra.mxu0 %v163
      %1773 = vmatpush.msra.mxu0 %v159
      %1774 = vmatpush.msra.mxu0 %v155
      %1775 = vmatpush.msra.mxu0 %v151
      %1776 = vmatpush.msra.mxu0 %v147
      %1777 = vmatpush.msra.mxu0 %v143
      %1778 = vmatpush.msra.mxu0 %v139
      %1779 = vmatpush.msra.mxu0 %v135
      %1780 = vmatpush.msra.mxu0 %v131
      %1781 = vmatpush.msra.mxu0 %v127
      %1782 = vmatpush.msra.mxu0 %v123
      %1783 = vmatpush.msra.mxu0 %v119
      %1784 = vmatpush.msra.mxu0 %v115
      %1785 = vmatpush.msra.mxu0 %v111
      %1786 = vmatmul.f32.gmra.mxu0 %v1703
      %v1787 = vpop.f32.mrf.mxu0
      %v1788 = vadd.f32 %v1768, %v1787
      %1789 = vdwg.mxu0
      %1790 = vmatpush.msra.mxu0 %v108
      %1791 = vmatpush.msra.mxu0 %v104
      %1792 = vmatpush.msra.mxu0 %v100
      %1793 = vmatpush.msra.mxu0 %v96
      %1794 = vmatpush.msra.mxu0 %v92
      %1795 = vmatpush.msra.mxu0 %v88
      %1796 = vmatpush.msra.mxu0 %v84
      %1797 = vmatpush.msra.mxu0 %v80
      %1798 = vmatpush.msra.mxu0 %v76
      %1799 = vmatpush.msra.mxu0 %v72
      %1800 = vmatpush.msra.mxu0 %v68
      %1801 = vmatpush.msra.mxu0 %v64
      %1802 = vmatpush.msra.mxu0 %v60
      %1803 = vmatpush.msra.mxu0 %v56
      %1804 = vmatpush.msra.mxu0 %v52
      %1805 = vmatpush.msra.mxu0 %v48
      %1806 = vmatmul.f32.gmra.mxu0 %v1702
      %v1807 = vpop.f32.mrf.mxu0
      %v1808 = vadd.f32 0.0, %v1807
      %1809 = vdwg.mxu0
      %1810 = vmatpush.msra.mxu0 %v172
      %1811 = vmatpush.msra.mxu0 %v168
      %1812 = vmatpush.msra.mxu0 %v164
      %1813 = vmatpush.msra.mxu0 %v160
      %1814 = vmatpush.msra.mxu0 %v156
      %1815 = vmatpush.msra.mxu0 %v152
      %1816 = vmatpush.msra.mxu0 %v148
      %1817 = vmatpush.msra.mxu0 %v144
      %1818 = vmatpush.msra.mxu0 %v140
      %1819 = vmatpush.msra.mxu0 %v136
      %1820 = vmatpush.msra.mxu0 %v132
      %1821 = vmatpush.msra.mxu0 %v128
      %1822 = vmatpush.msra.mxu0 %v124
      %1823 = vmatpush.msra.mxu0 %v120
      %1824 = vmatpush.msra.mxu0 %v116
      %1825 = vmatpush.msra.mxu0 %v112
      %1826 = vmatmul.f32.gmra.mxu0 %v1703
      %v1827 = vpop.f32.mrf.mxu0
      %v1828 = vadd.f32 %v1808, %v1827
      %1829 = vdwg.mxu0
      %1830 = vmatpush.msra.mxu0 %v109
      %1831 = vmatpush.msra.mxu0 %v105
      %1832 = vmatpush.msra.mxu0 %v101
      %1833 = vmatpush.msra.mxu0 %v97
      %1834 = vmatpush.msra.mxu0 %v93
      %1835 = vmatpush.msra.mxu0 %v89
      %1836 = vmatpush.msra.mxu0 %v85
      %1837 = vmatpush.msra.mxu0 %v81
      %1838 = vmatpush.msra.mxu0 %v77
      %1839 = vmatpush.msra.mxu0 %v73
      %1840 = vmatpush.msra.mxu0 %v69
      %1841 = vmatpush.msra.mxu0 %v65
      %1842 = vmatpush.msra.mxu0 %v61
      %1843 = vmatpush.msra.mxu0 %v57
      %1844 = vmatpush.msra.mxu0 %v53
      %1845 = vmatpush.msra.mxu0 %v49
      %1846 = vmatmul.f32.gmra.mxu0 %v1702
      %v1847 = vpop.f32.mrf.mxu0
      %v1848 = vadd.f32 0.0, %v1847
      %1849 = vdwg.mxu0
      %1850 = vmatpush.msra.mxu0 %v173
      %1851 = vmatpush.msra.mxu0 %v169
      %1852 = vmatpush.msra.mxu0 %v165
      %1853 = vmatpush.msra.mxu0 %v161
      %1854 = vmatpush.msra.mxu0 %v157
      %1855 = vmatpush.msra.mxu0 %v153
      %1856 = vmatpush.msra.mxu0 %v149
      %1857 = vmatpush.msra.mxu0 %v145
      %1858 = vmatpush.msra.mxu0 %v141
      %1859 = vmatpush.msra.mxu0 %v137
      %1860 = vmatpush.msra.mxu0 %v133
      %1861 = vmatpush.msra.mxu0 %v129
      %1862 = vmatpush.msra.mxu0 %v125
      %1863 = vmatpush.msra.mxu0 %v121
      %1864 = vmatpush.msra.mxu0 %v117
      %1865 = vmatpush.msra.mxu0 %v113
      %1866 = vmatmul.f32.gmra.mxu0 %v1703
      %v1867 = vpop.f32.mrf.mxu0
      %v1868 = vadd.f32 %v1848, %v1867
      %1869 = vdwg.mxu0
      %v1870 = vadd.f32 %v1706, %v1748
      %v1871 = vadd.f32 %v1707, %v1788
      %v1872 = vadd.f32 %v1708, %v1828
      %v1873 = vadd.f32 %v1709, %v1868
      %v1874 = vxor.u32 %v1870, 2147483648
      %v1875 = vmul.f32 %v1874, 1.442695
      %v1876 = vpow.pop %v1875
      %v1877 = vadd.f32 %v1876, 1.0
      %v1878 = vrcp.pop %v1877
      %v1879 = vmul.f32 %v1877, %v1878
      %v1880 = vsub.f32 1.0, %v1879
      %v1881 = vmul.f32 %v1878, %v1880
      %v1882 = vadd.f32 %v1878, %v1881
      %vm1883 = vweird.f32 %v1877
      %vm1884 = vweird.f32 %v1878
      %vm1885 = vmor %vm1883, %vm1884
      %v1886 = vsel %vm1885, %v1878, %v1882
      %v1887 = vand.u32 2147483647, %v1877
      %vm1888 = vcmp.eq.f32.partialorder %v1887, 8.507059e+37
      %v1889 = vand.u32 %v1877, 2147483648
      %v1890 = vor.u32 1.1754944e-38, %v1889
      %v1891 = vsel %vm1888, %v1890, %v1886
      %v1892 = vmul.f32 1.0, %v1891
      %v1893 = vxor.u32 %v1871, 2147483648
      %v1894 = vmul.f32 %v1893, 1.442695
      %v1895 = vpow.pop %v1894
      %v1896 = vadd.f32 %v1895, 1.0
      %v1897 = vrcp.pop %v1896
      %v1898 = vmul.f32 %v1896, %v1897
      %v1899 = vsub.f32 1.0, %v1898
      %v1900 = vmul.f32 %v1897, %v1899
      %v1901 = vadd.f32 %v1897, %v1900
      %vm1902 = vweird.f32 %v1896
      %vm1903 = vweird.f32 %v1897
      %vm1904 = vmor %vm1902, %vm1903
      %v1905 = vsel %vm1904, %v1897, %v1901
      %v1906 = vand.u32 2147483647, %v1896
      %vm1907 = vcmp.eq.f32.partialorder %v1906, 8.507059e+37
      %v1908 = vand.u32 %v1896, 2147483648
      %v1909 = vor.u32 1.1754944e-38, %v1908
      %v1910 = vsel %vm1907, %v1909, %v1905
      %v1911 = vmul.f32 1.0, %v1910
      %v1912 = vtanh.pop %v1872
      %v1913 = vxor.u32 %v1873, 2147483648
      %v1914 = vmul.f32 %v1913, 1.442695
      %v1915 = vpow.pop %v1914
      %v1916 = vadd.f32 %v1915, 1.0
      %v1917 = vrcp.pop %v1916
      %v1918 = vmul.f32 %v1916, %v1917
      %v1919 = vsub.f32 1.0, %v1918
      %v1920 = vmul.f32 %v1917, %v1919
      %v1921 = vadd.f32 %v1917, %v1920
      %vm1922 = vweird.f32 %v1916
      %vm1923 = vweird.f32 %v1917
      %vm1924 = vmor %vm1922, %vm1923
      %v1925 = vsel %vm1924, %v1917, %v1921
      %v1926 = vand.u32 2147483647, %v1916
      %vm1927 = vcmp.eq.f32.partialorder %v1926, 8.507059e+37
      %v1928 = vand.u32 %v1916, 2147483648
      %v1929 = vor.u32 1.1754944e-38, %v1928
      %v1930 = vsel %vm1927, %v1929, %v1925
      %v1931 = vmul.f32 1.0, %v1930
      %v1932 = vmul.f32 %v1911, %v1704
      %v1933 = vmul.f32 %v1892, %v1912
      %v1934 = vadd.f32 %v1932, %v1933
      %v1935 = vtanh.pop %v1934
      %v1936 = vmul.f32 %v1931, %v1935
      %v1937 = vstv %s1701
      %vm1938 = vcmp.lt.s32.totalorder %v1937, %v45
      %v1939 = vmul.f32 %v1936, %v178
      %v1940 = vmul.f32 %v1936, %v179
      %v1941 = vsel %vm1938, 1, 0
      %1942 = vset.pattern.permute.xlu0 0
      %1943 = vperm.xlu0 %1942, %v1941
      %v1944 = vpop.permute.xlu0 %1943
      %vm1945 = vcmp.eq.s32.totalorder %v1944, 1
      %v1946 = vsel %vm1945, %v1939, %v1702
      %v1947 = vsel %vm1945, %v1940, %v1703
      %1948 = vst [vmem:[#allocation2] sm:$0xff] %v1946
      %1949 = vst [vmem:[#allocation2 + $0x8] sm:$0xff] %v1947
      %v1950 = vsel %vm1945, %v1934, %v1704
      %1951 = vst [vmem:[#allocation3] sm:$0xff] %v1950
      %v1952 = vsel %vm1945, %v1936, 0.0
      %s1953 = scalar_lea.vmem %s4, 48
      %1954 = vst [vmem:[%s1953] sm:$0xff] %v1952
      %s1955 = sadd.s32 %s39, 7
      %v1956 = vld [vmem:[#allocation2] sm:$0xff]
      %v1957 = vld [vmem:[#allocation2 + $0x8] sm:$0xff]
      %v1958 = vld [vmem:[#allocation3] sm:$0xff]
      %s1959 = scalar_lea.vmem %s2, 224
      %v1960 = vld [vmem:[%s1959] sm:$0xff]
      %v1961 = vld [vmem:[%s1959 + $0x8] sm:$0xff]
      %v1962 = vld [vmem:[%s1959 + $0x10] sm:$0xff]
      %v1963 = vld [vmem:[%s1959 + $0x18] sm:$0xff]
      %1964 = vmatpush.msra.mxu0 %v106
      %1965 = vmatpush.msra.mxu0 %v102
      %1966 = vmatpush.msra.mxu0 %v98
      %1967 = vmatpush.msra.mxu0 %v94
      %1968 = vmatpush.msra.mxu0 %v90
      %1969 = vmatpush.msra.mxu0 %v86
      %1970 = vmatpush.msra.mxu0 %v82
      %1971 = vmatpush.msra.mxu0 %v78
      %1972 = vmatpush.msra.mxu0 %v74
      %1973 = vmatpush.msra.mxu0 %v70
      %1974 = vmatpush.msra.mxu0 %v66
      %1975 = vmatpush.msra.mxu0 %v62
      %1976 = vmatpush.msra.mxu0 %v58
      %1977 = vmatpush.msra.mxu0 %v54
      %1978 = vmatpush.msra.mxu0 %v50
      %1979 = vmatpush.msra.mxu0 %v46
      %1980 = vmatmul.f32.gmra.mxu0 %v1956
      %v1981 = vpop.f32.mrf.mxu0
      %v1982 = vadd.f32 0.0, %v1981
      %1983 = vdwg.mxu0
      %1984 = vmatpush.msra.mxu0 %v170
      %1985 = vmatpush.msra.mxu0 %v166
      %1986 = vmatpush.msra.mxu0 %v162
      %1987 = vmatpush.msra.mxu0 %v158
      %1988 = vmatpush.msra.mxu0 %v154
      %1989 = vmatpush.msra.mxu0 %v150
      %1990 = vmatpush.msra.mxu0 %v146
      %1991 = vmatpush.msra.mxu0 %v142
      %1992 = vmatpush.msra.mxu0 %v138
      %1993 = vmatpush.msra.mxu0 %v134
      %1994 = vmatpush.msra.mxu0 %v130
      %1995 = vmatpush.msra.mxu0 %v126
      %1996 = vmatpush.msra.mxu0 %v122
      %1997 = vmatpush.msra.mxu0 %v118
      %1998 = vmatpush.msra.mxu0 %v114
      %1999 = vmatpush.msra.mxu0 %v110
      %2000 = vmatmul.f32.gmra.mxu0 %v1957
      %v2001 = vpop.f32.mrf.mxu0
      %v2002 = vadd.f32 %v1982, %v2001
      %2003 = vdwg.mxu0
      %2004 = vmatpush.msra.mxu0 %v107
      %2005 = vmatpush.msra.mxu0 %v103
      %2006 = vmatpush.msra.mxu0 %v99
      %2007 = vmatpush.msra.mxu0 %v95
      %2008 = vmatpush.msra.mxu0 %v91
      %2009 = vmatpush.msra.mxu0 %v87
      %2010 = vmatpush.msra.mxu0 %v83
      %2011 = vmatpush.msra.mxu0 %v79
      %2012 = vmatpush.msra.mxu0 %v75
      %2013 = vmatpush.msra.mxu0 %v71
      %2014 = vmatpush.msra.mxu0 %v67
      %2015 = vmatpush.msra.mxu0 %v63
      %2016 = vmatpush.msra.mxu0 %v59
      %2017 = vmatpush.msra.mxu0 %v55
      %2018 = vmatpush.msra.mxu0 %v51
      %2019 = vmatpush.msra.mxu0 %v47
      %2020 = vmatmul.f32.gmra.mxu0 %v1956
      %v2021 = vpop.f32.mrf.mxu0
      %v2022 = vadd.f32 0.0, %v2021
      %2023 = vdwg.mxu0
      %2024 = vmatpush.msra.mxu0 %v171
      %2025 = vmatpush.msra.mxu0 %v167
      %2026 = vmatpush.msra.mxu0 %v163
      %2027 = vmatpush.msra.mxu0 %v159
      %2028 = vmatpush.msra.mxu0 %v155
      %2029 = vmatpush.msra.mxu0 %v151
      %2030 = vmatpush.msra.mxu0 %v147
      %2031 = vmatpush.msra.mxu0 %v143
      %2032 = vmatpush.msra.mxu0 %v139
      %2033 = vmatpush.msra.mxu0 %v135
      %2034 = vmatpush.msra.mxu0 %v131
      %2035 = vmatpush.msra.mxu0 %v127
      %2036 = vmatpush.msra.mxu0 %v123
      %2037 = vmatpush.msra.mxu0 %v119
      %2038 = vmatpush.msra.mxu0 %v115
      %2039 = vmatpush.msra.mxu0 %v111
      %2040 = vmatmul.f32.gmra.mxu0 %v1957
      %v2041 = vpop.f32.mrf.mxu0
      %v2042 = vadd.f32 %v2022, %v2041
      %2043 = vdwg.mxu0
      %2044 = vmatpush.msra.mxu0 %v108
      %2045 = vmatpush.msra.mxu0 %v104
      %2046 = vmatpush.msra.mxu0 %v100
      %2047 = vmatpush.msra.mxu0 %v96
      %2048 = vmatpush.msra.mxu0 %v92
      %2049 = vmatpush.msra.mxu0 %v88
      %2050 = vmatpush.msra.mxu0 %v84
      %2051 = vmatpush.msra.mxu0 %v80
      %2052 = vmatpush.msra.mxu0 %v76
      %2053 = vmatpush.msra.mxu0 %v72
      %2054 = vmatpush.msra.mxu0 %v68
      %2055 = vmatpush.msra.mxu0 %v64
      %2056 = vmatpush.msra.mxu0 %v60
      %2057 = vmatpush.msra.mxu0 %v56
      %2058 = vmatpush.msra.mxu0 %v52
      %2059 = vmatpush.msra.mxu0 %v48
      %2060 = vmatmul.f32.gmra.mxu0 %v1956
      %v2061 = vpop.f32.mrf.mxu0
      %v2062 = vadd.f32 0.0, %v2061
      %2063 = vdwg.mxu0
      %2064 = vmatpush.msra.mxu0 %v172
      %2065 = vmatpush.msra.mxu0 %v168
      %2066 = vmatpush.msra.mxu0 %v164
      %2067 = vmatpush.msra.mxu0 %v160
      %2068 = vmatpush.msra.mxu0 %v156
      %2069 = vmatpush.msra.mxu0 %v152
      %2070 = vmatpush.msra.mxu0 %v148
      %2071 = vmatpush.msra.mxu0 %v144
      %2072 = vmatpush.msra.mxu0 %v140
      %2073 = vmatpush.msra.mxu0 %v136
      %2074 = vmatpush.msra.mxu0 %v132
      %2075 = vmatpush.msra.mxu0 %v128
      %2076 = vmatpush.msra.mxu0 %v124
      %2077 = vmatpush.msra.mxu0 %v120
      %2078 = vmatpush.msra.mxu0 %v116
      %2079 = vmatpush.msra.mxu0 %v112
      %2080 = vmatmul.f32.gmra.mxu0 %v1957
      %v2081 = vpop.f32.mrf.mxu0
      %v2082 = vadd.f32 %v2062, %v2081
      %2083 = vdwg.mxu0
      %2084 = vmatpush.msra.mxu0 %v109
      %2085 = vmatpush.msra.mxu0 %v105
      %2086 = vmatpush.msra.mxu0 %v101
      %2087 = vmatpush.msra.mxu0 %v97
      %2088 = vmatpush.msra.mxu0 %v93
      %2089 = vmatpush.msra.mxu0 %v89
      %2090 = vmatpush.msra.mxu0 %v85
      %2091 = vmatpush.msra.mxu0 %v81
      %2092 = vmatpush.msra.mxu0 %v77
      %2093 = vmatpush.msra.mxu0 %v73
      %2094 = vmatpush.msra.mxu0 %v69
      %2095 = vmatpush.msra.mxu0 %v65
      %2096 = vmatpush.msra.mxu0 %v61
      %2097 = vmatpush.msra.mxu0 %v57
      %2098 = vmatpush.msra.mxu0 %v53
      %2099 = vmatpush.msra.mxu0 %v49
      %2100 = vmatmul.f32.gmra.mxu0 %v1956
      %v2101 = vpop.f32.mrf.mxu0
      %v2102 = vadd.f32 0.0, %v2101
      %2103 = vdwg.mxu0
      %2104 = vmatpush.msra.mxu0 %v173
      %2105 = vmatpush.msra.mxu0 %v169
      %2106 = vmatpush.msra.mxu0 %v165
      %2107 = vmatpush.msra.mxu0 %v161
      %2108 = vmatpush.msra.mxu0 %v157
      %2109 = vmatpush.msra.mxu0 %v153
      %2110 = vmatpush.msra.mxu0 %v149
      %2111 = vmatpush.msra.mxu0 %v145
      %2112 = vmatpush.msra.mxu0 %v141
      %2113 = vmatpush.msra.mxu0 %v137
      %2114 = vmatpush.msra.mxu0 %v133
      %2115 = vmatpush.msra.mxu0 %v129
      %2116 = vmatpush.msra.mxu0 %v125
      %2117 = vmatpush.msra.mxu0 %v121
      %2118 = vmatpush.msra.mxu0 %v117
      %2119 = vmatpush.msra.mxu0 %v113
      %2120 = vmatmul.f32.gmra.mxu0 %v1957
      %v2121 = vpop.f32.mrf.mxu0
      %v2122 = vadd.f32 %v2102, %v2121
      %2123 = vdwg.mxu0
      %v2124 = vadd.f32 %v1960, %v2002
      %v2125 = vadd.f32 %v1961, %v2042
      %v2126 = vadd.f32 %v1962, %v2082
      %v2127 = vadd.f32 %v1963, %v2122
      %v2128 = vxor.u32 %v2124, 2147483648
      %v2129 = vmul.f32 %v2128, 1.442695
      %v2130 = vpow.pop %v2129
      %v2131 = vadd.f32 %v2130, 1.0
      %v2132 = vrcp.pop %v2131
      %v2133 = vmul.f32 %v2131, %v2132
      %v2134 = vsub.f32 1.0, %v2133
      %v2135 = vmul.f32 %v2132, %v2134
      %v2136 = vadd.f32 %v2132, %v2135
      %vm2137 = vweird.f32 %v2131
      %vm2138 = vweird.f32 %v2132
      %vm2139 = vmor %vm2137, %vm2138
      %v2140 = vsel %vm2139, %v2132, %v2136
      %v2141 = vand.u32 2147483647, %v2131
      %vm2142 = vcmp.eq.f32.partialorder %v2141, 8.507059e+37
      %v2143 = vand.u32 %v2131, 2147483648
      %v2144 = vor.u32 1.1754944e-38, %v2143
      %v2145 = vsel %vm2142, %v2144, %v2140
      %v2146 = vmul.f32 1.0, %v2145
      %v2147 = vxor.u32 %v2125, 2147483648
      %v2148 = vmul.f32 %v2147, 1.442695
      %v2149 = vpow.pop %v2148
      %v2150 = vadd.f32 %v2149, 1.0
      %v2151 = vrcp.pop %v2150
      %v2152 = vmul.f32 %v2150, %v2151
      %v2153 = vsub.f32 1.0, %v2152
      %v2154 = vmul.f32 %v2151, %v2153
      %v2155 = vadd.f32 %v2151, %v2154
      %vm2156 = vweird.f32 %v2150
      %vm2157 = vweird.f32 %v2151
      %vm2158 = vmor %vm2156, %vm2157
      %v2159 = vsel %vm2158, %v2151, %v2155
      %v2160 = vand.u32 2147483647, %v2150
      %vm2161 = vcmp.eq.f32.partialorder %v2160, 8.507059e+37
      %v2162 = vand.u32 %v2150, 2147483648
      %v2163 = vor.u32 1.1754944e-38, %v2162
      %v2164 = vsel %vm2161, %v2163, %v2159
      %v2165 = vmul.f32 1.0, %v2164
      %v2166 = vtanh.pop %v2126
      %v2167 = vxor.u32 %v2127, 2147483648
      %v2168 = vmul.f32 %v2167, 1.442695
      %v2169 = vpow.pop %v2168
      %v2170 = vadd.f32 %v2169, 1.0
      %v2171 = vrcp.pop %v2170
      %v2172 = vmul.f32 %v2170, %v2171
      %v2173 = vsub.f32 1.0, %v2172
      %v2174 = vmul.f32 %v2171, %v2173
      %v2175 = vadd.f32 %v2171, %v2174
      %vm2176 = vweird.f32 %v2170
      %vm2177 = vweird.f32 %v2171
      %vm2178 = vmor %vm2176, %vm2177
      %v2179 = vsel %vm2178, %v2171, %v2175
      %v2180 = vand.u32 2147483647, %v2170
      %vm2181 = vcmp.eq.f32.partialorder %v2180, 8.507059e+37
      %v2182 = vand.u32 %v2170, 2147483648
      %v2183 = vor.u32 1.1754944e-38, %v2182
      %v2184 = vsel %vm2181, %v2183, %v2179
      %v2185 = vmul.f32 1.0, %v2184
      %v2186 = vmul.f32 %v2165, %v1958
      %v2187 = vmul.f32 %v2146, %v2166
      %v2188 = vadd.f32 %v2186, %v2187
      %v2189 = vtanh.pop %v2188
      %v2190 = vmul.f32 %v2185, %v2189
      %v2191 = vstv %s1955
      %vm2192 = vcmp.lt.s32.totalorder %v2191, %v45
      %v2193 = vmul.f32 %v2190, %v178
      %v2194 = vmul.f32 %v2190, %v179
      %v2195 = vsel %vm2192, 1, 0
      %2196 = vset.pattern.permute.xlu0 0
      %2197 = vperm.xlu0 %2196, %v2195
      %v2198 = vpop.permute.xlu0 %2197
      %vm2199 = vcmp.eq.s32.totalorder %v2198, 1
      %v2200 = vsel %vm2199, %v2193, %v1956
      %v2201 = vsel %vm2199, %v2194, %v1957
      %2202 = vst [vmem:[#allocation2] sm:$0xff] %v2200
      %2203 = vst [vmem:[#allocation2 + $0x8] sm:$0xff] %v2201
      %v2204 = vsel %vm2199, %v2188, %v1958
      %2205 = vst [vmem:[#allocation3] sm:$0xff] %v2204
      %v2206 = vsel %vm2199, %v2190, 0.0
      %s2207 = scalar_lea.vmem %s4, 56
      %2208 = vst [vmem:[%s2207] sm:$0xff] %v2206
    $region25: #{aoa_forward.2} parent=1 // pred_fallthru
      _
    %p2209 = scmp.ge.s32.totalorder %s39, %s40
    // Predicated region
    $region26: #{aoa_forward.2} parent=1 // pred_check
      %p2210 = pneg %p2209
    $region27: #{aoa_forward.2} parent=1 // pred_check_branch
      %2212 = sbr.rel (%p2210) target = $region29
    $region28: #{aoa_forward.2} parent=1 // pred_region
      %2213 = vst [vmem:[%s4] sm:$0xff] 0.0
      %2214 = vst [vmem:[%s4 + $0x8] sm:$0xff] 0.0
      %2215 = vst [vmem:[%s4 + $0x10] sm:$0xff] 0.0
      %2216 = vst [vmem:[%s4 + $0x18] sm:$0xff] 0.0
      %2217 = vst [vmem:[%s4 + $0x20] sm:$0xff] 0.0
      %2218 = vst [vmem:[%s4 + $0x28] sm:$0xff] 0.0
      %2219 = vst [vmem:[%s4 + $0x30] sm:$0xff] 0.0
      %2220 = vst [vmem:[%s4 + $0x38] sm:$0xff] 0.0
    $region29: #{aoa_forward.2} parent=1 // pred_fallthru
      _
    // Predicated region
    $region30: #{aoa_forward.2} parent=1 // pred_check
      _
    $region31: #{aoa_forward.2} parent=1 // pred_check_branch
      %2222 = sbr.rel (0) target = $region33
    $region32: #{aoa_forward.2} parent=1 // pred_region
      _
    $region33: #{aoa_forward.2} parent=1 // pred_fallthru
      _
    // Predicated region
    $region34: #{aoa_forward.2} parent=1 // pred_check
      _
    $region35: #{aoa_forward.2} parent=1 // pred_check_branch
      %2224 = sbr.rel (0) target = $region37
    $region36: #{aoa_forward.2} parent=1 // pred_region
      _
    $region37: #{aoa_forward.2} parent=1 // pred_fallthru
      _
    %2225 = vsyncpa [#allocation7], 1

</llo_original>
